<compile_context>
chip_gen: v5e
topology: v5e:2x2
jax: 0.10.0
libtpu: 0.0.40
codegen_flags: <defaults>
</compile_context>

<pallas_src>
import functools

import jax
import jax.numpy as jnp
from jax.experimental import pallas as pl
from jax.experimental.pallas import tpu as pltpu


def _round_up(n, m):
    return ((n + m - 1) // m) * m


# --------------------------------------------------------------------------------------
# Fused kernel (one grid step == one image)
# --------------------------------------------------------------------------------------

def _row_shift(x, offset):
    """tap[p] = x[p + offset].  Circular roll is fine: wrapped rows are only ever read by
    halo/padding output rows, which are discarded by the wrapper."""
    if offset == 0:
        return x
    return pltpu.roll(x, shift=(-offset) % x.shape[0], axis=0)


def _bottleneck_kernel(x_ref, mask_ref, w1_ref, b1_ref, w2_ref, b2_ref,
                       w3_ref, b3_ref, o_ref, *, wp):
    """x:(1,Np,Cin) zero-halo-padded flattened image, mask:(Np,1) interior mask,
    w1:(Cin,Cmid) w2:(9,Cmid,Cmid) w3:(Cmid,Cout), biases:(1,C) f32, o:(1,Np,Cout)."""
    x = x_ref[0]                                           # (Np, Cin)
    n = x.shape[0]
    cmid = w1_ref.shape[1]

    # Stage 1: 1x1 conv + folded BN + ReLU.  The mask zeroes the halo ring (and the rows
    # added to round Np up to a sublane multiple) so it acts as conv2's zero padding.
    h1 = jnp.dot(x, w1_ref[...], preferred_element_type=jnp.float32)
    h1 = jnp.maximum(h1 + b1_ref[...], 0.0) * mask_ref[...]

    # Stage 2: 3x3 conv (pad=1) as 9 accumulating MXU matmuls on row-shifted flat slabs
    # (shift o = (kh-1)*Wp + (kw-1)); then folded BN + ReLU.
    acc = jnp.zeros((n, cmid), jnp.float32)
    for kh in range(3):
        for kw in range(3):
            off = (kh - 1) * wp + (kw - 1)
            tap = _row_shift(h1, off).astype(w2_ref.dtype)
            acc = acc + jnp.dot(tap, w2_ref[kh * 3 + kw],
                                preferred_element_type=jnp.float32)
    h2 = jnp.maximum(acc + b2_ref[...], 0.0)

    # Stage 3: 1x1 conv + folded BN + identity residual + ReLU.
    y = jnp.dot(h2.astype(w3_ref.dtype), w3_ref[...], preferred_element_type=jnp.float32)
    y = y + b3_ref[...] + x.astype(jnp.float32)
    o_ref[0] = jnp.maximum(y, 0.0).astype(o_ref.dtype)


# --------------------------------------------------------------------------------------
# Parameter prep (one-time BN folding) and forward wrappers
# --------------------------------------------------------------------------------------

def fold_bn_into_conv(conv_w, gamma, beta, mean, var, eps=1e-5):
    """Fold inference-mode BatchNorm into a bias-free conv. conv_w is torch (Cout,Cin,kh,kw)."""
    scale = gamma / jnp.sqrt(var + eps)                    # (Cout,)
    w = jnp.transpose(conv_w, (2, 3, 1, 0)) * scale        # (kh, kw, Cin, Cout), BN folded
    kh, kw, ci, co = w.shape
    w = w.reshape(kh * kw, ci, co)
    if kh * kw == 1:
        w = w[0]                                           # 1x1 conv -> (Cin, Cout)
    bias = (beta - mean * scale).reshape(1, co).astype(jnp.float32)
    return w, bias


def fold_bottleneck_params(p, eps=1e-5):
    w1, b1 = fold_bn_into_conv(p["conv1_w"], p["bn1_g"], p["bn1_b"], p["bn1_m"], p["bn1_v"], eps)
    w2, b2 = fold_bn_into_conv(p["conv2_w"], p["bn2_g"], p["bn2_b"], p["bn2_m"], p["bn2_v"], eps)
    w3, b3 = fold_bn_into_conv(p["conv3_w"], p["bn3_g"], p["bn3_b"], p["bn3_m"], p["bn3_v"], eps)
    return {"w1": w1, "b1": b1, "w2": w2, "b2": b2, "w3": w3, "b3": b3}


def bottleneck_forward_nhwc(x_nhwc, folded):
    """Fused Bottleneck, NHWC in / NHWC out (stride=1, identity residual), inference mode."""
    B, H, W, c_in = x_nhwc.shape
    c_out = folded["w3"].shape[-1]
    assert c_in == c_out, "identity residual requires in_chn == expansion * inter_chn"

    hp, wp = H + 2, W + 2
    n = hp * wp
    n_rows = _round_up(n, 8)                               # sublane-aligned row count

    # Single cheap input pass: zero halo + flatten (replaces the old 9x im2col expansion).
    xp = jnp.pad(x_nhwc, ((0, 0), (1, 1), (1, 1), (0, 0))).reshape(B, n, c_in)
    if n_rows != n:
        xp = jnp.pad(xp, ((0, 0), (0, n_rows - n), (0, 0)))

    # Interior mask: 1.0 on real pixels, 0.0 on the halo ring / alignment rows.
    rows = jnp.arange(n_rows)
    hh, ww = rows // wp, rows % wp
    mask = (((hh >= 1) & (hh <= H) & (ww >= 1) & (ww <= W))
            .astype(jnp.float32)[:, None])                 # (Np, 1)

    kernel = functools.partial(_bottleneck_kernel, wp=wp)
    out_flat = pl.pallas_call(
        kernel,
        out_shape=jax.ShapeDtypeStruct((B, n_rows, c_out), x_nhwc.dtype),
        grid_spec=pltpu.PrefetchScalarGridSpec(
            num_scalar_prefetch=0,
            grid=(B,),                                     # one image per grid step
            in_specs=[
                pl.BlockSpec((1, n_rows, c_in), lambda b: (b, 0, 0)),
                pl.BlockSpec((n_rows, 1), lambda b: (0, 0)),        # VMEM-resident
                pl.BlockSpec(folded["w1"].shape, lambda b: (0, 0)),
                pl.BlockSpec(folded["b1"].shape, lambda b: (0, 0)),
                pl.BlockSpec(folded["w2"].shape, lambda b: (0, 0, 0)),
                pl.BlockSpec(folded["b2"].shape, lambda b: (0, 0)),
                pl.BlockSpec(folded["w3"].shape, lambda b: (0, 0)),
                pl.BlockSpec(folded["b3"].shape, lambda b: (0, 0)),
            ],
            out_specs=pl.BlockSpec((1, n_rows, c_out), lambda b: (b, 0, 0)),
        ),
        compiler_params=pltpu.CompilerParams(
            dimension_semantics=("parallel",),             # shard batch across TensorCores
            vmem_limit_bytes=48 * 1024 * 1024,             # above 16/32 MiB default scoped limit
        ),
    )(xp, mask, folded["w1"], folded["b1"], folded["w2"], folded["b2"],
      folded["w3"], folded["b3"])

    # Drop halo/alignment rows (fuses into the caller's next op / NCHW transpose).
    return out_flat[:, :n, :].reshape(B, hp, wp, c_out)[:, 1:H + 1, 1:W + 1, :]


def bottleneck_forward(x_nchw, folded):
    """NCHW adapter: transpose once at the block boundary (keep whole nets in NHWC instead)."""
    x = jnp.transpose(x_nchw, (0, 2, 3, 1))
    out = bottleneck_forward_nhwc(x, folded)
    return jnp.transpose(out, (0, 3, 1, 2))


# --------------------------------------------------------------------------------------
# Pure-JAX reference (matches PyTorch eval-mode semantics)
# --------------------------------------------------------------------------------------

def bottleneck_reference(x, p, eps=1e-5):
    def conv(v, w, stride=1, pad=0):
        return jax.lax.conv_general_dilated(
            v, w, (stride, stride), [(pad, pad), (pad, pad)],
            dimension_numbers=("NCHW", "OIHW", "NCHW"),
            precision=jax.lax.Precision.HIGHEST)

    def bn(v, g, b, m, s2):
        s = g / jnp.sqrt(s2 + eps)
        return v * s[None, :, None, None] + (b - m * s)[None, :, None, None]

    out = jax.nn.relu(bn(conv(x, p["conv1_w"]), p["bn1_g"], p["bn1_b"], p["bn1_m"], p["bn1_v"]))
    out = jax.nn.relu(bn(conv(out, p["conv2_w"], pad=1),
                         p["bn2_g"], p["bn2_b"], p["bn2_m"], p["bn2_v"]))
    out = bn(conv(out, p["conv3_w"]), p["bn3_g"], p["bn3_b"], p["bn3_m"], p["bn3_v"])
    return jax.nn.relu(out + x)


if __name__ == "__main__":
    B, in_chn, inter_chn, H, W = 2, 64, 16, 16, 16
    out_chn = inter_chn * 4            # == in_chn  =>  downsample=None (identity residual) path
    eps = 1e-5

    key = jax.random.PRNGKey(0)
    ks = jax.random.split(key, 8)

    def uconv(k, shape, fan_in):
        bound = 1.0 / (fan_in ** 0.5)
        return jax.random.uniform(k, shape, jnp.float32, -bound, bound)

    x = jax.random.normal(ks[0], (B, in_chn, H, W), jnp.float32)
    params = {
        "conv1_w": uconv(ks[1], (inter_chn, in_chn, 1, 1), in_chn),
        "conv2_w": uconv(ks[2], (inter_chn, inter_chn, 3, 3), inter_chn * 9),
        "conv3_w": uconv(ks[3], (out_chn, inter_chn, 1, 1), inter_chn),
    }
    for i, name in enumerate(("bn1", "bn2", "bn3")):
        c = (inter_chn, inter_chn, out_chn)[i]
        k_g, k_b, k_m, k_v = jax.random.split(ks[4 + i], 4)
        params[f"{name}_g"] = jax.random.uniform(k_g, (c,), jnp.float32, 0.5, 1.5)
        params[f"{name}_b"] = 0.1 * jax.random.normal(k_b, (c,), jnp.float32)
        params[f"{name}_m"] = 0.1 * jax.random.normal(k_m, (c,), jnp.float32)
        params[f"{name}_v"] = jax.random.uniform(k_v, (c,), jnp.float32, 0.5, 1.5)

    folded = fold_bottleneck_params(params, eps)   # one-time weight prep (no per-call transposes)
    fwd = jax.jit(bottleneck_forward)

    out = fwd(x, folded)
    jax.block_until_ready(out)

    ref = bottleneck_reference(x, params, eps)
    assert out.shape == (B, out_chn, H, W)
    assert bool(jnp.allclose(out, ref, atol=2e-3, rtol=2e-3)), \
        float(jnp.max(jnp.abs(out - ref)))

    # bf16 operands (MXU-native) with f32 accumulation: smoke test.
    folded_bf16 = {k: (v.astype(jnp.bfloat16) if k.startswith("w") else v)
                   for k, v in folded.items()}
    out_bf16 = fwd(x.astype(jnp.bfloat16), folded_bf16)
    jax.block_until_ready(out_bf16)
    assert out_bf16.shape == (B, out_chn, H, W)
    assert bool(jnp.isfinite(out_bf16.astype(jnp.float32)).all())

    print("KERNEL_OK")
</pallas_src>

<mosaic_0001>
module attributes {stable_mosaic.version = 11 : i64} {
  func.func @_bottleneck_kernel(%arg0: i32, %arg1: memref<1x328x64xf32, #tpu.memory_space<vmem>>, %arg2: memref<328x1xf32, #tpu.memory_space<vmem>>, %arg3: memref<64x16xf32, #tpu.memory_space<vmem>>, %arg4: memref<1x16xf32, #tpu.memory_space<vmem>>, %arg5: memref<9x16x16xf32, #tpu.memory_space<vmem>>, %arg6: memref<1x16xf32, #tpu.memory_space<vmem>>, %arg7: memref<16x64xf32, #tpu.memory_space<vmem>>, %arg8: memref<1x64xf32, #tpu.memory_space<vmem>>, %arg9: memref<1x328x64xf32, #tpu.memory_space<vmem>>) attributes {dimension_semantics = [#tpu.dimension_semantics<parallel>], iteration_bounds = array<i64: 2>, scalar_prefetch = 0 : i64, scratch_operands = 0 : i64, tpu.core_type = #tpu.core_type<tc>, window_params = [{transform_indices = @transform_0, window_bounds = array<i64: 1, 328, 64>}, {pipeline_mode = #tpu.pipeline_mode<synchronous>, transform_indices = @transform_1, window_bounds = array<i64: 328, 1>}, {pipeline_mode = #tpu.pipeline_mode<synchronous>, transform_indices = @transform_2, window_bounds = array<i64: 64, 16>}, {pipeline_mode = #tpu.pipeline_mode<synchronous>, transform_indices = @transform_3, window_bounds = array<i64: 1, 16>}, {pipeline_mode = #tpu.pipeline_mode<synchronous>, transform_indices = @transform_4, window_bounds = array<i64: 9, 16, 16>}, {pipeline_mode = #tpu.pipeline_mode<synchronous>, transform_indices = @transform_5, window_bounds = array<i64: 1, 16>}, {pipeline_mode = #tpu.pipeline_mode<synchronous>, transform_indices = @transform_6, window_bounds = array<i64: 16, 64>}, {pipeline_mode = #tpu.pipeline_mode<synchronous>, transform_indices = @transform_7, window_bounds = array<i64: 1, 64>}, {transform_indices = @transform_8, window_bounds = array<i64: 1, 328, 64>}]} {
    %c0 = arith.constant 0 : index
    %c0_0 = arith.constant 0 : index
    %c0_1 = arith.constant 0 : index
    %0 = vector.load %arg1[%c0, %c0_0, %c0_1] : memref<1x328x64xf32, #tpu.memory_space<vmem>>, vector<1x328x64xf32>
    %1 = vector.shape_cast %0 : vector<1x328x64xf32> to vector<328x64xf32>
    %c0_2 = arith.constant 0 : index
    %c0_3 = arith.constant 0 : index
    %2 = vector.load %arg3[%c0_2, %c0_3] : memref<64x16xf32, #tpu.memory_space<vmem>>, vector<64x16xf32>
    %cst = arith.constant dense<0.000000e+00> : vector<328x16xf32>
    %3 = tpu.matmul %1, %2, %cst {dimension_numbers = #tpu.dot_dimension_numbers<[1], [0], [0], [1], [0, 0, 1, 1], [], []>} : vector<328x64xf32>, vector<64x16xf32>, vector<328x16xf32> -> vector<328x16xf32>
    %c0_4 = arith.constant 0 : index
    %c0_5 = arith.constant 0 : index
    %4 = vector.load %arg4[%c0_4, %c0_5] : memref<1x16xf32, #tpu.memory_space<vmem>>, vector<1x16xf32>
    %5 = vector.broadcast %4 : vector<1x16xf32> to vector<328x16xf32>
    %6 = arith.addf %3, %5 : vector<328x16xf32>
    %cst_6 = arith.constant 0.000000e+00 : f32
    %7 = vector.broadcast %cst_6 : f32 to vector<328x16xf32>
    %8 = arith.maximumf %6, %7 : vector<328x16xf32>
    %c0_7 = arith.constant 0 : index
    %c0_8 = arith.constant 0 : index
    %9 = vector.load %arg2[%c0_7, %c0_8] : memref<328x1xf32, #tpu.memory_space<vmem>>, vector<328x1xf32>
    %10 = vector.broadcast %9 : vector<328x1xf32> to vector<328x16xf32>
    %11 = arith.mulf %8, %10 : vector<328x16xf32>
    %cst_9 = arith.constant 0.000000e+00 : f32
    %12 = vector.broadcast %cst_9 : f32 to vector<328x16xf32>
    %c19_i32 = arith.constant 19 : i32
    %13 = tpu.dynamic_rotate %11 by %c19_i32 dim 0 : vector<328x16xf32>, i32 -> vector<328x16xf32>
    %c0_10 = arith.constant 0 : index
    %c0_11 = arith.constant 0 : index
    %c0_12 = arith.constant 0 : index
    %14 = vector.load %arg5[%c0_10, %c0_11, %c0_12] : memref<9x16x16xf32, #tpu.memory_space<vmem>>, vector<1x16x16xf32>
    %15 = vector.shape_cast %14 : vector<1x16x16xf32> to vector<16x16xf32>
    %cst_13 = arith.constant dense<0.000000e+00> : vector<328x16xf32>
    %16 = tpu.matmul %13, %15, %cst_13 {dimension_numbers = #tpu.dot_dimension_numbers<[1], [0], [0], [1], [0, 0, 1, 1], [], []>} : vector<328x16xf32>, vector<16x16xf32>, vector<328x16xf32> -> vector<328x16xf32>
    %17 = arith.addf %12, %16 : vector<328x16xf32>
    %c18_i32 = arith.constant 18 : i32
    %18 = tpu.dynamic_rotate %11 by %c18_i32 dim 0 : vector<328x16xf32>, i32 -> vector<328x16xf32>
    %c1 = arith.constant 1 : index
    %c0_14 = arith.constant 0 : index
    %c0_15 = arith.constant 0 : index
    %19 = vector.load %arg5[%c1, %c0_14, %c0_15] : memref<9x16x16xf32, #tpu.memory_space<vmem>>, vector<1x16x16xf32>
    %20 = vector.shape_cast %19 : vector<1x16x16xf32> to vector<16x16xf32>
    %cst_16 = arith.constant dense<0.000000e+00> : vector<328x16xf32>
    %21 = tpu.matmul %18, %20, %cst_16 {dimension_numbers = #tpu.dot_dimension_numbers<[1], [0], [0], [1], [0, 0, 1, 1], [], []>} : vector<328x16xf32>, vector<16x16xf32>, vector<328x16xf32> -> vector<328x16xf32>
    %22 = arith.addf %17, %21 : vector<328x16xf32>
    %c17_i32 = arith.constant 17 : i32
    %23 = tpu.dynamic_rotate %11 by %c17_i32 dim 0 : vector<328x16xf32>, i32 -> vector<328x16xf32>
    %c2 = arith.constant 2 : index
    %c0_17 = arith.constant 0 : index
    %c0_18 = arith.constant 0 : index
    %24 = vector.load %arg5[%c2, %c0_17, %c0_18] : memref<9x16x16xf32, #tpu.memory_space<vmem>>, vector<1x16x16xf32>
    %25 = vector.shape_cast %24 : vector<1x16x16xf32> to vector<16x16xf32>
    %cst_19 = arith.constant dense<0.000000e+00> : vector<328x16xf32>
    %26 = tpu.matmul %23, %25, %cst_19 {dimension_numbers = #tpu.dot_dimension_numbers<[1], [0], [0], [1], [0, 0, 1, 1], [], []>} : vector<328x16xf32>, vector<16x16xf32>, vector<328x16xf32> -> vector<328x16xf32>
    %27 = arith.addf %22, %26 : vector<328x16xf32>
    %c1_i32 = arith.constant 1 : i32
    %28 = tpu.dynamic_rotate %11 by %c1_i32 dim 0 : vector<328x16xf32>, i32 -> vector<328x16xf32>
    %c3 = arith.constant 3 : index
    %c0_20 = arith.constant 0 : index
    %c0_21 = arith.constant 0 : index
    %29 = vector.load %arg5[%c3, %c0_20, %c0_21] : memref<9x16x16xf32, #tpu.memory_space<vmem>>, vector<1x16x16xf32>
    %30 = vector.shape_cast %29 : vector<1x16x16xf32> to vector<16x16xf32>
    %cst_22 = arith.constant dense<0.000000e+00> : vector<328x16xf32>
    %31 = tpu.matmul %28, %30, %cst_22 {dimension_numbers = #tpu.dot_dimension_numbers<[1], [0], [0], [1], [0, 0, 1, 1], [], []>} : vector<328x16xf32>, vector<16x16xf32>, vector<328x16xf32> -> vector<328x16xf32>
    %32 = arith.addf %27, %31 : vector<328x16xf32>
    %c4 = arith.constant 4 : index
    %c0_23 = arith.constant 0 : index
    %c0_24 = arith.constant 0 : index
    %33 = vector.load %arg5[%c4, %c0_23, %c0_24] : memref<9x16x16xf32, #tpu.memory_space<vmem>>, vector<1x16x16xf32>
    %34 = vector.shape_cast %33 : vector<1x16x16xf32> to vector<16x16xf32>
    %cst_25 = arith.constant dense<0.000000e+00> : vector<328x16xf32>
    %35 = tpu.matmul %11, %34, %cst_25 {dimension_numbers = #tpu.dot_dimension_numbers<[1], [0], [0], [1], [0, 0, 1, 1], [], []>} : vector<328x16xf32>, vector<16x16xf32>, vector<328x16xf32> -> vector<328x16xf32>
    %36 = arith.addf %32, %35 : vector<328x16xf32>
    %c327_i32 = arith.constant 327 : i32
    %37 = tpu.dynamic_rotate %11 by %c327_i32 dim 0 : vector<328x16xf32>, i32 -> vector<328x16xf32>
    %c5 = arith.constant 5 : index
    %c0_26 = arith.constant 0 : index
    %c0_27 = arith.constant 0 : index
    %38 = vector.load %arg5[%c5, %c0_26, %c0_27] : memref<9x16x16xf32, #tpu.memory_space<vmem>>, vector<1x16x16xf32>
    %39 = vector.shape_cast %38 : vector<1x16x16xf32> to vector<16x16xf32>
    %cst_28 = arith.constant dense<0.000000e+00> : vector<328x16xf32>
    %40 = tpu.matmul %37, %39, %cst_28 {dimension_numbers = #tpu.dot_dimension_numbers<[1], [0], [0], [1], [0, 0, 1, 1], [], []>} : vector<328x16xf32>, vector<16x16xf32>, vector<328x16xf32> -> vector<328x16xf32>
    %41 = arith.addf %36, %40 : vector<328x16xf32>
    %c311_i32 = arith.constant 311 : i32
    %42 = tpu.dynamic_rotate %11 by %c311_i32 dim 0 : vector<328x16xf32>, i32 -> vector<328x16xf32>
    %c6 = arith.constant 6 : index
    %c0_29 = arith.constant 0 : index
    %c0_30 = arith.constant 0 : index
    %43 = vector.load %arg5[%c6, %c0_29, %c0_30] : memref<9x16x16xf32, #tpu.memory_space<vmem>>, vector<1x16x16xf32>
    %44 = vector.shape_cast %43 : vector<1x16x16xf32> to vector<16x16xf32>
    %cst_31 = arith.constant dense<0.000000e+00> : vector<328x16xf32>
    %45 = tpu.matmul %42, %44, %cst_31 {dimension_numbers = #tpu.dot_dimension_numbers<[1], [0], [0], [1], [0, 0, 1, 1], [], []>} : vector<328x16xf32>, vector<16x16xf32>, vector<328x16xf32> -> vector<328x16xf32>
    %46 = arith.addf %41, %45 : vector<328x16xf32>
    %c310_i32 = arith.constant 310 : i32
    %47 = tpu.dynamic_rotate %11 by %c310_i32 dim 0 : vector<328x16xf32>, i32 -> vector<328x16xf32>
    %c7 = arith.constant 7 : index
    %c0_32 = arith.constant 0 : index
    %c0_33 = arith.constant 0 : index
    %48 = vector.load %arg5[%c7, %c0_32, %c0_33] : memref<9x16x16xf32, #tpu.memory_space<vmem>>, vector<1x16x16xf32>
    %49 = vector.shape_cast %48 : vector<1x16x16xf32> to vector<16x16xf32>
    %cst_34 = arith.constant dense<0.000000e+00> : vector<328x16xf32>
    %50 = tpu.matmul %47, %49, %cst_34 {dimension_numbers = #tpu.dot_dimension_numbers<[1], [0], [0], [1], [0, 0, 1, 1], [], []>} : vector<328x16xf32>, vector<16x16xf32>, vector<328x16xf32> -> vector<328x16xf32>
    %51 = arith.addf %46, %50 : vector<328x16xf32>
    %c309_i32 = arith.constant 309 : i32
    %52 = tpu.dynamic_rotate %11 by %c309_i32 dim 0 : vector<328x16xf32>, i32 -> vector<328x16xf32>
    %c8 = arith.constant 8 : index
    %c0_35 = arith.constant 0 : index
    %c0_36 = arith.constant 0 : index
    %53 = vector.load %arg5[%c8, %c0_35, %c0_36] : memref<9x16x16xf32, #tpu.memory_space<vmem>>, vector<1x16x16xf32>
    %54 = vector.shape_cast %53 : vector<1x16x16xf32> to vector<16x16xf32>
    %cst_37 = arith.constant dense<0.000000e+00> : vector<328x16xf32>
    %55 = tpu.matmul %52, %54, %cst_37 {dimension_numbers = #tpu.dot_dimension_numbers<[1], [0], [0], [1], [0, 0, 1, 1], [], []>} : vector<328x16xf32>, vector<16x16xf32>, vector<328x16xf32> -> vector<328x16xf32>
    %56 = arith.addf %51, %55 : vector<328x16xf32>
    %c0_38 = arith.constant 0 : index
    %c0_39 = arith.constant 0 : index
    %57 = vector.load %arg6[%c0_38, %c0_39] : memref<1x16xf32, #tpu.memory_space<vmem>>, vector<1x16xf32>
    %58 = vector.broadcast %57 : vector<1x16xf32> to vector<328x16xf32>
    %59 = arith.addf %56, %58 : vector<328x16xf32>
    %cst_40 = arith.constant 0.000000e+00 : f32
    %60 = vector.broadcast %cst_40 : f32 to vector<328x16xf32>
    %61 = arith.maximumf %59, %60 : vector<328x16xf32>
    %c0_41 = arith.constant 0 : index
    %c0_42 = arith.constant 0 : index
    %62 = vector.load %arg7[%c0_41, %c0_42] : memref<16x64xf32, #tpu.memory_space<vmem>>, vector<16x64xf32>
    %cst_43 = arith.constant dense<0.000000e+00> : vector<328x64xf32>
    %63 = tpu.matmul %61, %62, %cst_43 {dimension_numbers = #tpu.dot_dimension_numbers<[1], [0], [0], [1], [0, 0, 1, 1], [], []>} : vector<328x16xf32>, vector<16x64xf32>, vector<328x64xf32> -> vector<328x64xf32>
    %c0_44 = arith.constant 0 : index
    %c0_45 = arith.constant 0 : index
    %64 = vector.load %arg8[%c0_44, %c0_45] : memref<1x64xf32, #tpu.memory_space<vmem>>, vector<1x64xf32>
    %65 = vector.broadcast %64 : vector<1x64xf32> to vector<328x64xf32>
    %66 = arith.addf %63, %65 : vector<328x64xf32>
    %67 = arith.addf %66, %1 : vector<328x64xf32>
    %cst_46 = arith.constant 0.000000e+00 : f32
    %68 = vector.broadcast %cst_46 : f32 to vector<328x64xf32>
    %69 = arith.maximumf %67, %68 : vector<328x64xf32>
    %c0_47 = arith.constant 0 : index
    %c0_48 = arith.constant 0 : index
    %c0_49 = arith.constant 0 : index
    %70 = vector.load %arg9[%c0_47, %c0_48, %c0_49] : memref<1x328x64xf32, #tpu.memory_space<vmem>>, vector<1x328x64xf32>
    %71 = vector.shape_cast %70 : vector<1x328x64xf32> to vector<328x64xf32>
    %72 = vector.shape_cast %69 : vector<328x64xf32> to vector<1x328x64xf32>
    tpu.vector_store %arg9[%c0_47, %c0_48, %c0_49], %72 {strides = array<i32>} : memref<1x328x64xf32, #tpu.memory_space<vmem>>, vector<1x328x64xf32>,
    return
  }
  func.func @transform_0(%arg0: i32) -> (i32, i32, i32) {
    %c0_i32 = arith.constant 0 : i32
    %c0_i32_0 = arith.constant 0 : i32
    %c0_i32_1 = arith.constant 0 : i32
    return %arg0, %c0_i32, %c0_i32_0 : i32, i32, i32
  }
  func.func @transform_1(%arg0: i32) -> (i32, i32) {
    %c0_i32 = arith.constant 0 : i32
    %c0_i32_0 = arith.constant 0 : i32
    %c0_i32_1 = arith.constant 0 : i32
    return %c0_i32, %c0_i32_0 : i32, i32
  }
  func.func @transform_2(%arg0: i32) -> (i32, i32) {
    %c0_i32 = arith.constant 0 : i32
    %c0_i32_0 = arith.constant 0 : i32
    %c0_i32_1 = arith.constant 0 : i32
    return %c0_i32, %c0_i32_0 : i32, i32
  }
  func.func @transform_3(%arg0: i32) -> (i32, i32) {
    %c0_i32 = arith.constant 0 : i32
    %c0_i32_0 = arith.constant 0 : i32
    %c0_i32_1 = arith.constant 0 : i32
    return %c0_i32, %c0_i32_0 : i32, i32
  }
  func.func @transform_4(%arg0: i32) -> (i32, i32, i32) {
    %c0_i32 = arith.constant 0 : i32
    %c0_i32_0 = arith.constant 0 : i32
    %c0_i32_1 = arith.constant 0 : i32
    %c0_i32_2 = arith.constant 0 : i32
    return %c0_i32, %c0_i32_0, %c0_i32_1 : i32, i32, i32
  }
  func.func @transform_5(%arg0: i32) -> (i32, i32) {
    %c0_i32 = arith.constant 0 : i32
    %c0_i32_0 = arith.constant 0 : i32
    %c0_i32_1 = arith.constant 0 : i32
    return %c0_i32, %c0_i32_0 : i32, i32
  }
  func.func @transform_6(%arg0: i32) -> (i32, i32) {
    %c0_i32 = arith.constant 0 : i32
    %c0_i32_0 = arith.constant 0 : i32
    %c0_i32_1 = arith.constant 0 : i32
    return %c0_i32, %c0_i32_0 : i32, i32
  }
  func.func @transform_7(%arg0: i32) -> (i32, i32) {
    %c0_i32 = arith.constant 0 : i32
    %c0_i32_0 = arith.constant 0 : i32
    %c0_i32_1 = arith.constant 0 : i32
    return %c0_i32, %c0_i32_0 : i32, i32
  }
  func.func @transform_8(%arg0: i32) -> (i32, i32, i32) {
    %c0_i32 = arith.constant 0 : i32
    %c0_i32_0 = arith.constant 0 : i32
    %c0_i32_1 = arith.constant 0 : i32
    return %arg0, %c0_i32, %c0_i32_0 : i32, i32, i32
  }
}

</mosaic_0001>

<llo_original>
// kernel: bottleneck_forward.1
$region0: #{bottleneck_forward.1}
  #allocation0 [shape = 'u32[]', space=smem, size = 0x4, offset = 0x4, fixed_abs, tag = 'smem constant byte address 0x4 - core index']
  #allocation1 [shape = 'u32[72,128]{1,0:T(1,128)}', space=vmem, size = 0x9000, scoped, tag = 'internal scratch']
  %s0 = inlined_call_operand.vmem [shape: f32[2,328,64], index: 0, kind: input, shape index: {}]
  %s1 = inlined_call_operand.vmem [shape: f32[328,1], index: 1, kind: input, shape index: {}]
  %s2 = inlined_call_operand.vmem [shape: f32[64,16], index: 2, kind: input, shape index: {}]
  %s3 = inlined_call_operand.vmem [shape: f32[1,16], index: 3, kind: input, shape index: {}]
  %s4 = inlined_call_operand.vmem [shape: f32[9,16,16], index: 4, kind: input, shape index: {}]
  %s5 = inlined_call_operand.vmem [shape: f32[1,16], index: 5, kind: input, shape index: {}]
  %s6 = inlined_call_operand.vmem [shape: f32[16,64], index: 6, kind: input, shape index: {}]
  %s7 = inlined_call_operand.vmem [shape: f32[1,64], index: 7, kind: input, shape index: {}]
  %s8 = inlined_call_operand.vmem [shape: f32[2,328,64], index: 8, kind: output, shape index: {}]
  %s9 = sld [smem:[#allocation0]]
  $region65: #{bottleneck_forward.1} parent=0
    _
  %s11 = ssub.s32 1, %s9
  %s12 = scalar_select 0, %s11, %s9
  loop: start=0, step=1, limit=4
  $region2: #{bottleneck_forward.1} parent=0 // loop_pre_header
    _
  $region3: #{bottleneck_forward.1} parent=0 // loop_header
    %s14 = sphi 0, %s18
    %p15 = scmp.ge.s32.totalorder %s14, 4
    %s24 = sphi 0, %s26
    %s27 = sphi 0, %s24
    %s28 = sphi 0, %s27
    %s44 = sphi 0, %s28
    %s48 = sphi 0, %s48
    %s50 = sphi 0, %s48
    %s51 = sphi 0, %s50
    %s65 = sphi 0, %s51
    %s69 = sphi 0, %s69
    %s71 = sphi 0, %s69
    %s72 = sphi 0, %s71
    %s86 = sphi 0, %s72
    %s90 = sphi 0, %s90
    %s92 = sphi 0, %s90
    %s93 = sphi 0, %s92
    %s107 = sphi 0, %s93
    %s111 = sphi 0, %s111
    %s113 = sphi 0, %s111
    %s114 = sphi 0, %s113
    %s128 = sphi 0, %s114
    %s132 = sphi 0, %s132
    %s134 = sphi 0, %s132
    %s135 = sphi 0, %s134
    %s149 = sphi 0, %s135
    %s153 = sphi 0, %s153
    %s155 = sphi 0, %s153
    %s156 = sphi 0, %s155
    %s170 = sphi 0, %s156
    %s174 = sphi 0, %s174
    %s176 = sphi 0, %s174
    %s177 = sphi 0, %s176
    %s191 = sphi 0, %s177
    %s197 = sphi 0, %s199
    %s200 = sphi 0, %s197
    %s201 = sphi 0, %s200
    %s217 = sphi 0, %s201
  $region4: #{bottleneck_forward.1} parent=0 // loop_header_branch
    %17 = sbr.rel (%p15) target = $region8
  $region5: #{bottleneck_forward.1} parent=0 // loop_body
    %s19 = ssub.s32 %s14, 1
    %s20 = ssub.s32 %s14, 2
    %s21 = sadd.s32 %s14, 1
    %s22 = ssub.s32 %s14, %s21
    %p23 = scmp.eq.s32.totalorder %s22, 0
    %s25 = sadd.s32 %s24, 1
    %s26 = scalar_select %p23, %s24, %s25
    %p29 = pneg %p23
    %p30 = scmp.eq.s32.totalorder %s14, 1
    %p31 = por %p29, %p30
    %p32 = scmp.ne.s32.totalorder %s24, %s27
    %p33 = scmp.eq.s32.totalorder %s14, 0
    %p34 = por %p32, %p33
    %p35 = scmp.ne.s32.totalorder %s24, %s27
    %p36 = scmp.eq.s32.totalorder %s19, 1
    %p37 = por %p35, %p36
    %p38 = scmp.ne.s32.totalorder %s27, %s28
    %p39 = scmp.eq.s32.totalorder %s19, 0
    %p40 = por %p38, %p39
    %p41 = scmp.ne.s32.totalorder %s27, %s28
    %p42 = scmp.eq.s32.totalorder %s20, 1
    %p43 = por %p41, %p42
    %p45 = scmp.ne.s32.totalorder %s28, %s44
    %p46 = scmp.eq.s32.totalorder %s20, 0
    %p47 = por %p45, %p46
    %s49 = sadd.s32 %s48, 1
    %p52 = scmp.eq.s32.totalorder %s14, 1
    %p53 = scmp.ne.s32.totalorder %s48, %s50
    %p54 = scmp.eq.s32.totalorder %s14, 0
    %p55 = por %p53, %p54
    %p56 = scmp.ne.s32.totalorder %s48, %s50
    %p57 = scmp.eq.s32.totalorder %s19, 1
    %p58 = por %p56, %p57
    %p59 = scmp.ne.s32.totalorder %s50, %s51
    %p60 = scmp.eq.s32.totalorder %s19, 0
    %p61 = por %p59, %p60
    %p62 = scmp.ne.s32.totalorder %s50, %s51
    %p63 = scmp.eq.s32.totalorder %s20, 1
    %p64 = por %p62, %p63
    %p66 = scmp.ne.s32.totalorder %s51, %s65
    %p67 = scmp.eq.s32.totalorder %s20, 0
    %p68 = por %p66, %p67
    %s70 = sadd.s32 %s69, 1
    %p73 = scmp.eq.s32.totalorder %s14, 1
    %p74 = scmp.ne.s32.totalorder %s69, %s71
    %p75 = scmp.eq.s32.totalorder %s14, 0
    %p76 = por %p74, %p75
    %p77 = scmp.ne.s32.totalorder %s69, %s71
    %p78 = scmp.eq.s32.totalorder %s19, 1
    %p79 = por %p77, %p78
    %p80 = scmp.ne.s32.totalorder %s71, %s72
    %p81 = scmp.eq.s32.totalorder %s19, 0
    %p82 = por %p80, %p81
    %p83 = scmp.ne.s32.totalorder %s71, %s72
    %p84 = scmp.eq.s32.totalorder %s20, 1
    %p85 = por %p83, %p84
    %p87 = scmp.ne.s32.totalorder %s72, %s86
    %p88 = scmp.eq.s32.totalorder %s20, 0
    %p89 = por %p87, %p88
    %s91 = sadd.s32 %s90, 1
    %p94 = scmp.eq.s32.totalorder %s14, 1
    %p95 = scmp.ne.s32.totalorder %s90, %s92
    %p96 = scmp.eq.s32.totalorder %s14, 0
    %p97 = por %p95, %p96
    %p98 = scmp.ne.s32.totalorder %s90, %s92
    %p99 = scmp.eq.s32.totalorder %s19, 1
    %p100 = por %p98, %p99
    %p101 = scmp.ne.s32.totalorder %s92, %s93
    %p102 = scmp.eq.s32.totalorder %s19, 0
    %p103 = por %p101, %p102
    %p104 = scmp.ne.s32.totalorder %s92, %s93
    %p105 = scmp.eq.s32.totalorder %s20, 1
    %p106 = por %p104, %p105
    %p108 = scmp.ne.s32.totalorder %s93, %s107
    %p109 = scmp.eq.s32.totalorder %s20, 0
    %p110 = por %p108, %p109
    %s112 = sadd.s32 %s111, 1
    %p115 = scmp.eq.s32.totalorder %s14, 1
    %p116 = scmp.ne.s32.totalorder %s111, %s113
    %p117 = scmp.eq.s32.totalorder %s14, 0
    %p118 = por %p116, %p117
    %p119 = scmp.ne.s32.totalorder %s111, %s113
    %p120 = scmp.eq.s32.totalorder %s19, 1
    %p121 = por %p119, %p120
    %p122 = scmp.ne.s32.totalorder %s113, %s114
    %p123 = scmp.eq.s32.totalorder %s19, 0
    %p124 = por %p122, %p123
    %p125 = scmp.ne.s32.totalorder %s113, %s114
    %p126 = scmp.eq.s32.totalorder %s20, 1
    %p127 = por %p125, %p126
    %p129 = scmp.ne.s32.totalorder %s114, %s128
    %p130 = scmp.eq.s32.totalorder %s20, 0
    %p131 = por %p129, %p130
    %s133 = sadd.s32 %s132, 1
    %p136 = scmp.eq.s32.totalorder %s14, 1
    %p137 = scmp.ne.s32.totalorder %s132, %s134
    %p138 = scmp.eq.s32.totalorder %s14, 0
    %p139 = por %p137, %p138
    %p140 = scmp.ne.s32.totalorder %s132, %s134
    %p141 = scmp.eq.s32.totalorder %s19, 1
    %p142 = por %p140, %p141
    %p143 = scmp.ne.s32.totalorder %s134, %s135
    %p144 = scmp.eq.s32.totalorder %s19, 0
    %p145 = por %p143, %p144
    %p146 = scmp.ne.s32.totalorder %s134, %s135
    %p147 = scmp.eq.s32.totalorder %s20, 1
    %p148 = por %p146, %p147
    %p150 = scmp.ne.s32.totalorder %s135, %s149
    %p151 = scmp.eq.s32.totalorder %s20, 0
    %p152 = por %p150, %p151
    %s154 = sadd.s32 %s153, 1
    %p157 = scmp.eq.s32.totalorder %s14, 1
    %p158 = scmp.ne.s32.totalorder %s153, %s155
    %p159 = scmp.eq.s32.totalorder %s14, 0
    %p160 = por %p158, %p159
    %p161 = scmp.ne.s32.totalorder %s153, %s155
    %p162 = scmp.eq.s32.totalorder %s19, 1
    %p163 = por %p161, %p162
    %p164 = scmp.ne.s32.totalorder %s155, %s156
    %p165 = scmp.eq.s32.totalorder %s19, 0
    %p166 = por %p164, %p165
    %p167 = scmp.ne.s32.totalorder %s155, %s156
    %p168 = scmp.eq.s32.totalorder %s20, 1
    %p169 = por %p167, %p168
    %p171 = scmp.ne.s32.totalorder %s156, %s170
    %p172 = scmp.eq.s32.totalorder %s20, 0
    %p173 = por %p171, %p172
    %s175 = sadd.s32 %s174, 1
    %p178 = scmp.eq.s32.totalorder %s14, 1
    %p179 = scmp.ne.s32.totalorder %s174, %s176
    %p180 = scmp.eq.s32.totalorder %s14, 0
    %p181 = por %p179, %p180
    %p182 = scmp.ne.s32.totalorder %s174, %s176
    %p183 = scmp.eq.s32.totalorder %s19, 1
    %p184 = por %p182, %p183
    %p185 = scmp.ne.s32.totalorder %s176, %s177
    %p186 = scmp.eq.s32.totalorder %s19, 0
    %p187 = por %p185, %p186
    %p188 = scmp.ne.s32.totalorder %s176, %s177
    %p189 = scmp.eq.s32.totalorder %s20, 1
    %p190 = por %p188, %p189
    %p192 = scmp.ne.s32.totalorder %s177, %s191
    %p193 = scmp.eq.s32.totalorder %s20, 0
    %p194 = por %p192, %p193
    %s195 = ssub.s32 %s14, %s21
    %p196 = scmp.eq.s32.totalorder %s195, 0
    %s198 = sadd.s32 %s197, 1
    %s199 = scalar_select %p196, %s197, %s198
    %p202 = pneg %p196
    %p203 = scmp.eq.s32.totalorder %s14, 1
    %p204 = por %p202, %p203
    %p205 = scmp.ne.s32.totalorder %s197, %s200
    %p206 = scmp.eq.s32.totalorder %s14, 0
    %p207 = por %p205, %p206
    %p208 = scmp.ne.s32.totalorder %s197, %s200
    %p209 = scmp.eq.s32.totalorder %s19, 1
    %p210 = por %p208, %p209
    %p211 = scmp.ne.s32.totalorder %s200, %s201
    %p212 = scmp.eq.s32.totalorder %s19, 0
    %p213 = por %p211, %p212
    %p214 = scmp.ne.s32.totalorder %s200, %s201
    %p215 = scmp.eq.s32.totalorder %s20, 1
    %p216 = por %p214, %p215
    %p218 = scmp.ne.s32.totalorder %s201, %s217
    %p219 = scmp.eq.s32.totalorder %s20, 0
    %p220 = por %p218, %p219
    %p221 = scmp.le.s32.totalorder 1, %s14
    %p222 = scmp.lt.s32.totalorder %s14, 3
    %p223 = pnand %p221, %p222
    %p224 = pneg %p223
    // Predicated region
    $region9: #{bottleneck_forward.1} parent=5 // pred_check
      _
    $region10: #{bottleneck_forward.1} parent=5 // pred_check_branch
      %226 = sbr.rel (%p223) target = $region12
    $region11: #{bottleneck_forward.1} parent=5 // pred_region
      %s227 = ssub.s32 %s14, 1
      // Predicated region
      $region13: #{bottleneck_forward.1} parent=11 // pred_check
        %p228 = pneg %p61
      $region14: #{bottleneck_forward.1} parent=11 // pred_check_branch
        %230 = sbr.rel (%p228) target = $region16
      $region15: #{bottleneck_forward.1} parent=11 // pred_region
        _
      $region16: #{bottleneck_forward.1} parent=11 // pred_fallthru
        _
      // Predicated region
      $region17: #{bottleneck_forward.1} parent=11 // pred_check
        %p231 = pneg %p82
      $region18: #{bottleneck_forward.1} parent=11 // pred_check_branch
        %233 = sbr.rel (%p231) target = $region20
      $region19: #{bottleneck_forward.1} parent=11 // pred_region
        _
      $region20: #{bottleneck_forward.1} parent=11 // pred_fallthru
        _
      // Predicated region
      $region21: #{bottleneck_forward.1} parent=11 // pred_check
        %p234 = pneg %p103
      $region22: #{bottleneck_forward.1} parent=11 // pred_check_branch
        %236 = sbr.rel (%p234) target = $region24
      $region23: #{bottleneck_forward.1} parent=11 // pred_region
        _
      $region24: #{bottleneck_forward.1} parent=11 // pred_fallthru
        _
      // Predicated region
      $region25: #{bottleneck_forward.1} parent=11 // pred_check
        %p237 = pneg %p124
      $region26: #{bottleneck_forward.1} parent=11 // pred_check_branch
        %239 = sbr.rel (%p237) target = $region28
      $region27: #{bottleneck_forward.1} parent=11 // pred_region
        _
      $region28: #{bottleneck_forward.1} parent=11 // pred_fallthru
        _
      // Predicated region
      $region29: #{bottleneck_forward.1} parent=11 // pred_check
        %p240 = pneg %p145
      $region30: #{bottleneck_forward.1} parent=11 // pred_check_branch
        %242 = sbr.rel (%p240) target = $region32
      $region31: #{bottleneck_forward.1} parent=11 // pred_region
        _
      $region32: #{bottleneck_forward.1} parent=11 // pred_fallthru
        _
      // Predicated region
      $region33: #{bottleneck_forward.1} parent=11 // pred_check
        %p243 = pneg %p166
      $region34: #{bottleneck_forward.1} parent=11 // pred_check_branch
        %245 = sbr.rel (%p243) target = $region36
      $region35: #{bottleneck_forward.1} parent=11 // pred_region
        _
      $region36: #{bottleneck_forward.1} parent=11 // pred_fallthru
        _
      // Predicated region
      $region37: #{bottleneck_forward.1} parent=11 // pred_check
        %p246 = pneg %p187
      $region38: #{bottleneck_forward.1} parent=11 // pred_check_branch
        %248 = sbr.rel (%p246) target = $region40
      $region39: #{bottleneck_forward.1} parent=11 // pred_region
        _
      $region40: #{bottleneck_forward.1} parent=11 // pred_fallthru
        _
    $region12: #{bottleneck_forward.1} parent=5 // pred_fallthru
      _
    %p249 = scmp.lt.s32.totalorder %s14, 2
    // Predicated region
    $region41: #{bottleneck_forward.1} parent=5 // pred_check
      %p250 = pneg %p249
    $region42: #{bottleneck_forward.1} parent=5 // pred_check_branch
      %252 = sbr.rel (%p250) target = $region44
    $region43: #{bottleneck_forward.1} parent=5 // pred_region
      // Predicated region
      $region45: #{bottleneck_forward.1} parent=43 // pred_check
        %p253 = pneg %p34
      $region46: #{bottleneck_forward.1} parent=43 // pred_check_branch
        %255 = sbr.rel (%p253) target = $region48
      $region47: #{bottleneck_forward.1} parent=43 // pred_region
        %p256 = scmp.lt.s32.totalorder %s14, 1
        %s257 = scalar_select %p256, %s14, 1
        %s258 = smul.addr %s257, 41
        %s259 = smul.addr %s258, 8
        %s260 = scalar_lea.vmem %s0, %s259
      $region48: #{bottleneck_forward.1} parent=43 // pred_fallthru
        _
    $region44: #{bottleneck_forward.1} parent=5 // pred_fallthru
      _
    %p261 = scmp.le.s32.totalorder 1, %s14
    %p262 = scmp.lt.s32.totalorder %s14, 3
    %p263 = pnand %p261, %p262
    %p264 = pneg %p263
    // Predicated region
    $region49: #{bottleneck_forward.1} parent=5 // pred_check
      _
    $region50: #{bottleneck_forward.1} parent=5 // pred_check_branch
      %266 = sbr.rel (%p263) target = $region52
    $region51: #{bottleneck_forward.1} parent=5 // pred_region
      %s267 = ssub.s32 %s14, 1
      %p268 = scmp.lt.s32.totalorder %s19, 1
      %s269 = scalar_select %p268, %s19, 1
      %s270 = smul.addr %s269, 41
      %s271 = smul.addr %s270, 8
      %s272 = scalar_lea.vmem %s0, %s271
      %p273 = pneg %p40
      %p274 = pneg %p37
      %p275 = pneg %p61
      %p276 = pneg %p58
      %p277 = pneg %p82
      %p278 = pneg %p79
      %p279 = pneg %p103
      %p280 = pneg %p100
      %p281 = pneg %p124
      %p282 = pneg %p121
      %p283 = pneg %p145
      %p284 = pneg %p142
      %p285 = pneg %p166
      %p286 = pneg %p163
      %p287 = pneg %p187
      %p288 = pneg %p184
      %p289 = pneg %p213
      %p290 = pneg %p210
      %p291 = scmp.lt.s32.totalorder %s19, 1
      %s292 = scalar_select %p291, %s19, 1
      %s293 = smul.addr %s292, 41
      %s294 = smul.addr %s293, 8
      %s295 = scalar_lea.vmem %s8, %s294
      %p296 = scmp.lt.s32.totalorder %s19, 1
      %s297 = scalar_select %p296, %s19, 1
      %s298 = smul.addr %s297, 41
      %s299 = smul.addr %s298, 8
      %s300 = scalar_lea.vmem %s0, %s299
      %p301 = scmp.lt.s32.totalorder %s19, 1
      %s302 = scalar_select %p301, %s19, 1
      %s303 = smul.addr %s302, 41
      %s304 = smul.addr %s303, 8
      %s305 = scalar_lea.vmem %s8, %s304
      %v306 = vld [vmem:[%s300] sm:$0xff]
      %v307 = vld [vmem:[%s300 + $0x8] sm:$0xff]
      %v308 = vld [vmem:[%s300 + $0x10] sm:$0xff]
      %v309 = vld [vmem:[%s300 + $0x18] sm:$0xff]
      %v310 = vld [vmem:[%s300 + $0x20] sm:$0xff]
      %v311 = vld [vmem:[%s300 + $0x28] sm:$0xff]
      %v312 = vld [vmem:[%s300 + $0x30] sm:$0xff]
      %v313 = vld [vmem:[%s300 + $0x38] sm:$0xff]
      %v314 = vld [vmem:[%s300 + $0x40] sm:$0xff]
      %v315 = vld [vmem:[%s300 + $0x48] sm:$0xff]
      %v316 = vld [vmem:[%s300 + $0x50] sm:$0xff]
      %v317 = vld [vmem:[%s300 + $0x58] sm:$0xff]
      %v318 = vld [vmem:[%s300 + $0x60] sm:$0xff]
      %v319 = vld [vmem:[%s300 + $0x68] sm:$0xff]
      %v320 = vld [vmem:[%s300 + $0x70] sm:$0xff]
      %v321 = vld [vmem:[%s300 + $0x78] sm:$0xff]
      %v322 = vld [vmem:[%s300 + $0x80] sm:$0xff]
      %v323 = vld [vmem:[%s300 + $0x88] sm:$0xff]
      %v324 = vld [vmem:[%s300 + $0x90] sm:$0xff]
      %v325 = vld [vmem:[%s300 + $0x98] sm:$0xff]
      %v326 = vld [vmem:[%s300 + $0xa0] sm:$0xff]
      %v327 = vld [vmem:[%s300 + $0xa8] sm:$0xff]
      %v328 = vld [vmem:[%s300 + $0xb0] sm:$0xff]
      %v329 = vld [vmem:[%s300 + $0xb8] sm:$0xff]
      %v330 = vld [vmem:[%s300 + $0xc0] sm:$0xff]
      %v331 = vld [vmem:[%s300 + $0xc8] sm:$0xff]
      %v332 = vld [vmem:[%s300 + $0xd0] sm:$0xff]
      %v333 = vld [vmem:[%s300 + $0xd8] sm:$0xff]
      %v334 = vld [vmem:[%s300 + $0xe0] sm:$0xff]
      %v335 = vld [vmem:[%s300 + $0xe8] sm:$0xff]
      %v336 = vld [vmem:[%s300 + $0xf0] sm:$0xff]
      %v337 = vld [vmem:[%s300 + $0xf8] sm:$0xff]
      %v338 = vld [vmem:[%s300 + $0x100] sm:$0xff]
      %v339 = vld [vmem:[%s300 + $0x108] sm:$0xff]
      %v340 = vld [vmem:[%s300 + $0x110] sm:$0xff]
      %v341 = vld [vmem:[%s300 + $0x118] sm:$0xff]
      %v342 = vld [vmem:[%s300 + $0x120] sm:$0xff]
      %v343 = vld [vmem:[%s300 + $0x128] sm:$0xff]
      %v344 = vld [vmem:[%s300 + $0x130] sm:$0xff]
      %v345 = vld [vmem:[%s300 + $0x138] sm:$0xff]
      %v346 = vld [vmem:[%s300 + $0x140] sm:$0xff]
      %v347 = vld [vmem:[%s2] sm:$0xff]
      %v348 = vld [vmem:[%s2 + $0x8] sm:$0xff]
      %v349 = vld [vmem:[%s2 + $0x10] sm:$0xff]
      %v350 = vld [vmem:[%s2 + $0x18] sm:$0xff]
      %v351 = vld [vmem:[%s2 + $0x20] sm:$0xff]
      %v352 = vld [vmem:[%s2 + $0x28] sm:$0xff]
      %v353 = vld [vmem:[%s2 + $0x30] sm:$0xff]
      %v354 = vld [vmem:[%s2 + $0x38] sm:$0xff]
      %v355 = vld [vmem:[%s3] sm:$0x1]
      %v357 = vperm.slane %v355, 0
      %vm359 = vcmask 523264
      %v361 = vsel %vm359, %v306, 0
      %v364 = vsel %vm359, %v307, 0
      %v367 = vsel %vm359, %v308, 0
      %v370 = vsel %vm359, %v309, 0
      %v373 = vsel %vm359, %v310, 0
      %v376 = vsel %vm359, %v311, 0
      %v379 = vsel %vm359, %v312, 0
      %v382 = vsel %vm359, %v313, 0
      %v385 = vsel %vm359, %v314, 0
      %v388 = vsel %vm359, %v315, 0
      %v391 = vsel %vm359, %v316, 0
      %v394 = vsel %vm359, %v317, 0
      %v397 = vsel %vm359, %v318, 0
      %v400 = vsel %vm359, %v319, 0
      %v403 = vsel %vm359, %v320, 0
      %v406 = vsel %vm359, %v321, 0
      %v409 = vsel %vm359, %v322, 0
      %v412 = vsel %vm359, %v323, 0
      %v415 = vsel %vm359, %v324, 0
      %v418 = vsel %vm359, %v325, 0
      %v421 = vsel %vm359, %v326, 0
      %v424 = vsel %vm359, %v327, 0
      %v427 = vsel %vm359, %v328, 0
      %v430 = vsel %vm359, %v329, 0
      %v433 = vsel %vm359, %v330, 0
      %v436 = vsel %vm359, %v331, 0
      %v439 = vsel %vm359, %v332, 0
      %v442 = vsel %vm359, %v333, 0
      %v445 = vsel %vm359, %v334, 0
      %v448 = vsel %vm359, %v335, 0
      %v451 = vsel %vm359, %v336, 0
      %v454 = vsel %vm359, %v337, 0
      %v457 = vsel %vm359, %v338, 0
      %v460 = vsel %vm359, %v339, 0
      %v463 = vsel %vm359, %v340, 0
      %v466 = vsel %vm359, %v341, 0
      %v469 = vsel %vm359, %v342, 0
      %v472 = vsel %vm359, %v343, 0
      %v475 = vsel %vm359, %v344, 0
      %v478 = vsel %vm359, %v345, 0
      %v481 = vsel %vm359, %v346, 0
      %483 = vmatpush.msra.mxu0 0.0
      %484 = vmatpush.msra.mxu0 0.0
      %485 = vmatpush.msra.mxu0 0.0
      %486 = vmatpush.msra.mxu0 0.0
      %487 = vmatpush.msra.mxu0 0.0
      %488 = vmatpush.msra.mxu0 0.0
      %489 = vmatpush.msra.mxu0 0.0
      %490 = vmatpush.msra.mxu0 0.0
      %491 = vmatpush.msra.mxu0 %v354
      %492 = vmatpush.msra.mxu0 %v353
      %493 = vmatpush.msra.mxu0 %v352
      %494 = vmatpush.msra.mxu0 %v351
      %495 = vmatpush.msra.mxu0 %v350
      %496 = vmatpush.msra.mxu0 %v349
      %497 = vmatpush.msra.mxu0 %v348
      %498 = vmatpush.msra.mxu0 %v347
      %499 = vmatmul.f32.gmra.mxu0 %v361
      %v500 = vpop.f32.mrf.mxu0
      %v501 = vadd.f32 %v357, %v500
      %502 = vmatmul.f32.gmra.mxu0 %v364
      %v503 = vpop.f32.mrf.mxu0
      %v504 = vadd.f32 %v357, %v503
      %505 = vmatmul.f32.gmra.mxu0 %v367
      %v506 = vpop.f32.mrf.mxu0
      %v507 = vadd.f32 %v357, %v506
      %508 = vmatmul.f32.gmra.mxu0 %v370
      %v509 = vpop.f32.mrf.mxu0
      %v510 = vadd.f32 %v357, %v509
      %511 = vmatmul.f32.gmra.mxu0 %v373
      %v512 = vpop.f32.mrf.mxu0
      %v513 = vadd.f32 %v357, %v512
      %514 = vmatmul.f32.gmra.mxu0 %v376
      %v515 = vpop.f32.mrf.mxu0
      %v516 = vadd.f32 %v357, %v515
      %517 = vmatmul.f32.gmra.mxu0 %v379
      %v518 = vpop.f32.mrf.mxu0
      %v519 = vadd.f32 %v357, %v518
      %520 = vmatmul.f32.gmra.mxu0 %v382
      %v521 = vpop.f32.mrf.mxu0
      %v522 = vadd.f32 %v357, %v521
      %523 = vmatmul.f32.gmra.mxu0 %v385
      %v524 = vpop.f32.mrf.mxu0
      %v525 = vadd.f32 %v357, %v524
      %526 = vmatmul.f32.gmra.mxu0 %v388
      %v527 = vpop.f32.mrf.mxu0
      %v528 = vadd.f32 %v357, %v527
      %529 = vmatmul.f32.gmra.mxu0 %v391
      %v530 = vpop.f32.mrf.mxu0
      %v531 = vadd.f32 %v357, %v530
      %532 = vmatmul.f32.gmra.mxu0 %v394
      %v533 = vpop.f32.mrf.mxu0
      %v534 = vadd.f32 %v357, %v533
      %535 = vmatmul.f32.gmra.mxu0 %v397
      %v536 = vpop.f32.mrf.mxu0
      %v537 = vadd.f32 %v357, %v536
      %538 = vmatmul.f32.gmra.mxu0 %v400
      %v539 = vpop.f32.mrf.mxu0
      %v540 = vadd.f32 %v357, %v539
      %541 = vmatmul.f32.gmra.mxu0 %v403
      %v542 = vpop.f32.mrf.mxu0
      %v543 = vadd.f32 %v357, %v542
      %544 = vmatmul.f32.gmra.mxu0 %v406
      %v545 = vpop.f32.mrf.mxu0
      %v546 = vadd.f32 %v357, %v545
      %547 = vmatmul.f32.gmra.mxu0 %v409
      %v548 = vpop.f32.mrf.mxu0
      %v549 = vadd.f32 %v357, %v548
      %550 = vmatmul.f32.gmra.mxu0 %v412
      %v551 = vpop.f32.mrf.mxu0
      %v552 = vadd.f32 %v357, %v551
      %553 = vmatmul.f32.gmra.mxu0 %v415
      %v554 = vpop.f32.mrf.mxu0
      %v555 = vadd.f32 %v357, %v554
      %556 = vmatmul.f32.gmra.mxu0 %v418
      %v557 = vpop.f32.mrf.mxu0
      %v558 = vadd.f32 %v357, %v557
      %559 = vmatmul.f32.gmra.mxu0 %v421
      %v560 = vpop.f32.mrf.mxu0
      %v561 = vadd.f32 %v357, %v560
      %562 = vmatmul.f32.gmra.mxu0 %v424
      %v563 = vpop.f32.mrf.mxu0
      %v564 = vadd.f32 %v357, %v563
      %565 = vmatmul.f32.gmra.mxu0 %v427
      %v566 = vpop.f32.mrf.mxu0
      %v567 = vadd.f32 %v357, %v566
      %568 = vmatmul.f32.gmra.mxu0 %v430
      %v569 = vpop.f32.mrf.mxu0
      %v570 = vadd.f32 %v357, %v569
      %571 = vmatmul.f32.gmra.mxu0 %v433
      %v572 = vpop.f32.mrf.mxu0
      %v573 = vadd.f32 %v357, %v572
      %574 = vmatmul.f32.gmra.mxu0 %v436
      %v575 = vpop.f32.mrf.mxu0
      %v576 = vadd.f32 %v357, %v575
      %577 = vmatmul.f32.gmra.mxu0 %v439
      %v578 = vpop.f32.mrf.mxu0
      %v579 = vadd.f32 %v357, %v578
      %580 = vmatmul.f32.gmra.mxu0 %v442
      %v581 = vpop.f32.mrf.mxu0
      %v582 = vadd.f32 %v357, %v581
      %583 = vmatmul.f32.gmra.mxu0 %v445
      %v584 = vpop.f32.mrf.mxu0
      %v585 = vadd.f32 %v357, %v584
      %586 = vmatmul.f32.gmra.mxu0 %v448
      %v587 = vpop.f32.mrf.mxu0
      %v588 = vadd.f32 %v357, %v587
      %589 = vmatmul.f32.gmra.mxu0 %v451
      %v590 = vpop.f32.mrf.mxu0
      %v591 = vadd.f32 %v357, %v590
      %592 = vmatmul.f32.gmra.mxu0 %v454
      %v593 = vpop.f32.mrf.mxu0
      %v594 = vadd.f32 %v357, %v593
      %595 = vmatmul.f32.gmra.mxu0 %v457
      %v596 = vpop.f32.mrf.mxu0
      %v597 = vadd.f32 %v357, %v596
      %598 = vmatmul.f32.gmra.mxu0 %v460
      %v599 = vpop.f32.mrf.mxu0
      %v600 = vadd.f32 %v357, %v599
      %601 = vmatmul.f32.gmra.mxu0 %v463
      %v602 = vpop.f32.mrf.mxu0
      %v603 = vadd.f32 %v357, %v602
      %604 = vmatmul.f32.gmra.mxu0 %v466
      %v605 = vpop.f32.mrf.mxu0
      %v606 = vadd.f32 %v357, %v605
      %607 = vmatmul.f32.gmra.mxu0 %v469
      %v608 = vpop.f32.mrf.mxu0
      %v609 = vadd.f32 %v357, %v608
      %610 = vmatmul.f32.gmra.mxu0 %v472
      %v611 = vpop.f32.mrf.mxu0
      %v612 = vadd.f32 %v357, %v611
      %613 = vmatmul.f32.gmra.mxu0 %v475
      %v614 = vpop.f32.mrf.mxu0
      %v615 = vadd.f32 %v357, %v614
      %616 = vmatmul.f32.gmra.mxu0 %v478
      %v617 = vpop.f32.mrf.mxu0
      %v618 = vadd.f32 %v357, %v617
      %619 = vmatmul.f32.gmra.mxu0 %v481
      %v620 = vpop.f32.mrf.mxu0
      %v621 = vadd.f32 %v357, %v620
      %622 = vdwg.mxu0
      %v623 = vmax.f32 %v501, 0.0
      %v624 = vmax.f32 %v504, 0.0
      %v625 = vmax.f32 %v507, 0.0
      %v626 = vmax.f32 %v510, 0.0
      %v627 = vmax.f32 %v513, 0.0
      %v628 = vmax.f32 %v516, 0.0
      %v629 = vmax.f32 %v519, 0.0
      %v630 = vmax.f32 %v522, 0.0
      %v631 = vmax.f32 %v525, 0.0
      %v632 = vmax.f32 %v528, 0.0
      %v633 = vmax.f32 %v531, 0.0
      %v634 = vmax.f32 %v534, 0.0
      %v635 = vmax.f32 %v537, 0.0
      %v636 = vmax.f32 %v540, 0.0
      %v637 = vmax.f32 %v543, 0.0
      %v638 = vmax.f32 %v546, 0.0
      %v639 = vmax.f32 %v549, 0.0
      %v640 = vmax.f32 %v552, 0.0
      %v641 = vmax.f32 %v555, 0.0
      %v642 = vmax.f32 %v558, 0.0
      %v643 = vmax.f32 %v561, 0.0
      %v644 = vmax.f32 %v564, 0.0
      %v645 = vmax.f32 %v567, 0.0
      %v646 = vmax.f32 %v570, 0.0
      %v647 = vmax.f32 %v573, 0.0
      %v648 = vmax.f32 %v576, 0.0
      %v649 = vmax.f32 %v579, 0.0
      %v650 = vmax.f32 %v582, 0.0
      %v651 = vmax.f32 %v585, 0.0
      %v652 = vmax.f32 %v588, 0.0
      %v653 = vmax.f32 %v591, 0.0
      %v654 = vmax.f32 %v594, 0.0
      %v655 = vmax.f32 %v597, 0.0
      %v656 = vmax.f32 %v600, 0.0
      %v657 = vmax.f32 %v603, 0.0
      %v658 = vmax.f32 %v606, 0.0
      %v659 = vmax.f32 %v609, 0.0
      %v660 = vmax.f32 %v612, 0.0
      %v661 = vmax.f32 %v615, 0.0
      %v662 = vmax.f32 %v618, 0.0
      %v663 = vmax.f32 %v621, 0.0
      %v664 = vld [vmem:[%s1] sm:$0xff]
      %v665 = vld [vmem:[%s1 + $0x8] sm:$0xff]
      %v666 = vld [vmem:[%s1 + $0x10] sm:$0xff]
      %v667 = vld [vmem:[%s1 + $0x18] sm:$0xff]
      %v668 = vld [vmem:[%s1 + $0x20] sm:$0xff]
      %v669 = vld [vmem:[%s1 + $0x28] sm:$0xff]
      %v670 = vld [vmem:[%s1 + $0x30] sm:$0xff]
      %v671 = vld [vmem:[%s1 + $0x38] sm:$0xff]
      %v672 = vld [vmem:[%s1 + $0x40] sm:$0xff]
      %v673 = vld [vmem:[%s1 + $0x48] sm:$0xff]
      %v674 = vld [vmem:[%s1 + $0x50] sm:$0xff]
      %v675 = vld [vmem:[%s1 + $0x58] sm:$0xff]
      %v676 = vld [vmem:[%s1 + $0x60] sm:$0xff]
      %v677 = vld [vmem:[%s1 + $0x68] sm:$0xff]
      %v678 = vld [vmem:[%s1 + $0x70] sm:$0xff]
      %v679 = vld [vmem:[%s1 + $0x78] sm:$0xff]
      %v680 = vld [vmem:[%s1 + $0x80] sm:$0xff]
      %v681 = vld [vmem:[%s1 + $0x88] sm:$0xff]
      %v682 = vld [vmem:[%s1 + $0x90] sm:$0xff]
      %v683 = vld [vmem:[%s1 + $0x98] sm:$0xff]
      %v684 = vld [vmem:[%s1 + $0xa0] sm:$0xff]
      %v685 = vld [vmem:[%s1 + $0xa8] sm:$0xff]
      %v686 = vld [vmem:[%s1 + $0xb0] sm:$0xff]
      %v687 = vld [vmem:[%s1 + $0xb8] sm:$0xff]
      %v688 = vld [vmem:[%s1 + $0xc0] sm:$0xff]
      %v689 = vld [vmem:[%s1 + $0xc8] sm:$0xff]
      %v690 = vld [vmem:[%s1 + $0xd0] sm:$0xff]
      %v691 = vld [vmem:[%s1 + $0xd8] sm:$0xff]
      %v692 = vld [vmem:[%s1 + $0xe0] sm:$0xff]
      %v693 = vld [vmem:[%s1 + $0xe8] sm:$0xff]
      %v694 = vld [vmem:[%s1 + $0xf0] sm:$0xff]
      %v695 = vld [vmem:[%s1 + $0xf8] sm:$0xff]
      %v696 = vld [vmem:[%s1 + $0x100] sm:$0xff]
      %v697 = vld [vmem:[%s1 + $0x108] sm:$0xff]
      %v698 = vld [vmem:[%s1 + $0x110] sm:$0xff]
      %v699 = vld [vmem:[%s1 + $0x118] sm:$0xff]
      %v700 = vld [vmem:[%s1 + $0x120] sm:$0xff]
      %v701 = vld [vmem:[%s1 + $0x128] sm:$0xff]
      %v702 = vld [vmem:[%s1 + $0x130] sm:$0xff]
      %v703 = vld [vmem:[%s1 + $0x138] sm:$0xff]
      %v704 = vld [vmem:[%s1 + $0x140] sm:$0xff]
      %706 = vset.pattern.permute.xlu0 0
      %707 = vperm.xlu0 %706, %v664
      %v708 = vpop.permute.xlu0 %707
      %711 = vset.pattern.permute.xlu0 0
      %712 = vperm.xlu0 %711, %v665
      %v713 = vpop.permute.xlu0 %712
      %716 = vset.pattern.permute.xlu0 0
      %717 = vperm.xlu0 %716, %v666
      %v718 = vpop.permute.xlu0 %717
      %721 = vset.pattern.permute.xlu0 0
      %722 = vperm.xlu0 %721, %v667
      %v723 = vpop.permute.xlu0 %722
      %726 = vset.pattern.permute.xlu0 0
      %727 = vperm.xlu0 %726, %v668
      %v728 = vpop.permute.xlu0 %727
      %731 = vset.pattern.permute.xlu0 0
      %732 = vperm.xlu0 %731, %v669
      %v733 = vpop.permute.xlu0 %732
      %736 = vset.pattern.permute.xlu0 0
      %737 = vperm.xlu0 %736, %v670
      %v738 = vpop.permute.xlu0 %737
      %741 = vset.pattern.permute.xlu0 0
      %742 = vperm.xlu0 %741, %v671
      %v743 = vpop.permute.xlu0 %742
      %746 = vset.pattern.permute.xlu0 0
      %747 = vperm.xlu0 %746, %v672
      %v748 = vpop.permute.xlu0 %747
      %751 = vset.pattern.permute.xlu0 0
      %752 = vperm.xlu0 %751, %v673
      %v753 = vpop.permute.xlu0 %752
      %756 = vset.pattern.permute.xlu0 0
      %757 = vperm.xlu0 %756, %v674
      %v758 = vpop.permute.xlu0 %757
      %761 = vset.pattern.permute.xlu0 0
      %762 = vperm.xlu0 %761, %v675
      %v763 = vpop.permute.xlu0 %762
      %766 = vset.pattern.permute.xlu0 0
      %767 = vperm.xlu0 %766, %v676
      %v768 = vpop.permute.xlu0 %767
      %771 = vset.pattern.permute.xlu0 0
      %772 = vperm.xlu0 %771, %v677
      %v773 = vpop.permute.xlu0 %772
      %776 = vset.pattern.permute.xlu0 0
      %777 = vperm.xlu0 %776, %v678
      %v778 = vpop.permute.xlu0 %777
      %781 = vset.pattern.permute.xlu0 0
      %782 = vperm.xlu0 %781, %v679
      %v783 = vpop.permute.xlu0 %782
      %786 = vset.pattern.permute.xlu0 0
      %787 = vperm.xlu0 %786, %v680
      %v788 = vpop.permute.xlu0 %787
      %791 = vset.pattern.permute.xlu0 0
      %792 = vperm.xlu0 %791, %v681
      %v793 = vpop.permute.xlu0 %792
      %796 = vset.pattern.permute.xlu0 0
      %797 = vperm.xlu0 %796, %v682
      %v798 = vpop.permute.xlu0 %797
      %801 = vset.pattern.permute.xlu0 0
      %802 = vperm.xlu0 %801, %v683
      %v803 = vpop.permute.xlu0 %802
      %806 = vset.pattern.permute.xlu0 0
      %807 = vperm.xlu0 %806, %v684
      %v808 = vpop.permute.xlu0 %807
      %811 = vset.pattern.permute.xlu0 0
      %812 = vperm.xlu0 %811, %v685
      %v813 = vpop.permute.xlu0 %812
      %816 = vset.pattern.permute.xlu0 0
      %817 = vperm.xlu0 %816, %v686
      %v818 = vpop.permute.xlu0 %817
      %821 = vset.pattern.permute.xlu0 0
      %822 = vperm.xlu0 %821, %v687
      %v823 = vpop.permute.xlu0 %822
      %826 = vset.pattern.permute.xlu0 0
      %827 = vperm.xlu0 %826, %v688
      %v828 = vpop.permute.xlu0 %827
      %831 = vset.pattern.permute.xlu0 0
      %832 = vperm.xlu0 %831, %v689
      %v833 = vpop.permute.xlu0 %832
      %836 = vset.pattern.permute.xlu0 0
      %837 = vperm.xlu0 %836, %v690
      %v838 = vpop.permute.xlu0 %837
      %841 = vset.pattern.permute.xlu0 0
      %842 = vperm.xlu0 %841, %v691
      %v843 = vpop.permute.xlu0 %842
      %846 = vset.pattern.permute.xlu0 0
      %847 = vperm.xlu0 %846, %v692
      %v848 = vpop.permute.xlu0 %847
      %851 = vset.pattern.permute.xlu0 0
      %852 = vperm.xlu0 %851, %v693
      %v853 = vpop.permute.xlu0 %852
      %856 = vset.pattern.permute.xlu0 0
      %857 = vperm.xlu0 %856, %v694
      %v858 = vpop.permute.xlu0 %857
      %861 = vset.pattern.permute.xlu0 0
      %862 = vperm.xlu0 %861, %v695
      %v863 = vpop.permute.xlu0 %862
      %866 = vset.pattern.permute.xlu0 0
      %867 = vperm.xlu0 %866, %v696
      %v868 = vpop.permute.xlu0 %867
      %871 = vset.pattern.permute.xlu0 0
      %872 = vperm.xlu0 %871, %v697
      %v873 = vpop.permute.xlu0 %872
      %876 = vset.pattern.permute.xlu0 0
      %877 = vperm.xlu0 %876, %v698
      %v878 = vpop.permute.xlu0 %877
      %881 = vset.pattern.permute.xlu0 0
      %882 = vperm.xlu0 %881, %v699
      %v883 = vpop.permute.xlu0 %882
      %886 = vset.pattern.permute.xlu0 0
      %887 = vperm.xlu0 %886, %v700
      %v888 = vpop.permute.xlu0 %887
      %891 = vset.pattern.permute.xlu0 0
      %892 = vperm.xlu0 %891, %v701
      %v893 = vpop.permute.xlu0 %892
      %896 = vset.pattern.permute.xlu0 0
      %897 = vperm.xlu0 %896, %v702
      %v898 = vpop.permute.xlu0 %897
      %901 = vset.pattern.permute.xlu0 0
      %902 = vperm.xlu0 %901, %v703
      %v903 = vpop.permute.xlu0 %902
      %906 = vset.pattern.permute.xlu0 0
      %907 = vperm.xlu0 %906, %v704
      %v908 = vpop.permute.xlu0 %907
      %v910 = vmul.f32 %v623, %v708
      %v911 = vmul.f32 %v624, %v713
      %v912 = vmul.f32 %v625, %v718
      %v913 = vmul.f32 %v626, %v723
      %v914 = vmul.f32 %v627, %v728
      %v915 = vmul.f32 %v628, %v733
      %v916 = vmul.f32 %v629, %v738
      %v917 = vmul.f32 %v630, %v743
      %v918 = vmul.f32 %v631, %v748
      %v919 = vmul.f32 %v632, %v753
      %v920 = vmul.f32 %v633, %v758
      %v921 = vmul.f32 %v634, %v763
      %v922 = vmul.f32 %v635, %v768
      %v923 = vmul.f32 %v636, %v773
      %v924 = vmul.f32 %v637, %v778
      %v925 = vmul.f32 %v638, %v783
      %v926 = vmul.f32 %v639, %v788
      %v927 = vmul.f32 %v640, %v793
      %v928 = vmul.f32 %v641, %v798
      %v929 = vmul.f32 %v642, %v803
      %v930 = vmul.f32 %v643, %v808
      %v931 = vmul.f32 %v644, %v813
      %v932 = vmul.f32 %v645, %v818
      %v933 = vmul.f32 %v646, %v823
      %v934 = vmul.f32 %v647, %v828
      %v935 = vmul.f32 %v648, %v833
      %v936 = vmul.f32 %v649, %v838
      %v937 = vmul.f32 %v650, %v843
      %v938 = vmul.f32 %v651, %v848
      %v939 = vmul.f32 %v652, %v853
      %v940 = vmul.f32 %v653, %v858
      %v941 = vmul.f32 %v654, %v863
      %v942 = vmul.f32 %v655, %v868
      %v943 = vmul.f32 %v656, %v873
      %v944 = vmul.f32 %v657, %v878
      %v945 = vmul.f32 %v658, %v883
      %v946 = vmul.f32 %v659, %v888
      %v947 = vmul.f32 %v660, %v893
      %v948 = vmul.f32 %v661, %v898
      %v949 = vmul.f32 %v662, %v903
      %v950 = vmul.f32 %v663, %v908
      %v951 = vrot.slane %v910, 5
      %v952 = vrot.slane %v911, 5
      %v953 = vrot.slane %v912, 5
      %v954 = vrot.slane %v913, 5
      %v955 = vrot.slane %v914, 5
      %v956 = vrot.slane %v915, 5
      %v957 = vrot.slane %v916, 5
      %v958 = vrot.slane %v917, 5
      %v959 = vrot.slane %v918, 5
      %v960 = vrot.slane %v919, 5
      %v961 = vrot.slane %v920, 5
      %v962 = vrot.slane %v921, 5
      %v963 = vrot.slane %v922, 5
      %v964 = vrot.slane %v923, 5
      %v965 = vrot.slane %v924, 5
      %v966 = vrot.slane %v925, 5
      %v967 = vrot.slane %v926, 5
      %v968 = vrot.slane %v927, 5
      %v969 = vrot.slane %v928, 5
      %v970 = vrot.slane %v929, 5
      %v971 = vrot.slane %v930, 5
      %v972 = vrot.slane %v931, 5
      %v973 = vrot.slane %v932, 5
      %v974 = vrot.slane %v933, 5
      %v975 = vrot.slane %v934, 5
      %v976 = vrot.slane %v935, 5
      %v977 = vrot.slane %v936, 5
      %v978 = vrot.slane %v937, 5
      %v979 = vrot.slane %v938, 5
      %v980 = vrot.slane %v939, 5
      %v981 = vrot.slane %v940, 5
      %v982 = vrot.slane %v941, 5
      %v983 = vrot.slane %v942, 5
      %v984 = vrot.slane %v943, 5
      %v985 = vrot.slane %v944, 5
      %v986 = vrot.slane %v945, 5
      %v987 = vrot.slane %v946, 5
      %v988 = vrot.slane %v947, 5
      %v989 = vrot.slane %v948, 5
      %v990 = vrot.slane %v949, 5
      %v991 = vrot.slane %v950, 5
      %v992 = vlaneseq
      %v993 = vshrl.u32 %v992, 7
      %vm994 = vcmp.lt.s32.totalorder %v993, 3
      %v995 = vsel %vm994, %v990, %v991
      %v996 = vsel %vm994, %v989, %v990
      %v997 = vsel %vm994, %v988, %v989
      %v998 = vsel %vm994, %v987, %v988
      %v999 = vsel %vm994, %v986, %v987
      %v1000 = vsel %vm994, %v985, %v986
      %v1001 = vsel %vm994, %v984, %v985
      %v1002 = vsel %vm994, %v983, %v984
      %v1003 = vsel %vm994, %v982, %v983
      %v1004 = vsel %vm994, %v981, %v982
      %v1005 = vsel %vm994, %v980, %v981
      %v1006 = vsel %vm994, %v979, %v980
      %v1007 = vsel %vm994, %v978, %v979
      %v1008 = vsel %vm994, %v977, %v978
      %v1009 = vsel %vm994, %v976, %v977
      %v1010 = vsel %vm994, %v975, %v976
      %v1011 = vsel %vm994, %v974, %v975
      %v1012 = vsel %vm994, %v973, %v974
      %v1013 = vsel %vm994, %v972, %v973
      %v1014 = vsel %vm994, %v971, %v972
      %v1015 = vsel %vm994, %v970, %v971
      %v1016 = vsel %vm994, %v969, %v970
      %v1017 = vsel %vm994, %v968, %v969
      %v1018 = vsel %vm994, %v967, %v968
      %v1019 = vsel %vm994, %v966, %v967
      %v1020 = vsel %vm994, %v965, %v966
      %v1021 = vsel %vm994, %v964, %v965
      %v1022 = vsel %vm994, %v963, %v964
      %v1023 = vsel %vm994, %v962, %v963
      %v1024 = vsel %vm994, %v961, %v962
      %v1025 = vsel %vm994, %v960, %v961
      %v1026 = vsel %vm994, %v959, %v960
      %v1027 = vsel %vm994, %v958, %v959
      %v1028 = vsel %vm994, %v957, %v958
      %v1029 = vsel %vm994, %v956, %v957
      %v1030 = vsel %vm994, %v955, %v956
      %v1031 = vsel %vm994, %v954, %v955
      %v1032 = vsel %vm994, %v953, %v954
      %v1033 = vsel %vm994, %v952, %v953
      %v1034 = vsel %vm994, %v951, %v952
      %v1035 = vsel %vm994, %v991, %v951
      %v1036 = vld [vmem:[%s4] sm:$0xff]
      %v1037 = vld [vmem:[%s4 + $0x8] sm:$0xff]
      %v1038 = vrot.slane %v910, 6
      %v1039 = vrot.slane %v911, 6
      %v1040 = vrot.slane %v912, 6
      %v1041 = vrot.slane %v913, 6
      %v1042 = vrot.slane %v914, 6
      %v1043 = vrot.slane %v915, 6
      %v1044 = vrot.slane %v916, 6
      %v1045 = vrot.slane %v917, 6
      %v1046 = vrot.slane %v918, 6
      %v1047 = vrot.slane %v919, 6
      %v1048 = vrot.slane %v920, 6
      %v1049 = vrot.slane %v921, 6
      %v1050 = vrot.slane %v922, 6
      %v1051 = vrot.slane %v923, 6
      %v1052 = vrot.slane %v924, 6
      %v1053 = vrot.slane %v925, 6
      %v1054 = vrot.slane %v926, 6
      %v1055 = vrot.slane %v927, 6
      %v1056 = vrot.slane %v928, 6
      %v1057 = vrot.slane %v929, 6
      %v1058 = vrot.slane %v930, 6
      %v1059 = vrot.slane %v931, 6
      %v1060 = vrot.slane %v932, 6
      %v1061 = vrot.slane %v933, 6
      %v1062 = vrot.slane %v934, 6
      %v1063 = vrot.slane %v935, 6
      %v1064 = vrot.slane %v936, 6
      %v1065 = vrot.slane %v937, 6
      %v1066 = vrot.slane %v938, 6
      %v1067 = vrot.slane %v939, 6
      %v1068 = vrot.slane %v940, 6
      %v1069 = vrot.slane %v941, 6
      %v1070 = vrot.slane %v942, 6
      %v1071 = vrot.slane %v943, 6
      %v1072 = vrot.slane %v944, 6
      %v1073 = vrot.slane %v945, 6
      %v1074 = vrot.slane %v946, 6
      %v1075 = vrot.slane %v947, 6
      %v1076 = vrot.slane %v948, 6
      %v1077 = vrot.slane %v949, 6
      %v1078 = vrot.slane %v950, 6
      %vm1079 = vcmp.lt.s32.totalorder %v993, 2
      %v1080 = vsel %vm1079, %v1077, %v1078
      %v1081 = vsel %vm1079, %v1076, %v1077
      %v1082 = vsel %vm1079, %v1075, %v1076
      %v1083 = vsel %vm1079, %v1074, %v1075
      %v1084 = vsel %vm1079, %v1073, %v1074
      %v1085 = vsel %vm1079, %v1072, %v1073
      %v1086 = vsel %vm1079, %v1071, %v1072
      %v1087 = vsel %vm1079, %v1070, %v1071
      %v1088 = vsel %vm1079, %v1069, %v1070
      %v1089 = vsel %vm1079, %v1068, %v1069
      %v1090 = vsel %vm1079, %v1067, %v1068
      %v1091 = vsel %vm1079, %v1066, %v1067
      %v1092 = vsel %vm1079, %v1065, %v1066
      %v1093 = vsel %vm1079, %v1064, %v1065
      %v1094 = vsel %vm1079, %v1063, %v1064
      %v1095 = vsel %vm1079, %v1062, %v1063
      %v1096 = vsel %vm1079, %v1061, %v1062
      %v1097 = vsel %vm1079, %v1060, %v1061
      %v1098 = vsel %vm1079, %v1059, %v1060
      %v1099 = vsel %vm1079, %v1058, %v1059
      %v1100 = vsel %vm1079, %v1057, %v1058
      %v1101 = vsel %vm1079, %v1056, %v1057
      %v1102 = vsel %vm1079, %v1055, %v1056
      %v1103 = vsel %vm1079, %v1054, %v1055
      %v1104 = vsel %vm1079, %v1053, %v1054
      %v1105 = vsel %vm1079, %v1052, %v1053
      %v1106 = vsel %vm1079, %v1051, %v1052
      %v1107 = vsel %vm1079, %v1050, %v1051
      %v1108 = vsel %vm1079, %v1049, %v1050
      %v1109 = vsel %vm1079, %v1048, %v1049
      %v1110 = vsel %vm1079, %v1047, %v1048
      %v1111 = vsel %vm1079, %v1046, %v1047
      %v1112 = vsel %vm1079, %v1045, %v1046
      %v1113 = vsel %vm1079, %v1044, %v1045
      %v1114 = vsel %vm1079, %v1043, %v1044
      %v1115 = vsel %vm1079, %v1042, %v1043
      %v1116 = vsel %vm1079, %v1041, %v1042
      %v1117 = vsel %vm1079, %v1040, %v1041
      %v1118 = vsel %vm1079, %v1039, %v1040
      %v1119 = vsel %vm1079, %v1038, %v1039
      %v1120 = vsel %vm1079, %v1078, %v1038
      %s1121 = scalar_lea.vmem %s4, 16
      %v1122 = vld [vmem:[%s1121] sm:$0xff]
      %v1123 = vld [vmem:[%s1121 + $0x8] sm:$0xff]
      %vm1124 = vcmask 130048
      %v1126 = vsel %vm1124, %v1081, 0
      %v1129 = vsel %vm1124, %v1080, 0
      %v1132 = vsel %vm1124, %v1120, 0
      %v1135 = vsel %vm1124, %v1119, 0
      %v1138 = vsel %vm1124, %v1118, 0
      %v1141 = vsel %vm1124, %v1117, 0
      %v1144 = vsel %vm1124, %v1116, 0
      %v1147 = vsel %vm1124, %v1115, 0
      %v1150 = vsel %vm1124, %v1114, 0
      %v1153 = vsel %vm1124, %v1113, 0
      %v1156 = vsel %vm1124, %v1112, 0
      %v1159 = vsel %vm1124, %v1111, 0
      %v1162 = vsel %vm1124, %v1110, 0
      %v1165 = vsel %vm1124, %v1109, 0
      %v1168 = vsel %vm1124, %v1108, 0
      %v1171 = vsel %vm1124, %v1107, 0
      %v1174 = vsel %vm1124, %v1106, 0
      %v1177 = vsel %vm1124, %v1105, 0
      %v1180 = vsel %vm1124, %v1104, 0
      %v1183 = vsel %vm1124, %v1103, 0
      %v1186 = vsel %vm1124, %v1102, 0
      %v1189 = vsel %vm1124, %v1101, 0
      %v1192 = vsel %vm1124, %v1100, 0
      %v1195 = vsel %vm1124, %v1099, 0
      %v1198 = vsel %vm1124, %v1098, 0
      %v1201 = vsel %vm1124, %v1097, 0
      %v1204 = vsel %vm1124, %v1096, 0
      %v1207 = vsel %vm1124, %v1095, 0
      %v1210 = vsel %vm1124, %v1094, 0
      %v1213 = vsel %vm1124, %v1093, 0
      %v1216 = vsel %vm1124, %v1092, 0
      %v1219 = vsel %vm1124, %v1091, 0
      %v1222 = vsel %vm1124, %v1090, 0
      %v1225 = vsel %vm1124, %v1089, 0
      %v1228 = vsel %vm1124, %v1088, 0
      %v1231 = vsel %vm1124, %v1087, 0
      %v1234 = vsel %vm1124, %v1086, 0
      %v1237 = vsel %vm1124, %v1085, 0
      %v1240 = vsel %vm1124, %v1084, 0
      %v1243 = vsel %vm1124, %v1083, 0
      %v1246 = vsel %vm1124, %v1082, 0
      %1248 = vmatpush.msra.mxu0 0.0
      %1249 = vmatpush.msra.mxu0 0.0
      %1250 = vmatpush.msra.mxu0 0.0
      %1251 = vmatpush.msra.mxu0 0.0
      %1252 = vmatpush.msra.mxu0 0.0
      %1253 = vmatpush.msra.mxu0 0.0
      %1254 = vmatpush.msra.mxu0 0.0
      %1255 = vmatpush.msra.mxu0 0.0
      %1256 = vmatpush.msra.mxu0 0.0
      %1257 = vmatpush.msra.mxu0 0.0
      %1258 = vmatpush.msra.mxu0 0.0
      %1259 = vmatpush.msra.mxu0 0.0
      %1260 = vmatpush.msra.mxu0 0.0
      %1261 = vmatpush.msra.mxu0 0.0
      %1262 = vmatpush.msra.mxu0 %v1123
      %1263 = vmatpush.msra.mxu0 %v1122
      %1264 = vmatmul.f32.gmra.mxu0 %v1126
      %v1265 = vpop.f32.mrf.mxu0
      %v1266 = vadd.f32 0.0, %v1265
      %1267 = vmatmul.f32.gmra.mxu0 %v1129
      %v1268 = vpop.f32.mrf.mxu0
      %v1269 = vadd.f32 0.0, %v1268
      %1270 = vmatmul.f32.gmra.mxu0 %v1132
      %v1271 = vpop.f32.mrf.mxu0
      %v1272 = vadd.f32 0.0, %v1271
      %1273 = vmatmul.f32.gmra.mxu0 %v1135
      %v1274 = vpop.f32.mrf.mxu0
      %v1275 = vadd.f32 0.0, %v1274
      %1276 = vmatmul.f32.gmra.mxu0 %v1138
      %v1277 = vpop.f32.mrf.mxu0
      %v1278 = vadd.f32 0.0, %v1277
      %1279 = vmatmul.f32.gmra.mxu0 %v1141
      %v1280 = vpop.f32.mrf.mxu0
      %v1281 = vadd.f32 0.0, %v1280
      %1282 = vmatmul.f32.gmra.mxu0 %v1144
      %v1283 = vpop.f32.mrf.mxu0
      %v1284 = vadd.f32 0.0, %v1283
      %1285 = vmatmul.f32.gmra.mxu0 %v1147
      %v1286 = vpop.f32.mrf.mxu0
      %v1287 = vadd.f32 0.0, %v1286
      %1288 = vmatmul.f32.gmra.mxu0 %v1150
      %v1289 = vpop.f32.mrf.mxu0
      %v1290 = vadd.f32 0.0, %v1289
      %1291 = vmatmul.f32.gmra.mxu0 %v1153
      %v1292 = vpop.f32.mrf.mxu0
      %v1293 = vadd.f32 0.0, %v1292
      %1294 = vmatmul.f32.gmra.mxu0 %v1156
      %v1295 = vpop.f32.mrf.mxu0
      %v1296 = vadd.f32 0.0, %v1295
      %1297 = vmatmul.f32.gmra.mxu0 %v1159
      %v1298 = vpop.f32.mrf.mxu0
      %v1299 = vadd.f32 0.0, %v1298
      %1300 = vmatmul.f32.gmra.mxu0 %v1162
      %v1301 = vpop.f32.mrf.mxu0
      %v1302 = vadd.f32 0.0, %v1301
      %1303 = vmatmul.f32.gmra.mxu0 %v1165
      %v1304 = vpop.f32.mrf.mxu0
      %v1305 = vadd.f32 0.0, %v1304
      %1306 = vmatmul.f32.gmra.mxu0 %v1168
      %v1307 = vpop.f32.mrf.mxu0
      %v1308 = vadd.f32 0.0, %v1307
      %1309 = vmatmul.f32.gmra.mxu0 %v1171
      %v1310 = vpop.f32.mrf.mxu0
      %v1311 = vadd.f32 0.0, %v1310
      %1312 = vmatmul.f32.gmra.mxu0 %v1174
      %v1313 = vpop.f32.mrf.mxu0
      %v1314 = vadd.f32 0.0, %v1313
      %1315 = vmatmul.f32.gmra.mxu0 %v1177
      %v1316 = vpop.f32.mrf.mxu0
      %v1317 = vadd.f32 0.0, %v1316
      %1318 = vmatmul.f32.gmra.mxu0 %v1180
      %v1319 = vpop.f32.mrf.mxu0
      %v1320 = vadd.f32 0.0, %v1319
      %1321 = vmatmul.f32.gmra.mxu0 %v1183
      %v1322 = vpop.f32.mrf.mxu0
      %v1323 = vadd.f32 0.0, %v1322
      %1324 = vmatmul.f32.gmra.mxu0 %v1186
      %v1325 = vpop.f32.mrf.mxu0
      %v1326 = vadd.f32 0.0, %v1325
      %1327 = vmatmul.f32.gmra.mxu0 %v1189
      %v1328 = vpop.f32.mrf.mxu0
      %v1329 = vadd.f32 0.0, %v1328
      %1330 = vmatmul.f32.gmra.mxu0 %v1192
      %v1331 = vpop.f32.mrf.mxu0
      %v1332 = vadd.f32 0.0, %v1331
      %1333 = vmatmul.f32.gmra.mxu0 %v1195
      %v1334 = vpop.f32.mrf.mxu0
      %v1335 = vadd.f32 0.0, %v1334
      %1336 = vmatmul.f32.gmra.mxu0 %v1198
      %v1337 = vpop.f32.mrf.mxu0
      %v1338 = vadd.f32 0.0, %v1337
      %1339 = vmatmul.f32.gmra.mxu0 %v1201
      %v1340 = vpop.f32.mrf.mxu0
      %v1341 = vadd.f32 0.0, %v1340
      %1342 = vmatmul.f32.gmra.mxu0 %v1204
      %v1343 = vpop.f32.mrf.mxu0
      %v1344 = vadd.f32 0.0, %v1343
      %1345 = vmatmul.f32.gmra.mxu0 %v1207
      %v1346 = vpop.f32.mrf.mxu0
      %v1347 = vadd.f32 0.0, %v1346
      %1348 = vmatmul.f32.gmra.mxu0 %v1210
      %v1349 = vpop.f32.mrf.mxu0
      %v1350 = vadd.f32 0.0, %v1349
      %1351 = vmatmul.f32.gmra.mxu0 %v1213
      %v1352 = vpop.f32.mrf.mxu0
      %v1353 = vadd.f32 0.0, %v1352
      %1354 = vmatmul.f32.gmra.mxu0 %v1216
      %v1355 = vpop.f32.mrf.mxu0
      %v1356 = vadd.f32 0.0, %v1355
      %1357 = vmatmul.f32.gmra.mxu0 %v1219
      %v1358 = vpop.f32.mrf.mxu0
      %v1359 = vadd.f32 0.0, %v1358
      %1360 = vmatmul.f32.gmra.mxu0 %v1222
      %v1361 = vpop.f32.mrf.mxu0
      %v1362 = vadd.f32 0.0, %v1361
      %1363 = vmatmul.f32.gmra.mxu0 %v1225
      %v1364 = vpop.f32.mrf.mxu0
      %v1365 = vadd.f32 0.0, %v1364
      %1366 = vmatmul.f32.gmra.mxu0 %v1228
      %v1367 = vpop.f32.mrf.mxu0
      %v1368 = vadd.f32 0.0, %v1367
      %1369 = vmatmul.f32.gmra.mxu0 %v1231
      %v1370 = vpop.f32.mrf.mxu0
      %v1371 = vadd.f32 0.0, %v1370
      %1372 = vmatmul.f32.gmra.mxu0 %v1234
      %v1373 = vpop.f32.mrf.mxu0
      %v1374 = vadd.f32 0.0, %v1373
      %1375 = vmatmul.f32.gmra.mxu0 %v1237
      %v1376 = vpop.f32.mrf.mxu0
      %v1377 = vadd.f32 0.0, %v1376
      %1378 = vmatmul.f32.gmra.mxu0 %v1240
      %v1379 = vpop.f32.mrf.mxu0
      %v1380 = vadd.f32 0.0, %v1379
      %1381 = vmatmul.f32.gmra.mxu0 %v1243
      %v1382 = vpop.f32.mrf.mxu0
      %v1383 = vadd.f32 0.0, %v1382
      %1384 = vmatmul.f32.gmra.mxu0 %v1246
      %v1385 = vpop.f32.mrf.mxu0
      %v1386 = vadd.f32 0.0, %v1385
      %1387 = vdwg.mxu0
      %v1389 = vsel %vm1124, %v996, 0
      %v1392 = vsel %vm1124, %v995, 0
      %v1395 = vsel %vm1124, %v1035, 0
      %v1398 = vsel %vm1124, %v1034, 0
      %v1401 = vsel %vm1124, %v1033, 0
      %v1404 = vsel %vm1124, %v1032, 0
      %v1407 = vsel %vm1124, %v1031, 0
      %v1410 = vsel %vm1124, %v1030, 0
      %v1413 = vsel %vm1124, %v1029, 0
      %v1416 = vsel %vm1124, %v1028, 0
      %v1419 = vsel %vm1124, %v1027, 0
      %v1422 = vsel %vm1124, %v1026, 0
      %v1425 = vsel %vm1124, %v1025, 0
      %v1428 = vsel %vm1124, %v1024, 0
      %v1431 = vsel %vm1124, %v1023, 0
      %v1434 = vsel %vm1124, %v1022, 0
      %v1437 = vsel %vm1124, %v1021, 0
      %v1440 = vsel %vm1124, %v1020, 0
      %v1443 = vsel %vm1124, %v1019, 0
      %v1446 = vsel %vm1124, %v1018, 0
      %v1449 = vsel %vm1124, %v1017, 0
      %v1452 = vsel %vm1124, %v1016, 0
      %v1455 = vsel %vm1124, %v1015, 0
      %v1458 = vsel %vm1124, %v1014, 0
      %v1461 = vsel %vm1124, %v1013, 0
      %v1464 = vsel %vm1124, %v1012, 0
      %v1467 = vsel %vm1124, %v1011, 0
      %v1470 = vsel %vm1124, %v1010, 0
      %v1473 = vsel %vm1124, %v1009, 0
      %v1476 = vsel %vm1124, %v1008, 0
      %v1479 = vsel %vm1124, %v1007, 0
      %v1482 = vsel %vm1124, %v1006, 0
      %v1485 = vsel %vm1124, %v1005, 0
      %v1488 = vsel %vm1124, %v1004, 0
      %v1491 = vsel %vm1124, %v1003, 0
      %v1494 = vsel %vm1124, %v1002, 0
      %v1497 = vsel %vm1124, %v1001, 0
      %v1500 = vsel %vm1124, %v1000, 0
      %v1503 = vsel %vm1124, %v999, 0
      %v1506 = vsel %vm1124, %v998, 0
      %v1509 = vsel %vm1124, %v997, 0
      %1511 = vmatpush.msra.mxu0 0.0
      %1512 = vmatpush.msra.mxu0 0.0
      %1513 = vmatpush.msra.mxu0 0.0
      %1514 = vmatpush.msra.mxu0 0.0
      %1515 = vmatpush.msra.mxu0 0.0
      %1516 = vmatpush.msra.mxu0 0.0
      %1517 = vmatpush.msra.mxu0 0.0
      %1518 = vmatpush.msra.mxu0 0.0
      %1519 = vmatpush.msra.mxu0 0.0
      %1520 = vmatpush.msra.mxu0 0.0
      %1521 = vmatpush.msra.mxu0 0.0
      %1522 = vmatpush.msra.mxu0 0.0
      %1523 = vmatpush.msra.mxu0 0.0
      %1524 = vmatpush.msra.mxu0 0.0
      %1525 = vmatpush.msra.mxu0 %v1037
      %1526 = vmatpush.msra.mxu0 %v1036
      %1527 = vmatmul.f32.gmra.mxu0 %v1389
      %v1528 = vpop.f32.mrf.mxu0
      %v1529 = vadd.f32 %v1266, %v1528
      %1530 = vmatmul.f32.gmra.mxu0 %v1392
      %v1531 = vpop.f32.mrf.mxu0
      %v1532 = vadd.f32 %v1269, %v1531
      %1533 = vmatmul.f32.gmra.mxu0 %v1395
      %v1534 = vpop.f32.mrf.mxu0
      %v1535 = vadd.f32 %v1272, %v1534
      %1536 = vmatmul.f32.gmra.mxu0 %v1398
      %v1537 = vpop.f32.mrf.mxu0
      %v1538 = vadd.f32 %v1275, %v1537
      %1539 = vmatmul.f32.gmra.mxu0 %v1401
      %v1540 = vpop.f32.mrf.mxu0
      %v1541 = vadd.f32 %v1278, %v1540
      %1542 = vmatmul.f32.gmra.mxu0 %v1404
      %v1543 = vpop.f32.mrf.mxu0
      %v1544 = vadd.f32 %v1281, %v1543
      %1545 = vmatmul.f32.gmra.mxu0 %v1407
      %v1546 = vpop.f32.mrf.mxu0
      %v1547 = vadd.f32 %v1284, %v1546
      %1548 = vmatmul.f32.gmra.mxu0 %v1410
      %v1549 = vpop.f32.mrf.mxu0
      %v1550 = vadd.f32 %v1287, %v1549
      %1551 = vmatmul.f32.gmra.mxu0 %v1413
      %v1552 = vpop.f32.mrf.mxu0
      %v1553 = vadd.f32 %v1290, %v1552
      %1554 = vmatmul.f32.gmra.mxu0 %v1416
      %v1555 = vpop.f32.mrf.mxu0
      %v1556 = vadd.f32 %v1293, %v1555
      %1557 = vmatmul.f32.gmra.mxu0 %v1419
      %v1558 = vpop.f32.mrf.mxu0
      %v1559 = vadd.f32 %v1296, %v1558
      %1560 = vmatmul.f32.gmra.mxu0 %v1422
      %v1561 = vpop.f32.mrf.mxu0
      %v1562 = vadd.f32 %v1299, %v1561
      %1563 = vmatmul.f32.gmra.mxu0 %v1425
      %v1564 = vpop.f32.mrf.mxu0
      %v1565 = vadd.f32 %v1302, %v1564
      %1566 = vmatmul.f32.gmra.mxu0 %v1428
      %v1567 = vpop.f32.mrf.mxu0
      %v1568 = vadd.f32 %v1305, %v1567
      %1569 = vmatmul.f32.gmra.mxu0 %v1431
      %v1570 = vpop.f32.mrf.mxu0
      %v1571 = vadd.f32 %v1308, %v1570
      %1572 = vmatmul.f32.gmra.mxu0 %v1434
      %v1573 = vpop.f32.mrf.mxu0
      %v1574 = vadd.f32 %v1311, %v1573
      %1575 = vmatmul.f32.gmra.mxu0 %v1437
      %v1576 = vpop.f32.mrf.mxu0
      %v1577 = vadd.f32 %v1314, %v1576
      %1578 = vmatmul.f32.gmra.mxu0 %v1440
      %v1579 = vpop.f32.mrf.mxu0
      %v1580 = vadd.f32 %v1317, %v1579
      %1581 = vmatmul.f32.gmra.mxu0 %v1443
      %v1582 = vpop.f32.mrf.mxu0
      %v1583 = vadd.f32 %v1320, %v1582
      %1584 = vmatmul.f32.gmra.mxu0 %v1446
      %v1585 = vpop.f32.mrf.mxu0
      %v1586 = vadd.f32 %v1323, %v1585
      %1587 = vmatmul.f32.gmra.mxu0 %v1449
      %v1588 = vpop.f32.mrf.mxu0
      %v1589 = vadd.f32 %v1326, %v1588
      %1590 = vmatmul.f32.gmra.mxu0 %v1452
      %v1591 = vpop.f32.mrf.mxu0
      %v1592 = vadd.f32 %v1329, %v1591
      %1593 = vmatmul.f32.gmra.mxu0 %v1455
      %v1594 = vpop.f32.mrf.mxu0
      %v1595 = vadd.f32 %v1332, %v1594
      %1596 = vmatmul.f32.gmra.mxu0 %v1458
      %v1597 = vpop.f32.mrf.mxu0
      %v1598 = vadd.f32 %v1335, %v1597
      %1599 = vmatmul.f32.gmra.mxu0 %v1461
      %v1600 = vpop.f32.mrf.mxu0
      %v1601 = vadd.f32 %v1338, %v1600
      %1602 = vmatmul.f32.gmra.mxu0 %v1464
      %v1603 = vpop.f32.mrf.mxu0
      %v1604 = vadd.f32 %v1341, %v1603
      %1605 = vmatmul.f32.gmra.mxu0 %v1467
      %v1606 = vpop.f32.mrf.mxu0
      %v1607 = vadd.f32 %v1344, %v1606
      %1608 = vmatmul.f32.gmra.mxu0 %v1470
      %v1609 = vpop.f32.mrf.mxu0
      %v1610 = vadd.f32 %v1347, %v1609
      %1611 = vmatmul.f32.gmra.mxu0 %v1473
      %v1612 = vpop.f32.mrf.mxu0
      %v1613 = vadd.f32 %v1350, %v1612
      %1614 = vmatmul.f32.gmra.mxu0 %v1476
      %v1615 = vpop.f32.mrf.mxu0
      %v1616 = vadd.f32 %v1353, %v1615
      %1617 = vmatmul.f32.gmra.mxu0 %v1479
      %v1618 = vpop.f32.mrf.mxu0
      %v1619 = vadd.f32 %v1356, %v1618
      %1620 = vmatmul.f32.gmra.mxu0 %v1482
      %v1621 = vpop.f32.mrf.mxu0
      %v1622 = vadd.f32 %v1359, %v1621
      %1623 = vmatmul.f32.gmra.mxu0 %v1485
      %v1624 = vpop.f32.mrf.mxu0
      %v1625 = vadd.f32 %v1362, %v1624
      %1626 = vmatmul.f32.gmra.mxu0 %v1488
      %v1627 = vpop.f32.mrf.mxu0
      %v1628 = vadd.f32 %v1365, %v1627
      %1629 = vmatmul.f32.gmra.mxu0 %v1491
      %v1630 = vpop.f32.mrf.mxu0
      %v1631 = vadd.f32 %v1368, %v1630
      %1632 = vmatmul.f32.gmra.mxu0 %v1494
      %v1633 = vpop.f32.mrf.mxu0
      %v1634 = vadd.f32 %v1371, %v1633
      %1635 = vmatmul.f32.gmra.mxu0 %v1497
      %v1636 = vpop.f32.mrf.mxu0
      %v1637 = vadd.f32 %v1374, %v1636
      %1638 = vmatmul.f32.gmra.mxu0 %v1500
      %v1639 = vpop.f32.mrf.mxu0
      %v1640 = vadd.f32 %v1377, %v1639
      %1641 = vmatmul.f32.gmra.mxu0 %v1503
      %v1642 = vpop.f32.mrf.mxu0
      %v1643 = vadd.f32 %v1380, %v1642
      %1644 = vmatmul.f32.gmra.mxu0 %v1506
      %v1645 = vpop.f32.mrf.mxu0
      %v1646 = vadd.f32 %v1383, %v1645
      %1647 = vmatmul.f32.gmra.mxu0 %v1509
      %v1648 = vpop.f32.mrf.mxu0
      %v1649 = vadd.f32 %v1386, %v1648
      %1650 = vdwg.mxu0
      %v1651 = vrot.slane %v910, 7
      %v1652 = vrot.slane %v911, 7
      %v1653 = vrot.slane %v912, 7
      %v1654 = vrot.slane %v913, 7
      %v1655 = vrot.slane %v914, 7
      %v1656 = vrot.slane %v915, 7
      %v1657 = vrot.slane %v916, 7
      %v1658 = vrot.slane %v917, 7
      %v1659 = vrot.slane %v918, 7
      %v1660 = vrot.slane %v919, 7
      %v1661 = vrot.slane %v920, 7
      %v1662 = vrot.slane %v921, 7
      %v1663 = vrot.slane %v922, 7
      %v1664 = vrot.slane %v923, 7
      %v1665 = vrot.slane %v924, 7
      %v1666 = vrot.slane %v925, 7
      %v1667 = vrot.slane %v926, 7
      %v1668 = vrot.slane %v927, 7
      %v1669 = vrot.slane %v928, 7
      %v1670 = vrot.slane %v929, 7
      %v1671 = vrot.slane %v930, 7
      %v1672 = vrot.slane %v931, 7
      %v1673 = vrot.slane %v932, 7
      %v1674 = vrot.slane %v933, 7
      %v1675 = vrot.slane %v934, 7
      %v1676 = vrot.slane %v935, 7
      %v1677 = vrot.slane %v936, 7
      %v1678 = vrot.slane %v937, 7
      %v1679 = vrot.slane %v938, 7
      %v1680 = vrot.slane %v939, 7
      %v1681 = vrot.slane %v940, 7
      %v1682 = vrot.slane %v941, 7
      %v1683 = vrot.slane %v942, 7
      %v1684 = vrot.slane %v943, 7
      %v1685 = vrot.slane %v944, 7
      %v1686 = vrot.slane %v945, 7
      %v1687 = vrot.slane %v946, 7
      %v1688 = vrot.slane %v947, 7
      %v1689 = vrot.slane %v948, 7
      %v1690 = vrot.slane %v949, 7
      %v1691 = vrot.slane %v950, 7
      %vm1692 = vcmp.lt.s32.totalorder %v993, 1
      %v1693 = vsel %vm1692, %v1690, %v1691
      %v1694 = vsel %vm1692, %v1689, %v1690
      %v1695 = vsel %vm1692, %v1688, %v1689
      %v1696 = vsel %vm1692, %v1687, %v1688
      %v1697 = vsel %vm1692, %v1686, %v1687
      %v1698 = vsel %vm1692, %v1685, %v1686
      %v1699 = vsel %vm1692, %v1684, %v1685
      %v1700 = vsel %vm1692, %v1683, %v1684
      %v1701 = vsel %vm1692, %v1682, %v1683
      %v1702 = vsel %vm1692, %v1681, %v1682
      %v1703 = vsel %vm1692, %v1680, %v1681
      %v1704 = vsel %vm1692, %v1679, %v1680
      %v1705 = vsel %vm1692, %v1678, %v1679
      %v1706 = vsel %vm1692, %v1677, %v1678
      %v1707 = vsel %vm1692, %v1676, %v1677
      %v1708 = vsel %vm1692, %v1675, %v1676
      %v1709 = vsel %vm1692, %v1674, %v1675
      %v1710 = vsel %vm1692, %v1673, %v1674
      %v1711 = vsel %vm1692, %v1672, %v1673
      %v1712 = vsel %vm1692, %v1671, %v1672
      %v1713 = vsel %vm1692, %v1670, %v1671
      %v1714 = vsel %vm1692, %v1669, %v1670
      %v1715 = vsel %vm1692, %v1668, %v1669
      %v1716 = vsel %vm1692, %v1667, %v1668
      %v1717 = vsel %vm1692, %v1666, %v1667
      %v1718 = vsel %vm1692, %v1665, %v1666
      %v1719 = vsel %vm1692, %v1664, %v1665
      %v1720 = vsel %vm1692, %v1663, %v1664
      %v1721 = vsel %vm1692, %v1662, %v1663
      %v1722 = vsel %vm1692, %v1661, %v1662
      %v1723 = vsel %vm1692, %v1660, %v1661
      %v1724 = vsel %vm1692, %v1659, %v1660
      %v1725 = vsel %vm1692, %v1658, %v1659
      %v1726 = vsel %vm1692, %v1657, %v1658
      %v1727 = vsel %vm1692, %v1656, %v1657
      %v1728 = vsel %vm1692, %v1655, %v1656
      %v1729 = vsel %vm1692, %v1654, %v1655
      %v1730 = vsel %vm1692, %v1653, %v1654
      %v1731 = vsel %vm1692, %v1652, %v1653
      %v1732 = vsel %vm1692, %v1651, %v1652
      %v1733 = vsel %vm1692, %v1691, %v1651
      %s1734 = scalar_lea.vmem %s4, 32
      %v1735 = vld [vmem:[%s1734] sm:$0xff]
      %v1736 = vld [vmem:[%s1734 + $0x8] sm:$0xff]
      %v1738 = vsel %vm1124, %v1694, 0
      %v1741 = vsel %vm1124, %v1693, 0
      %v1744 = vsel %vm1124, %v1733, 0
      %v1747 = vsel %vm1124, %v1732, 0
      %v1750 = vsel %vm1124, %v1731, 0
      %v1753 = vsel %vm1124, %v1730, 0
      %v1756 = vsel %vm1124, %v1729, 0
      %v1759 = vsel %vm1124, %v1728, 0
      %v1762 = vsel %vm1124, %v1727, 0
      %v1765 = vsel %vm1124, %v1726, 0
      %v1768 = vsel %vm1124, %v1725, 0
      %v1771 = vsel %vm1124, %v1724, 0
      %v1774 = vsel %vm1124, %v1723, 0
      %v1777 = vsel %vm1124, %v1722, 0
      %v1780 = vsel %vm1124, %v1721, 0
      %v1783 = vsel %vm1124, %v1720, 0
      %v1786 = vsel %vm1124, %v1719, 0
      %v1789 = vsel %vm1124, %v1718, 0
      %v1792 = vsel %vm1124, %v1717, 0
      %v1795 = vsel %vm1124, %v1716, 0
      %v1798 = vsel %vm1124, %v1715, 0
      %v1801 = vsel %vm1124, %v1714, 0
      %v1804 = vsel %vm1124, %v1713, 0
      %v1807 = vsel %vm1124, %v1712, 0
      %v1810 = vsel %vm1124, %v1711, 0
      %v1813 = vsel %vm1124, %v1710, 0
      %v1816 = vsel %vm1124, %v1709, 0
      %v1819 = vsel %vm1124, %v1708, 0
      %v1822 = vsel %vm1124, %v1707, 0
      %v1825 = vsel %vm1124, %v1706, 0
      %v1828 = vsel %vm1124, %v1705, 0
      %v1831 = vsel %vm1124, %v1704, 0
      %v1834 = vsel %vm1124, %v1703, 0
      %v1837 = vsel %vm1124, %v1702, 0
      %v1840 = vsel %vm1124, %v1701, 0
      %v1843 = vsel %vm1124, %v1700, 0
      %v1846 = vsel %vm1124, %v1699, 0
      %v1849 = vsel %vm1124, %v1698, 0
      %v1852 = vsel %vm1124, %v1697, 0
      %v1855 = vsel %vm1124, %v1696, 0
      %v1858 = vsel %vm1124, %v1695, 0
      %1860 = vmatpush.msra.mxu0 0.0
      %1861 = vmatpush.msra.mxu0 0.0
      %1862 = vmatpush.msra.mxu0 0.0
      %1863 = vmatpush.msra.mxu0 0.0
      %1864 = vmatpush.msra.mxu0 0.0
      %1865 = vmatpush.msra.mxu0 0.0
      %1866 = vmatpush.msra.mxu0 0.0
      %1867 = vmatpush.msra.mxu0 0.0
      %1868 = vmatpush.msra.mxu0 0.0
      %1869 = vmatpush.msra.mxu0 0.0
      %1870 = vmatpush.msra.mxu0 0.0
      %1871 = vmatpush.msra.mxu0 0.0
      %1872 = vmatpush.msra.mxu0 0.0
      %1873 = vmatpush.msra.mxu0 0.0
      %1874 = vmatpush.msra.mxu0 %v1736
      %1875 = vmatpush.msra.mxu0 %v1735
      %1876 = vmatmul.f32.gmra.mxu0 %v1738
      %v1877 = vpop.f32.mrf.mxu0
      %v1878 = vadd.f32 0.0, %v1877
      %1879 = vmatmul.f32.gmra.mxu0 %v1741
      %v1880 = vpop.f32.mrf.mxu0
      %v1881 = vadd.f32 0.0, %v1880
      %1882 = vmatmul.f32.gmra.mxu0 %v1744
      %v1883 = vpop.f32.mrf.mxu0
      %v1884 = vadd.f32 0.0, %v1883
      %1885 = vmatmul.f32.gmra.mxu0 %v1747
      %v1886 = vpop.f32.mrf.mxu0
      %v1887 = vadd.f32 0.0, %v1886
      %1888 = vmatmul.f32.gmra.mxu0 %v1750
      %v1889 = vpop.f32.mrf.mxu0
      %v1890 = vadd.f32 0.0, %v1889
      %1891 = vmatmul.f32.gmra.mxu0 %v1753
      %v1892 = vpop.f32.mrf.mxu0
      %v1893 = vadd.f32 0.0, %v1892
      %1894 = vmatmul.f32.gmra.mxu0 %v1756
      %v1895 = vpop.f32.mrf.mxu0
      %v1896 = vadd.f32 0.0, %v1895
      %1897 = vmatmul.f32.gmra.mxu0 %v1759
      %v1898 = vpop.f32.mrf.mxu0
      %v1899 = vadd.f32 0.0, %v1898
      %1900 = vmatmul.f32.gmra.mxu0 %v1762
      %v1901 = vpop.f32.mrf.mxu0
      %v1902 = vadd.f32 0.0, %v1901
      %1903 = vmatmul.f32.gmra.mxu0 %v1765
      %v1904 = vpop.f32.mrf.mxu0
      %v1905 = vadd.f32 0.0, %v1904
      %1906 = vmatmul.f32.gmra.mxu0 %v1768
      %v1907 = vpop.f32.mrf.mxu0
      %v1908 = vadd.f32 0.0, %v1907
      %1909 = vmatmul.f32.gmra.mxu0 %v1771
      %v1910 = vpop.f32.mrf.mxu0
      %v1911 = vadd.f32 0.0, %v1910
      %1912 = vmatmul.f32.gmra.mxu0 %v1774
      %v1913 = vpop.f32.mrf.mxu0
      %v1914 = vadd.f32 0.0, %v1913
      %1915 = vmatmul.f32.gmra.mxu0 %v1777
      %v1916 = vpop.f32.mrf.mxu0
      %v1917 = vadd.f32 0.0, %v1916
      %1918 = vmatmul.f32.gmra.mxu0 %v1780
      %v1919 = vpop.f32.mrf.mxu0
      %v1920 = vadd.f32 0.0, %v1919
      %1921 = vmatmul.f32.gmra.mxu0 %v1783
      %v1922 = vpop.f32.mrf.mxu0
      %v1923 = vadd.f32 0.0, %v1922
      %1924 = vmatmul.f32.gmra.mxu0 %v1786
      %v1925 = vpop.f32.mrf.mxu0
      %v1926 = vadd.f32 0.0, %v1925
      %1927 = vmatmul.f32.gmra.mxu0 %v1789
      %v1928 = vpop.f32.mrf.mxu0
      %v1929 = vadd.f32 0.0, %v1928
      %1930 = vmatmul.f32.gmra.mxu0 %v1792
      %v1931 = vpop.f32.mrf.mxu0
      %v1932 = vadd.f32 0.0, %v1931
      %1933 = vmatmul.f32.gmra.mxu0 %v1795
      %v1934 = vpop.f32.mrf.mxu0
      %v1935 = vadd.f32 0.0, %v1934
      %1936 = vmatmul.f32.gmra.mxu0 %v1798
      %v1937 = vpop.f32.mrf.mxu0
      %v1938 = vadd.f32 0.0, %v1937
      %1939 = vmatmul.f32.gmra.mxu0 %v1801
      %v1940 = vpop.f32.mrf.mxu0
      %v1941 = vadd.f32 0.0, %v1940
      %1942 = vmatmul.f32.gmra.mxu0 %v1804
      %v1943 = vpop.f32.mrf.mxu0
      %v1944 = vadd.f32 0.0, %v1943
      %1945 = vmatmul.f32.gmra.mxu0 %v1807
      %v1946 = vpop.f32.mrf.mxu0
      %v1947 = vadd.f32 0.0, %v1946
      %1948 = vmatmul.f32.gmra.mxu0 %v1810
      %v1949 = vpop.f32.mrf.mxu0
      %v1950 = vadd.f32 0.0, %v1949
      %1951 = vmatmul.f32.gmra.mxu0 %v1813
      %v1952 = vpop.f32.mrf.mxu0
      %v1953 = vadd.f32 0.0, %v1952
      %1954 = vmatmul.f32.gmra.mxu0 %v1816
      %v1955 = vpop.f32.mrf.mxu0
      %v1956 = vadd.f32 0.0, %v1955
      %1957 = vmatmul.f32.gmra.mxu0 %v1819
      %v1958 = vpop.f32.mrf.mxu0
      %v1959 = vadd.f32 0.0, %v1958
      %1960 = vmatmul.f32.gmra.mxu0 %v1822
      %v1961 = vpop.f32.mrf.mxu0
      %v1962 = vadd.f32 0.0, %v1961
      %1963 = vmatmul.f32.gmra.mxu0 %v1825
      %v1964 = vpop.f32.mrf.mxu0
      %v1965 = vadd.f32 0.0, %v1964
      %1966 = vmatmul.f32.gmra.mxu0 %v1828
      %v1967 = vpop.f32.mrf.mxu0
      %v1968 = vadd.f32 0.0, %v1967
      %1969 = vmatmul.f32.gmra.mxu0 %v1831
      %v1970 = vpop.f32.mrf.mxu0
      %v1971 = vadd.f32 0.0, %v1970
      %1972 = vmatmul.f32.gmra.mxu0 %v1834
      %v1973 = vpop.f32.mrf.mxu0
      %v1974 = vadd.f32 0.0, %v1973
      %1975 = vmatmul.f32.gmra.mxu0 %v1837
      %v1976 = vpop.f32.mrf.mxu0
      %v1977 = vadd.f32 0.0, %v1976
      %1978 = vmatmul.f32.gmra.mxu0 %v1840
      %v1979 = vpop.f32.mrf.mxu0
      %v1980 = vadd.f32 0.0, %v1979
      %1981 = vmatmul.f32.gmra.mxu0 %v1843
      %v1982 = vpop.f32.mrf.mxu0
      %v1983 = vadd.f32 0.0, %v1982
      %1984 = vmatmul.f32.gmra.mxu0 %v1846
      %v1985 = vpop.f32.mrf.mxu0
      %v1986 = vadd.f32 0.0, %v1985
      %1987 = vmatmul.f32.gmra.mxu0 %v1849
      %v1988 = vpop.f32.mrf.mxu0
      %v1989 = vadd.f32 0.0, %v1988
      %1990 = vmatmul.f32.gmra.mxu0 %v1852
      %v1991 = vpop.f32.mrf.mxu0
      %v1992 = vadd.f32 0.0, %v1991
      %1993 = vmatmul.f32.gmra.mxu0 %v1855
      %v1994 = vpop.f32.mrf.mxu0
      %v1995 = vadd.f32 0.0, %v1994
      %1996 = vmatmul.f32.gmra.mxu0 %v1858
      %v1997 = vpop.f32.mrf.mxu0
      %v1998 = vadd.f32 0.0, %v1997
      %1999 = vdwg.mxu0
      %v2000 = vadd.f32 %v1529, %v1878
      %v2001 = vadd.f32 %v1532, %v1881
      %v2002 = vadd.f32 %v1535, %v1884
      %v2003 = vadd.f32 %v1538, %v1887
      %v2004 = vadd.f32 %v1541, %v1890
      %v2005 = vadd.f32 %v1544, %v1893
      %v2006 = vadd.f32 %v1547, %v1896
      %v2007 = vadd.f32 %v1550, %v1899
      %v2008 = vadd.f32 %v1553, %v1902
      %v2009 = vadd.f32 %v1556, %v1905
      %v2010 = vadd.f32 %v1559, %v1908
      %v2011 = vadd.f32 %v1562, %v1911
      %v2012 = vadd.f32 %v1565, %v1914
      %v2013 = vadd.f32 %v1568, %v1917
      %v2014 = vadd.f32 %v1571, %v1920
      %v2015 = vadd.f32 %v1574, %v1923
      %v2016 = vadd.f32 %v1577, %v1926
      %v2017 = vadd.f32 %v1580, %v1929
      %v2018 = vadd.f32 %v1583, %v1932
      %v2019 = vadd.f32 %v1586, %v1935
      %v2020 = vadd.f32 %v1589, %v1938
      %v2021 = vadd.f32 %v1592, %v1941
      %v2022 = vadd.f32 %v1595, %v1944
      %v2023 = vadd.f32 %v1598, %v1947
      %v2024 = vadd.f32 %v1601, %v1950
      %v2025 = vadd.f32 %v1604, %v1953
      %v2026 = vadd.f32 %v1607, %v1956
      %v2027 = vadd.f32 %v1610, %v1959
      %v2028 = vadd.f32 %v1613, %v1962
      %v2029 = vadd.f32 %v1616, %v1965
      %v2030 = vadd.f32 %v1619, %v1968
      %v2031 = vadd.f32 %v1622, %v1971
      %v2032 = vadd.f32 %v1625, %v1974
      %v2033 = vadd.f32 %v1628, %v1977
      %v2034 = vadd.f32 %v1631, %v1980
      %v2035 = vadd.f32 %v1634, %v1983
      %v2036 = vadd.f32 %v1637, %v1986
      %v2037 = vadd.f32 %v1640, %v1989
      %v2038 = vadd.f32 %v1643, %v1992
      %v2039 = vadd.f32 %v1646, %v1995
      %v2040 = vadd.f32 %v1649, %v1998
      %s2041 = scalar_lea.vmem %s4, 48
      %v2042 = vld [vmem:[%s2041] sm:$0xff]
      %v2043 = vld [vmem:[%s2041 + $0x8] sm:$0xff]
      %2044 = vmatpush.msra.mxu0 0.0
      %2045 = vmatpush.msra.mxu0 0.0
      %2046 = vmatpush.msra.mxu0 0.0
      %2047 = vmatpush.msra.mxu0 0.0
      %2048 = vmatpush.msra.mxu0 0.0
      %2049 = vmatpush.msra.mxu0 0.0
      %2050 = vmatpush.msra.mxu0 0.0
      %2051 = vmatpush.msra.mxu0 0.0
      %2052 = vmatpush.msra.mxu0 0.0
      %2053 = vmatpush.msra.mxu0 0.0
      %2054 = vmatpush.msra.mxu0 0.0
      %2055 = vmatpush.msra.mxu0 0.0
      %2056 = vmatpush.msra.mxu0 0.0
      %2057 = vmatpush.msra.mxu0 0.0
      %2058 = vmatpush.msra.mxu0 %v2043
      %2059 = vmatpush.msra.mxu0 %v2042
      %2060 = vmatmul.f32.gmra.mxu0 %v1744
      %v2061 = vpop.f32.mrf.mxu0
      %v2062 = vadd.f32 0.0, %v2061
      %2063 = vmatmul.f32.gmra.mxu0 %v1747
      %v2064 = vpop.f32.mrf.mxu0
      %v2065 = vadd.f32 0.0, %v2064
      %2066 = vmatmul.f32.gmra.mxu0 %v1750
      %v2067 = vpop.f32.mrf.mxu0
      %v2068 = vadd.f32 0.0, %v2067
      %2069 = vmatmul.f32.gmra.mxu0 %v1753
      %v2070 = vpop.f32.mrf.mxu0
      %v2071 = vadd.f32 0.0, %v2070
      %2072 = vmatmul.f32.gmra.mxu0 %v1756
      %v2073 = vpop.f32.mrf.mxu0
      %v2074 = vadd.f32 0.0, %v2073
      %2075 = vmatmul.f32.gmra.mxu0 %v1759
      %v2076 = vpop.f32.mrf.mxu0
      %v2077 = vadd.f32 0.0, %v2076
      %2078 = vmatmul.f32.gmra.mxu0 %v1762
      %v2079 = vpop.f32.mrf.mxu0
      %v2080 = vadd.f32 0.0, %v2079
      %2081 = vmatmul.f32.gmra.mxu0 %v1765
      %v2082 = vpop.f32.mrf.mxu0
      %v2083 = vadd.f32 0.0, %v2082
      %2084 = vmatmul.f32.gmra.mxu0 %v1768
      %v2085 = vpop.f32.mrf.mxu0
      %v2086 = vadd.f32 0.0, %v2085
      %2087 = vmatmul.f32.gmra.mxu0 %v1771
      %v2088 = vpop.f32.mrf.mxu0
      %v2089 = vadd.f32 0.0, %v2088
      %2090 = vmatmul.f32.gmra.mxu0 %v1774
      %v2091 = vpop.f32.mrf.mxu0
      %v2092 = vadd.f32 0.0, %v2091
      %2093 = vmatmul.f32.gmra.mxu0 %v1777
      %v2094 = vpop.f32.mrf.mxu0
      %v2095 = vadd.f32 0.0, %v2094
      %2096 = vmatmul.f32.gmra.mxu0 %v1780
      %v2097 = vpop.f32.mrf.mxu0
      %v2098 = vadd.f32 0.0, %v2097
      %2099 = vmatmul.f32.gmra.mxu0 %v1783
      %v2100 = vpop.f32.mrf.mxu0
      %v2101 = vadd.f32 0.0, %v2100
      %2102 = vmatmul.f32.gmra.mxu0 %v1786
      %v2103 = vpop.f32.mrf.mxu0
      %v2104 = vadd.f32 0.0, %v2103
      %2105 = vmatmul.f32.gmra.mxu0 %v1789
      %v2106 = vpop.f32.mrf.mxu0
      %v2107 = vadd.f32 0.0, %v2106
      %2108 = vmatmul.f32.gmra.mxu0 %v1792
      %v2109 = vpop.f32.mrf.mxu0
      %v2110 = vadd.f32 0.0, %v2109
      %2111 = vmatmul.f32.gmra.mxu0 %v1795
      %v2112 = vpop.f32.mrf.mxu0
      %v2113 = vadd.f32 0.0, %v2112
      %2114 = vmatmul.f32.gmra.mxu0 %v1798
      %v2115 = vpop.f32.mrf.mxu0
      %v2116 = vadd.f32 0.0, %v2115
      %2117 = vmatmul.f32.gmra.mxu0 %v1801
      %v2118 = vpop.f32.mrf.mxu0
      %v2119 = vadd.f32 0.0, %v2118
      %2120 = vmatmul.f32.gmra.mxu0 %v1804
      %v2121 = vpop.f32.mrf.mxu0
      %v2122 = vadd.f32 0.0, %v2121
      %2123 = vmatmul.f32.gmra.mxu0 %v1807
      %v2124 = vpop.f32.mrf.mxu0
      %v2125 = vadd.f32 0.0, %v2124
      %2126 = vmatmul.f32.gmra.mxu0 %v1810
      %v2127 = vpop.f32.mrf.mxu0
      %v2128 = vadd.f32 0.0, %v2127
      %2129 = vmatmul.f32.gmra.mxu0 %v1813
      %v2130 = vpop.f32.mrf.mxu0
      %v2131 = vadd.f32 0.0, %v2130
      %2132 = vmatmul.f32.gmra.mxu0 %v1816
      %v2133 = vpop.f32.mrf.mxu0
      %v2134 = vadd.f32 0.0, %v2133
      %2135 = vmatmul.f32.gmra.mxu0 %v1819
      %v2136 = vpop.f32.mrf.mxu0
      %v2137 = vadd.f32 0.0, %v2136
      %2138 = vmatmul.f32.gmra.mxu0 %v1822
      %v2139 = vpop.f32.mrf.mxu0
      %v2140 = vadd.f32 0.0, %v2139
      %2141 = vmatmul.f32.gmra.mxu0 %v1825
      %v2142 = vpop.f32.mrf.mxu0
      %v2143 = vadd.f32 0.0, %v2142
      %2144 = vmatmul.f32.gmra.mxu0 %v1828
      %v2145 = vpop.f32.mrf.mxu0
      %v2146 = vadd.f32 0.0, %v2145
      %2147 = vmatmul.f32.gmra.mxu0 %v1831
      %v2148 = vpop.f32.mrf.mxu0
      %v2149 = vadd.f32 0.0, %v2148
      %2150 = vmatmul.f32.gmra.mxu0 %v1834
      %v2151 = vpop.f32.mrf.mxu0
      %v2152 = vadd.f32 0.0, %v2151
      %2153 = vmatmul.f32.gmra.mxu0 %v1837
      %v2154 = vpop.f32.mrf.mxu0
      %v2155 = vadd.f32 0.0, %v2154
      %2156 = vmatmul.f32.gmra.mxu0 %v1840
      %v2157 = vpop.f32.mrf.mxu0
      %v2158 = vadd.f32 0.0, %v2157
      %2159 = vmatmul.f32.gmra.mxu0 %v1843
      %v2160 = vpop.f32.mrf.mxu0
      %v2161 = vadd.f32 0.0, %v2160
      %2162 = vmatmul.f32.gmra.mxu0 %v1846
      %v2163 = vpop.f32.mrf.mxu0
      %v2164 = vadd.f32 0.0, %v2163
      %2165 = vmatmul.f32.gmra.mxu0 %v1849
      %v2166 = vpop.f32.mrf.mxu0
      %v2167 = vadd.f32 0.0, %v2166
      %2168 = vmatmul.f32.gmra.mxu0 %v1852
      %v2169 = vpop.f32.mrf.mxu0
      %v2170 = vadd.f32 0.0, %v2169
      %2171 = vmatmul.f32.gmra.mxu0 %v1855
      %v2172 = vpop.f32.mrf.mxu0
      %v2173 = vadd.f32 0.0, %v2172
      %2174 = vmatmul.f32.gmra.mxu0 %v1858
      %v2175 = vpop.f32.mrf.mxu0
      %v2176 = vadd.f32 0.0, %v2175
      %2177 = vmatmul.f32.gmra.mxu0 %v1738
      %v2178 = vpop.f32.mrf.mxu0
      %v2179 = vadd.f32 0.0, %v2178
      %2180 = vmatmul.f32.gmra.mxu0 %v1741
      %v2181 = vpop.f32.mrf.mxu0
      %v2182 = vadd.f32 0.0, %v2181
      %2183 = vdwg.mxu0
      %v2184 = vadd.f32 %v2000, %v2062
      %v2185 = vadd.f32 %v2001, %v2065
      %v2186 = vadd.f32 %v2002, %v2068
      %v2187 = vadd.f32 %v2003, %v2071
      %v2188 = vadd.f32 %v2004, %v2074
      %v2189 = vadd.f32 %v2005, %v2077
      %v2190 = vadd.f32 %v2006, %v2080
      %v2191 = vadd.f32 %v2007, %v2083
      %v2192 = vadd.f32 %v2008, %v2086
      %v2193 = vadd.f32 %v2009, %v2089
      %v2194 = vadd.f32 %v2010, %v2092
      %v2195 = vadd.f32 %v2011, %v2095
      %v2196 = vadd.f32 %v2012, %v2098
      %v2197 = vadd.f32 %v2013, %v2101
      %v2198 = vadd.f32 %v2014, %v2104
      %v2199 = vadd.f32 %v2015, %v2107
      %v2200 = vadd.f32 %v2016, %v2110
      %v2201 = vadd.f32 %v2017, %v2113
      %v2202 = vadd.f32 %v2018, %v2116
      %v2203 = vadd.f32 %v2019, %v2119
      %v2204 = vadd.f32 %v2020, %v2122
      %v2205 = vadd.f32 %v2021, %v2125
      %v2206 = vadd.f32 %v2022, %v2128
      %v2207 = vadd.f32 %v2023, %v2131
      %v2208 = vadd.f32 %v2024, %v2134
      %v2209 = vadd.f32 %v2025, %v2137
      %v2210 = vadd.f32 %v2026, %v2140
      %v2211 = vadd.f32 %v2027, %v2143
      %v2212 = vadd.f32 %v2028, %v2146
      %v2213 = vadd.f32 %v2029, %v2149
      %v2214 = vadd.f32 %v2030, %v2152
      %v2215 = vadd.f32 %v2031, %v2155
      %v2216 = vadd.f32 %v2032, %v2158
      %v2217 = vadd.f32 %v2033, %v2161
      %v2218 = vadd.f32 %v2034, %v2164
      %v2219 = vadd.f32 %v2035, %v2167
      %v2220 = vadd.f32 %v2036, %v2170
      %v2221 = vadd.f32 %v2037, %v2173
      %v2222 = vadd.f32 %v2038, %v2176
      %v2223 = vadd.f32 %v2039, %v2179
      %v2224 = vadd.f32 %v2040, %v2182
      %s2225 = scalar_lea.vmem %s4, 64
      %v2226 = vld [vmem:[%s2225] sm:$0xff]
      %v2227 = vld [vmem:[%s2225 + $0x8] sm:$0xff]
      %v2229 = vsel %vm1124, %v910, 0
      %v2232 = vsel %vm1124, %v911, 0
      %v2235 = vsel %vm1124, %v912, 0
      %v2238 = vsel %vm1124, %v913, 0
      %v2241 = vsel %vm1124, %v914, 0
      %v2244 = vsel %vm1124, %v915, 0
      %v2247 = vsel %vm1124, %v916, 0
      %v2250 = vsel %vm1124, %v917, 0
      %v2253 = vsel %vm1124, %v918, 0
      %v2256 = vsel %vm1124, %v919, 0
      %v2259 = vsel %vm1124, %v920, 0
      %v2262 = vsel %vm1124, %v921, 0
      %v2265 = vsel %vm1124, %v922, 0
      %v2268 = vsel %vm1124, %v923, 0
      %v2271 = vsel %vm1124, %v924, 0
      %v2274 = vsel %vm1124, %v925, 0
      %v2277 = vsel %vm1124, %v926, 0
      %v2280 = vsel %vm1124, %v927, 0
      %v2283 = vsel %vm1124, %v928, 0
      %v2286 = vsel %vm1124, %v929, 0
      %v2289 = vsel %vm1124, %v930, 0
      %v2292 = vsel %vm1124, %v931, 0
      %v2295 = vsel %vm1124, %v932, 0
      %v2298 = vsel %vm1124, %v933, 0
      %v2301 = vsel %vm1124, %v934, 0
      %v2304 = vsel %vm1124, %v935, 0
      %v2307 = vsel %vm1124, %v936, 0
      %v2310 = vsel %vm1124, %v937, 0
      %v2313 = vsel %vm1124, %v938, 0
      %v2316 = vsel %vm1124, %v939, 0
      %v2319 = vsel %vm1124, %v940, 0
      %v2322 = vsel %vm1124, %v941, 0
      %v2325 = vsel %vm1124, %v942, 0
      %v2328 = vsel %vm1124, %v943, 0
      %v2331 = vsel %vm1124, %v944, 0
      %v2334 = vsel %vm1124, %v945, 0
      %v2337 = vsel %vm1124, %v946, 0
      %v2340 = vsel %vm1124, %v947, 0
      %v2343 = vsel %vm1124, %v948, 0
      %v2346 = vsel %vm1124, %v949, 0
      %v2349 = vsel %vm1124, %v950, 0
      %2351 = vmatpush.msra.mxu0 0.0
      %2352 = vmatpush.msra.mxu0 0.0
      %2353 = vmatpush.msra.mxu0 0.0
      %2354 = vmatpush.msra.mxu0 0.0
      %2355 = vmatpush.msra.mxu0 0.0
      %2356 = vmatpush.msra.mxu0 0.0
      %2357 = vmatpush.msra.mxu0 0.0
      %2358 = vmatpush.msra.mxu0 0.0
      %2359 = vmatpush.msra.mxu0 0.0
      %2360 = vmatpush.msra.mxu0 0.0
      %2361 = vmatpush.msra.mxu0 0.0
      %2362 = vmatpush.msra.mxu0 0.0
      %2363 = vmatpush.msra.mxu0 0.0
      %2364 = vmatpush.msra.mxu0 0.0
      %2365 = vmatpush.msra.mxu0 %v2227
      %2366 = vmatpush.msra.mxu0 %v2226
      %2367 = vmatmul.f32.gmra.mxu0 %v2229
      %v2368 = vpop.f32.mrf.mxu0
      %v2369 = vadd.f32 0.0, %v2368
      %2370 = vmatmul.f32.gmra.mxu0 %v2232
      %v2371 = vpop.f32.mrf.mxu0
      %v2372 = vadd.f32 0.0, %v2371
      %2373 = vmatmul.f32.gmra.mxu0 %v2235
      %v2374 = vpop.f32.mrf.mxu0
      %v2375 = vadd.f32 0.0, %v2374
      %2376 = vmatmul.f32.gmra.mxu0 %v2238
      %v2377 = vpop.f32.mrf.mxu0
      %v2378 = vadd.f32 0.0, %v2377
      %2379 = vmatmul.f32.gmra.mxu0 %v2241
      %v2380 = vpop.f32.mrf.mxu0
      %v2381 = vadd.f32 0.0, %v2380
      %2382 = vmatmul.f32.gmra.mxu0 %v2244
      %v2383 = vpop.f32.mrf.mxu0
      %v2384 = vadd.f32 0.0, %v2383
      %2385 = vmatmul.f32.gmra.mxu0 %v2247
      %v2386 = vpop.f32.mrf.mxu0
      %v2387 = vadd.f32 0.0, %v2386
      %2388 = vmatmul.f32.gmra.mxu0 %v2250
      %v2389 = vpop.f32.mrf.mxu0
      %v2390 = vadd.f32 0.0, %v2389
      %2391 = vmatmul.f32.gmra.mxu0 %v2253
      %v2392 = vpop.f32.mrf.mxu0
      %v2393 = vadd.f32 0.0, %v2392
      %2394 = vmatmul.f32.gmra.mxu0 %v2256
      %v2395 = vpop.f32.mrf.mxu0
      %v2396 = vadd.f32 0.0, %v2395
      %2397 = vmatmul.f32.gmra.mxu0 %v2259
      %v2398 = vpop.f32.mrf.mxu0
      %v2399 = vadd.f32 0.0, %v2398
      %2400 = vmatmul.f32.gmra.mxu0 %v2262
      %v2401 = vpop.f32.mrf.mxu0
      %v2402 = vadd.f32 0.0, %v2401
      %2403 = vmatmul.f32.gmra.mxu0 %v2265
      %v2404 = vpop.f32.mrf.mxu0
      %v2405 = vadd.f32 0.0, %v2404
      %2406 = vmatmul.f32.gmra.mxu0 %v2268
      %v2407 = vpop.f32.mrf.mxu0
      %v2408 = vadd.f32 0.0, %v2407
      %2409 = vmatmul.f32.gmra.mxu0 %v2271
      %v2410 = vpop.f32.mrf.mxu0
      %v2411 = vadd.f32 0.0, %v2410
      %2412 = vmatmul.f32.gmra.mxu0 %v2274
      %v2413 = vpop.f32.mrf.mxu0
      %v2414 = vadd.f32 0.0, %v2413
      %2415 = vmatmul.f32.gmra.mxu0 %v2277
      %v2416 = vpop.f32.mrf.mxu0
      %v2417 = vadd.f32 0.0, %v2416
      %2418 = vmatmul.f32.gmra.mxu0 %v2280
      %v2419 = vpop.f32.mrf.mxu0
      %v2420 = vadd.f32 0.0, %v2419
      %2421 = vmatmul.f32.gmra.mxu0 %v2283
      %v2422 = vpop.f32.mrf.mxu0
      %v2423 = vadd.f32 0.0, %v2422
      %2424 = vmatmul.f32.gmra.mxu0 %v2286
      %v2425 = vpop.f32.mrf.mxu0
      %v2426 = vadd.f32 0.0, %v2425
      %2427 = vmatmul.f32.gmra.mxu0 %v2289
      %v2428 = vpop.f32.mrf.mxu0
      %v2429 = vadd.f32 0.0, %v2428
      %2430 = vmatmul.f32.gmra.mxu0 %v2292
      %v2431 = vpop.f32.mrf.mxu0
      %v2432 = vadd.f32 0.0, %v2431
      %2433 = vmatmul.f32.gmra.mxu0 %v2295
      %v2434 = vpop.f32.mrf.mxu0
      %v2435 = vadd.f32 0.0, %v2434
      %2436 = vmatmul.f32.gmra.mxu0 %v2298
      %v2437 = vpop.f32.mrf.mxu0
      %v2438 = vadd.f32 0.0, %v2437
      %2439 = vmatmul.f32.gmra.mxu0 %v2301
      %v2440 = vpop.f32.mrf.mxu0
      %v2441 = vadd.f32 0.0, %v2440
      %2442 = vmatmul.f32.gmra.mxu0 %v2304
      %v2443 = vpop.f32.mrf.mxu0
      %v2444 = vadd.f32 0.0, %v2443
      %2445 = vmatmul.f32.gmra.mxu0 %v2307
      %v2446 = vpop.f32.mrf.mxu0
      %v2447 = vadd.f32 0.0, %v2446
      %2448 = vmatmul.f32.gmra.mxu0 %v2310
      %v2449 = vpop.f32.mrf.mxu0
      %v2450 = vadd.f32 0.0, %v2449
      %2451 = vmatmul.f32.gmra.mxu0 %v2313
      %v2452 = vpop.f32.mrf.mxu0
      %v2453 = vadd.f32 0.0, %v2452
      %2454 = vmatmul.f32.gmra.mxu0 %v2316
      %v2455 = vpop.f32.mrf.mxu0
      %v2456 = vadd.f32 0.0, %v2455
      %2457 = vmatmul.f32.gmra.mxu0 %v2319
      %v2458 = vpop.f32.mrf.mxu0
      %v2459 = vadd.f32 0.0, %v2458
      %2460 = vmatmul.f32.gmra.mxu0 %v2322
      %v2461 = vpop.f32.mrf.mxu0
      %v2462 = vadd.f32 0.0, %v2461
      %2463 = vmatmul.f32.gmra.mxu0 %v2325
      %v2464 = vpop.f32.mrf.mxu0
      %v2465 = vadd.f32 0.0, %v2464
      %2466 = vmatmul.f32.gmra.mxu0 %v2328
      %v2467 = vpop.f32.mrf.mxu0
      %v2468 = vadd.f32 0.0, %v2467
      %2469 = vmatmul.f32.gmra.mxu0 %v2331
      %v2470 = vpop.f32.mrf.mxu0
      %v2471 = vadd.f32 0.0, %v2470
      %2472 = vmatmul.f32.gmra.mxu0 %v2334
      %v2473 = vpop.f32.mrf.mxu0
      %v2474 = vadd.f32 0.0, %v2473
      %2475 = vmatmul.f32.gmra.mxu0 %v2337
      %v2476 = vpop.f32.mrf.mxu0
      %v2477 = vadd.f32 0.0, %v2476
      %2478 = vmatmul.f32.gmra.mxu0 %v2340
      %v2479 = vpop.f32.mrf.mxu0
      %v2480 = vadd.f32 0.0, %v2479
      %2481 = vmatmul.f32.gmra.mxu0 %v2343
      %v2482 = vpop.f32.mrf.mxu0
      %v2483 = vadd.f32 0.0, %v2482
      %2484 = vmatmul.f32.gmra.mxu0 %v2346
      %v2485 = vpop.f32.mrf.mxu0
      %v2486 = vadd.f32 0.0, %v2485
      %2487 = vmatmul.f32.gmra.mxu0 %v2349
      %v2488 = vpop.f32.mrf.mxu0
      %v2489 = vadd.f32 0.0, %v2488
      %2490 = vdwg.mxu0
      %v2491 = vadd.f32 %v2184, %v2369
      %v2492 = vadd.f32 %v2185, %v2372
      %v2493 = vadd.f32 %v2186, %v2375
      %v2494 = vadd.f32 %v2187, %v2378
      %v2495 = vadd.f32 %v2188, %v2381
      %v2496 = vadd.f32 %v2189, %v2384
      %v2497 = vadd.f32 %v2190, %v2387
      %v2498 = vadd.f32 %v2191, %v2390
      %v2499 = vadd.f32 %v2192, %v2393
      %v2500 = vadd.f32 %v2193, %v2396
      %v2501 = vadd.f32 %v2194, %v2399
      %v2502 = vadd.f32 %v2195, %v2402
      %v2503 = vadd.f32 %v2196, %v2405
      %v2504 = vadd.f32 %v2197, %v2408
      %v2505 = vadd.f32 %v2198, %v2411
      %v2506 = vadd.f32 %v2199, %v2414
      %v2507 = vadd.f32 %v2200, %v2417
      %v2508 = vadd.f32 %v2201, %v2420
      %v2509 = vadd.f32 %v2202, %v2423
      %v2510 = vadd.f32 %v2203, %v2426
      %v2511 = vadd.f32 %v2204, %v2429
      %v2512 = vadd.f32 %v2205, %v2432
      %v2513 = vadd.f32 %v2206, %v2435
      %v2514 = vadd.f32 %v2207, %v2438
      %v2515 = vadd.f32 %v2208, %v2441
      %v2516 = vadd.f32 %v2209, %v2444
      %v2517 = vadd.f32 %v2210, %v2447
      %v2518 = vadd.f32 %v2211, %v2450
      %v2519 = vadd.f32 %v2212, %v2453
      %v2520 = vadd.f32 %v2213, %v2456
      %v2521 = vadd.f32 %v2214, %v2459
      %v2522 = vadd.f32 %v2215, %v2462
      %v2523 = vadd.f32 %v2216, %v2465
      %v2524 = vadd.f32 %v2217, %v2468
      %v2525 = vadd.f32 %v2218, %v2471
      %v2526 = vadd.f32 %v2219, %v2474
      %v2527 = vadd.f32 %v2220, %v2477
      %v2528 = vadd.f32 %v2221, %v2480
      %v2529 = vadd.f32 %v2222, %v2483
      %v2530 = vadd.f32 %v2223, %v2486
      %v2531 = vadd.f32 %v2224, %v2489
      %v2532 = vrot.slane %v910, 1
      %v2533 = vrot.slane %v911, 1
      %v2534 = vrot.slane %v912, 1
      %v2535 = vrot.slane %v913, 1
      %v2536 = vrot.slane %v914, 1
      %v2537 = vrot.slane %v915, 1
      %v2538 = vrot.slane %v916, 1
      %v2539 = vrot.slane %v917, 1
      %v2540 = vrot.slane %v918, 1
      %v2541 = vrot.slane %v919, 1
      %v2542 = vrot.slane %v920, 1
      %v2543 = vrot.slane %v921, 1
      %v2544 = vrot.slane %v922, 1
      %v2545 = vrot.slane %v923, 1
      %v2546 = vrot.slane %v924, 1
      %v2547 = vrot.slane %v925, 1
      %v2548 = vrot.slane %v926, 1
      %v2549 = vrot.slane %v927, 1
      %v2550 = vrot.slane %v928, 1
      %v2551 = vrot.slane %v929, 1
      %v2552 = vrot.slane %v930, 1
      %v2553 = vrot.slane %v931, 1
      %v2554 = vrot.slane %v932, 1
      %v2555 = vrot.slane %v933, 1
      %v2556 = vrot.slane %v934, 1
      %v2557 = vrot.slane %v935, 1
      %v2558 = vrot.slane %v936, 1
      %v2559 = vrot.slane %v937, 1
      %v2560 = vrot.slane %v938, 1
      %v2561 = vrot.slane %v939, 1
      %v2562 = vrot.slane %v940, 1
      %v2563 = vrot.slane %v941, 1
      %v2564 = vrot.slane %v942, 1
      %v2565 = vrot.slane %v943, 1
      %v2566 = vrot.slane %v944, 1
      %v2567 = vrot.slane %v945, 1
      %v2568 = vrot.slane %v946, 1
      %v2569 = vrot.slane %v947, 1
      %v2570 = vrot.slane %v948, 1
      %v2571 = vrot.slane %v949, 1
      %v2572 = vrot.slane %v950, 1
      %vm2573 = vcmp.lt.s32.totalorder %v993, 7
      %v2574 = vsel %vm2573, %v2571, %v2572
      %v2575 = vsel %vm2573, %v2570, %v2571
      %v2576 = vsel %vm2573, %v2569, %v2570
      %v2577 = vsel %vm2573, %v2568, %v2569
      %v2578 = vsel %vm2573, %v2567, %v2568
      %v2579 = vsel %vm2573, %v2566, %v2567
      %v2580 = vsel %vm2573, %v2565, %v2566
      %v2581 = vsel %vm2573, %v2564, %v2565
      %v2582 = vsel %vm2573, %v2563, %v2564
      %v2583 = vsel %vm2573, %v2562, %v2563
      %v2584 = vsel %vm2573, %v2561, %v2562
      %v2585 = vsel %vm2573, %v2560, %v2561
      %v2586 = vsel %vm2573, %v2559, %v2560
      %v2587 = vsel %vm2573, %v2558, %v2559
      %v2588 = vsel %vm2573, %v2557, %v2558
      %v2589 = vsel %vm2573, %v2556, %v2557
      %v2590 = vsel %vm2573, %v2555, %v2556
      %v2591 = vsel %vm2573, %v2554, %v2555
      %v2592 = vsel %vm2573, %v2553, %v2554
      %v2593 = vsel %vm2573, %v2552, %v2553
      %v2594 = vsel %vm2573, %v2551, %v2552
      %v2595 = vsel %vm2573, %v2550, %v2551
      %v2596 = vsel %vm2573, %v2549, %v2550
      %v2597 = vsel %vm2573, %v2548, %v2549
      %v2598 = vsel %vm2573, %v2547, %v2548
      %v2599 = vsel %vm2573, %v2546, %v2547
      %v2600 = vsel %vm2573, %v2545, %v2546
      %v2601 = vsel %vm2573, %v2544, %v2545
      %v2602 = vsel %vm2573, %v2543, %v2544
      %v2603 = vsel %vm2573, %v2542, %v2543
      %v2604 = vsel %vm2573, %v2541, %v2542
      %v2605 = vsel %vm2573, %v2540, %v2541
      %v2606 = vsel %vm2573, %v2539, %v2540
      %v2607 = vsel %vm2573, %v2538, %v2539
      %v2608 = vsel %vm2573, %v2537, %v2538
      %v2609 = vsel %vm2573, %v2536, %v2537
      %v2610 = vsel %vm2573, %v2535, %v2536
      %v2611 = vsel %vm2573, %v2534, %v2535
      %v2612 = vsel %vm2573, %v2533, %v2534
      %v2613 = vsel %vm2573, %v2532, %v2533
      %v2614 = vsel %vm2573, %v2572, %v2532
      %s2615 = scalar_lea.vmem %s4, 80
      %v2616 = vld [vmem:[%s2615] sm:$0xff]
      %v2617 = vld [vmem:[%s2615 + $0x8] sm:$0xff]
      %v2619 = vsel %vm1124, %v2613, 0
      %v2622 = vsel %vm1124, %v2612, 0
      %v2625 = vsel %vm1124, %v2611, 0
      %v2628 = vsel %vm1124, %v2610, 0
      %v2631 = vsel %vm1124, %v2609, 0
      %v2634 = vsel %vm1124, %v2608, 0
      %v2637 = vsel %vm1124, %v2607, 0
      %v2640 = vsel %vm1124, %v2606, 0
      %v2643 = vsel %vm1124, %v2605, 0
      %v2646 = vsel %vm1124, %v2604, 0
      %v2649 = vsel %vm1124, %v2603, 0
      %v2652 = vsel %vm1124, %v2602, 0
      %v2655 = vsel %vm1124, %v2601, 0
      %v2658 = vsel %vm1124, %v2600, 0
      %v2661 = vsel %vm1124, %v2599, 0
      %v2664 = vsel %vm1124, %v2598, 0
      %v2667 = vsel %vm1124, %v2597, 0
      %v2670 = vsel %vm1124, %v2596, 0
      %v2673 = vsel %vm1124, %v2595, 0
      %v2676 = vsel %vm1124, %v2594, 0
      %v2679 = vsel %vm1124, %v2593, 0
      %v2682 = vsel %vm1124, %v2592, 0
      %v2685 = vsel %vm1124, %v2591, 0
      %v2688 = vsel %vm1124, %v2590, 0
      %v2691 = vsel %vm1124, %v2589, 0
      %v2694 = vsel %vm1124, %v2588, 0
      %v2697 = vsel %vm1124, %v2587, 0
      %v2700 = vsel %vm1124, %v2586, 0
      %v2703 = vsel %vm1124, %v2585, 0
      %v2706 = vsel %vm1124, %v2584, 0
      %v2709 = vsel %vm1124, %v2583, 0
      %v2712 = vsel %vm1124, %v2582, 0
      %v2715 = vsel %vm1124, %v2581, 0
      %v2718 = vsel %vm1124, %v2580, 0
      %v2721 = vsel %vm1124, %v2579, 0
      %v2724 = vsel %vm1124, %v2578, 0
      %v2727 = vsel %vm1124, %v2577, 0
      %v2730 = vsel %vm1124, %v2576, 0
      %v2733 = vsel %vm1124, %v2575, 0
      %v2736 = vsel %vm1124, %v2574, 0
      %v2739 = vsel %vm1124, %v2614, 0
      %2741 = vmatpush.msra.mxu0 0.0
      %2742 = vmatpush.msra.mxu0 0.0
      %2743 = vmatpush.msra.mxu0 0.0
      %2744 = vmatpush.msra.mxu0 0.0
      %2745 = vmatpush.msra.mxu0 0.0
      %2746 = vmatpush.msra.mxu0 0.0
      %2747 = vmatpush.msra.mxu0 0.0
      %2748 = vmatpush.msra.mxu0 0.0
      %2749 = vmatpush.msra.mxu0 0.0
      %2750 = vmatpush.msra.mxu0 0.0
      %2751 = vmatpush.msra.mxu0 0.0
      %2752 = vmatpush.msra.mxu0 0.0
      %2753 = vmatpush.msra.mxu0 0.0
      %2754 = vmatpush.msra.mxu0 0.0
      %2755 = vmatpush.msra.mxu0 %v2617
      %2756 = vmatpush.msra.mxu0 %v2616
      %2757 = vmatmul.f32.gmra.mxu0 %v2619
      %v2758 = vpop.f32.mrf.mxu0
      %v2759 = vadd.f32 0.0, %v2758
      %2760 = vmatmul.f32.gmra.mxu0 %v2622
      %v2761 = vpop.f32.mrf.mxu0
      %v2762 = vadd.f32 0.0, %v2761
      %2763 = vmatmul.f32.gmra.mxu0 %v2625
      %v2764 = vpop.f32.mrf.mxu0
      %v2765 = vadd.f32 0.0, %v2764
      %2766 = vmatmul.f32.gmra.mxu0 %v2628
      %v2767 = vpop.f32.mrf.mxu0
      %v2768 = vadd.f32 0.0, %v2767
      %2769 = vmatmul.f32.gmra.mxu0 %v2631
      %v2770 = vpop.f32.mrf.mxu0
      %v2771 = vadd.f32 0.0, %v2770
      %2772 = vmatmul.f32.gmra.mxu0 %v2634
      %v2773 = vpop.f32.mrf.mxu0
      %v2774 = vadd.f32 0.0, %v2773
      %2775 = vmatmul.f32.gmra.mxu0 %v2637
      %v2776 = vpop.f32.mrf.mxu0
      %v2777 = vadd.f32 0.0, %v2776
      %2778 = vmatmul.f32.gmra.mxu0 %v2640
      %v2779 = vpop.f32.mrf.mxu0
      %v2780 = vadd.f32 0.0, %v2779
      %2781 = vmatmul.f32.gmra.mxu0 %v2643
      %v2782 = vpop.f32.mrf.mxu0
      %v2783 = vadd.f32 0.0, %v2782
      %2784 = vmatmul.f32.gmra.mxu0 %v2646
      %v2785 = vpop.f32.mrf.mxu0
      %v2786 = vadd.f32 0.0, %v2785
      %2787 = vmatmul.f32.gmra.mxu0 %v2649
      %v2788 = vpop.f32.mrf.mxu0
      %v2789 = vadd.f32 0.0, %v2788
      %2790 = vmatmul.f32.gmra.mxu0 %v2652
      %v2791 = vpop.f32.mrf.mxu0
      %v2792 = vadd.f32 0.0, %v2791
      %2793 = vmatmul.f32.gmra.mxu0 %v2655
      %v2794 = vpop.f32.mrf.mxu0
      %v2795 = vadd.f32 0.0, %v2794
      %2796 = vmatmul.f32.gmra.mxu0 %v2658
      %v2797 = vpop.f32.mrf.mxu0
      %v2798 = vadd.f32 0.0, %v2797
      %2799 = vmatmul.f32.gmra.mxu0 %v2661
      %v2800 = vpop.f32.mrf.mxu0
      %v2801 = vadd.f32 0.0, %v2800
      %2802 = vmatmul.f32.gmra.mxu0 %v2664
      %v2803 = vpop.f32.mrf.mxu0
      %v2804 = vadd.f32 0.0, %v2803
      %2805 = vmatmul.f32.gmra.mxu0 %v2667
      %v2806 = vpop.f32.mrf.mxu0
      %v2807 = vadd.f32 0.0, %v2806
      %2808 = vmatmul.f32.gmra.mxu0 %v2670
      %v2809 = vpop.f32.mrf.mxu0
      %v2810 = vadd.f32 0.0, %v2809
      %2811 = vmatmul.f32.gmra.mxu0 %v2673
      %v2812 = vpop.f32.mrf.mxu0
      %v2813 = vadd.f32 0.0, %v2812
      %2814 = vmatmul.f32.gmra.mxu0 %v2676
      %v2815 = vpop.f32.mrf.mxu0
      %v2816 = vadd.f32 0.0, %v2815
      %2817 = vmatmul.f32.gmra.mxu0 %v2679
      %v2818 = vpop.f32.mrf.mxu0
      %v2819 = vadd.f32 0.0, %v2818
      %2820 = vmatmul.f32.gmra.mxu0 %v2682
      %v2821 = vpop.f32.mrf.mxu0
      %v2822 = vadd.f32 0.0, %v2821
      %2823 = vmatmul.f32.gmra.mxu0 %v2685
      %v2824 = vpop.f32.mrf.mxu0
      %v2825 = vadd.f32 0.0, %v2824
      %2826 = vmatmul.f32.gmra.mxu0 %v2688
      %v2827 = vpop.f32.mrf.mxu0
      %v2828 = vadd.f32 0.0, %v2827
      %2829 = vmatmul.f32.gmra.mxu0 %v2691
      %v2830 = vpop.f32.mrf.mxu0
      %v2831 = vadd.f32 0.0, %v2830
      %2832 = vmatmul.f32.gmra.mxu0 %v2694
      %v2833 = vpop.f32.mrf.mxu0
      %v2834 = vadd.f32 0.0, %v2833
      %2835 = vmatmul.f32.gmra.mxu0 %v2697
      %v2836 = vpop.f32.mrf.mxu0
      %v2837 = vadd.f32 0.0, %v2836
      %2838 = vmatmul.f32.gmra.mxu0 %v2700
      %v2839 = vpop.f32.mrf.mxu0
      %v2840 = vadd.f32 0.0, %v2839
      %2841 = vmatmul.f32.gmra.mxu0 %v2703
      %v2842 = vpop.f32.mrf.mxu0
      %v2843 = vadd.f32 0.0, %v2842
      %2844 = vmatmul.f32.gmra.mxu0 %v2706
      %v2845 = vpop.f32.mrf.mxu0
      %v2846 = vadd.f32 0.0, %v2845
      %2847 = vmatmul.f32.gmra.mxu0 %v2709
      %v2848 = vpop.f32.mrf.mxu0
      %v2849 = vadd.f32 0.0, %v2848
      %2850 = vmatmul.f32.gmra.mxu0 %v2712
      %v2851 = vpop.f32.mrf.mxu0
      %v2852 = vadd.f32 0.0, %v2851
      %2853 = vmatmul.f32.gmra.mxu0 %v2715
      %v2854 = vpop.f32.mrf.mxu0
      %v2855 = vadd.f32 0.0, %v2854
      %2856 = vmatmul.f32.gmra.mxu0 %v2718
      %v2857 = vpop.f32.mrf.mxu0
      %v2858 = vadd.f32 0.0, %v2857
      %2859 = vmatmul.f32.gmra.mxu0 %v2721
      %v2860 = vpop.f32.mrf.mxu0
      %v2861 = vadd.f32 0.0, %v2860
      %2862 = vmatmul.f32.gmra.mxu0 %v2724
      %v2863 = vpop.f32.mrf.mxu0
      %v2864 = vadd.f32 0.0, %v2863
      %2865 = vmatmul.f32.gmra.mxu0 %v2727
      %v2866 = vpop.f32.mrf.mxu0
      %v2867 = vadd.f32 0.0, %v2866
      %2868 = vmatmul.f32.gmra.mxu0 %v2730
      %v2869 = vpop.f32.mrf.mxu0
      %v2870 = vadd.f32 0.0, %v2869
      %2871 = vmatmul.f32.gmra.mxu0 %v2733
      %v2872 = vpop.f32.mrf.mxu0
      %v2873 = vadd.f32 0.0, %v2872
      %2874 = vmatmul.f32.gmra.mxu0 %v2736
      %v2875 = vpop.f32.mrf.mxu0
      %v2876 = vadd.f32 0.0, %v2875
      %2877 = vmatmul.f32.gmra.mxu0 %v2739
      %v2878 = vpop.f32.mrf.mxu0
      %v2879 = vadd.f32 0.0, %v2878
      %2880 = vdwg.mxu0
      %v2881 = vadd.f32 %v2491, %v2759
      %v2882 = vadd.f32 %v2492, %v2762
      %v2883 = vadd.f32 %v2493, %v2765
      %v2884 = vadd.f32 %v2494, %v2768
      %v2885 = vadd.f32 %v2495, %v2771
      %v2886 = vadd.f32 %v2496, %v2774
      %v2887 = vadd.f32 %v2497, %v2777
      %v2888 = vadd.f32 %v2498, %v2780
      %v2889 = vadd.f32 %v2499, %v2783
      %v2890 = vadd.f32 %v2500, %v2786
      %v2891 = vadd.f32 %v2501, %v2789
      %v2892 = vadd.f32 %v2502, %v2792
      %v2893 = vadd.f32 %v2503, %v2795
      %v2894 = vadd.f32 %v2504, %v2798
      %v2895 = vadd.f32 %v2505, %v2801
      %v2896 = vadd.f32 %v2506, %v2804
      %v2897 = vadd.f32 %v2507, %v2807
      %v2898 = vadd.f32 %v2508, %v2810
      %v2899 = vadd.f32 %v2509, %v2813
      %v2900 = vadd.f32 %v2510, %v2816
      %v2901 = vadd.f32 %v2511, %v2819
      %v2902 = vadd.f32 %v2512, %v2822
      %v2903 = vadd.f32 %v2513, %v2825
      %v2904 = vadd.f32 %v2514, %v2828
      %v2905 = vadd.f32 %v2515, %v2831
      %v2906 = vadd.f32 %v2516, %v2834
      %v2907 = vadd.f32 %v2517, %v2837
      %v2908 = vadd.f32 %v2518, %v2840
      %v2909 = vadd.f32 %v2519, %v2843
      %v2910 = vadd.f32 %v2520, %v2846
      %v2911 = vadd.f32 %v2521, %v2849
      %v2912 = vadd.f32 %v2522, %v2852
      %v2913 = vadd.f32 %v2523, %v2855
      %v2914 = vadd.f32 %v2524, %v2858
      %v2915 = vadd.f32 %v2525, %v2861
      %v2916 = vadd.f32 %v2526, %v2864
      %v2917 = vadd.f32 %v2527, %v2867
      %v2918 = vadd.f32 %v2528, %v2870
      %v2919 = vadd.f32 %v2529, %v2873
      %v2920 = vadd.f32 %v2530, %v2876
      %v2921 = vadd.f32 %v2531, %v2879
      %s2922 = scalar_lea.vmem %s4, 96
      %v2923 = vld [vmem:[%s2922] sm:$0xff]
      %v2924 = vld [vmem:[%s2922 + $0x8] sm:$0xff]
      %2925 = vmatpush.msra.mxu0 0.0
      %2926 = vmatpush.msra.mxu0 0.0
      %2927 = vmatpush.msra.mxu0 0.0
      %2928 = vmatpush.msra.mxu0 0.0
      %2929 = vmatpush.msra.mxu0 0.0
      %2930 = vmatpush.msra.mxu0 0.0
      %2931 = vmatpush.msra.mxu0 0.0
      %2932 = vmatpush.msra.mxu0 0.0
      %2933 = vmatpush.msra.mxu0 0.0
      %2934 = vmatpush.msra.mxu0 0.0
      %2935 = vmatpush.msra.mxu0 0.0
      %2936 = vmatpush.msra.mxu0 0.0
      %2937 = vmatpush.msra.mxu0 0.0
      %2938 = vmatpush.msra.mxu0 0.0
      %2939 = vmatpush.msra.mxu0 %v2924
      %2940 = vmatpush.msra.mxu0 %v2923
      %2941 = vmatmul.f32.gmra.mxu0 %v2625
      %v2942 = vpop.f32.mrf.mxu0
      %v2943 = vadd.f32 0.0, %v2942
      %2944 = vmatmul.f32.gmra.mxu0 %v2628
      %v2945 = vpop.f32.mrf.mxu0
      %v2946 = vadd.f32 0.0, %v2945
      %2947 = vmatmul.f32.gmra.mxu0 %v2631
      %v2948 = vpop.f32.mrf.mxu0
      %v2949 = vadd.f32 0.0, %v2948
      %2950 = vmatmul.f32.gmra.mxu0 %v2634
      %v2951 = vpop.f32.mrf.mxu0
      %v2952 = vadd.f32 0.0, %v2951
      %2953 = vmatmul.f32.gmra.mxu0 %v2637
      %v2954 = vpop.f32.mrf.mxu0
      %v2955 = vadd.f32 0.0, %v2954
      %2956 = vmatmul.f32.gmra.mxu0 %v2640
      %v2957 = vpop.f32.mrf.mxu0
      %v2958 = vadd.f32 0.0, %v2957
      %2959 = vmatmul.f32.gmra.mxu0 %v2643
      %v2960 = vpop.f32.mrf.mxu0
      %v2961 = vadd.f32 0.0, %v2960
      %2962 = vmatmul.f32.gmra.mxu0 %v2646
      %v2963 = vpop.f32.mrf.mxu0
      %v2964 = vadd.f32 0.0, %v2963
      %2965 = vmatmul.f32.gmra.mxu0 %v2649
      %v2966 = vpop.f32.mrf.mxu0
      %v2967 = vadd.f32 0.0, %v2966
      %2968 = vmatmul.f32.gmra.mxu0 %v2652
      %v2969 = vpop.f32.mrf.mxu0
      %v2970 = vadd.f32 0.0, %v2969
      %2971 = vmatmul.f32.gmra.mxu0 %v2655
      %v2972 = vpop.f32.mrf.mxu0
      %v2973 = vadd.f32 0.0, %v2972
      %2974 = vmatmul.f32.gmra.mxu0 %v2658
      %v2975 = vpop.f32.mrf.mxu0
      %v2976 = vadd.f32 0.0, %v2975
      %2977 = vmatmul.f32.gmra.mxu0 %v2661
      %v2978 = vpop.f32.mrf.mxu0
      %v2979 = vadd.f32 0.0, %v2978
      %2980 = vmatmul.f32.gmra.mxu0 %v2664
      %v2981 = vpop.f32.mrf.mxu0
      %v2982 = vadd.f32 0.0, %v2981
      %2983 = vmatmul.f32.gmra.mxu0 %v2667
      %v2984 = vpop.f32.mrf.mxu0
      %v2985 = vadd.f32 0.0, %v2984
      %2986 = vmatmul.f32.gmra.mxu0 %v2670
      %v2987 = vpop.f32.mrf.mxu0
      %v2988 = vadd.f32 0.0, %v2987
      %2989 = vmatmul.f32.gmra.mxu0 %v2673
      %v2990 = vpop.f32.mrf.mxu0
      %v2991 = vadd.f32 0.0, %v2990
      %2992 = vmatmul.f32.gmra.mxu0 %v2676
      %v2993 = vpop.f32.mrf.mxu0
      %v2994 = vadd.f32 0.0, %v2993
      %2995 = vmatmul.f32.gmra.mxu0 %v2679
      %v2996 = vpop.f32.mrf.mxu0
      %v2997 = vadd.f32 0.0, %v2996
      %2998 = vmatmul.f32.gmra.mxu0 %v2682
      %v2999 = vpop.f32.mrf.mxu0
      %v3000 = vadd.f32 0.0, %v2999
      %3001 = vmatmul.f32.gmra.mxu0 %v2685
      %v3002 = vpop.f32.mrf.mxu0
      %v3003 = vadd.f32 0.0, %v3002
      %3004 = vmatmul.f32.gmra.mxu0 %v2688
      %v3005 = vpop.f32.mrf.mxu0
      %v3006 = vadd.f32 0.0, %v3005
      %3007 = vmatmul.f32.gmra.mxu0 %v2691
      %v3008 = vpop.f32.mrf.mxu0
      %v3009 = vadd.f32 0.0, %v3008
      %3010 = vmatmul.f32.gmra.mxu0 %v2694
      %v3011 = vpop.f32.mrf.mxu0
      %v3012 = vadd.f32 0.0, %v3011
      %3013 = vmatmul.f32.gmra.mxu0 %v2697
      %v3014 = vpop.f32.mrf.mxu0
      %v3015 = vadd.f32 0.0, %v3014
      %3016 = vmatmul.f32.gmra.mxu0 %v2700
      %v3017 = vpop.f32.mrf.mxu0
      %v3018 = vadd.f32 0.0, %v3017
      %3019 = vmatmul.f32.gmra.mxu0 %v2703
      %v3020 = vpop.f32.mrf.mxu0
      %v3021 = vadd.f32 0.0, %v3020
      %3022 = vmatmul.f32.gmra.mxu0 %v2706
      %v3023 = vpop.f32.mrf.mxu0
      %v3024 = vadd.f32 0.0, %v3023
      %3025 = vmatmul.f32.gmra.mxu0 %v2709
      %v3026 = vpop.f32.mrf.mxu0
      %v3027 = vadd.f32 0.0, %v3026
      %3028 = vmatmul.f32.gmra.mxu0 %v2712
      %v3029 = vpop.f32.mrf.mxu0
      %v3030 = vadd.f32 0.0, %v3029
      %3031 = vmatmul.f32.gmra.mxu0 %v2715
      %v3032 = vpop.f32.mrf.mxu0
      %v3033 = vadd.f32 0.0, %v3032
      %3034 = vmatmul.f32.gmra.mxu0 %v2718
      %v3035 = vpop.f32.mrf.mxu0
      %v3036 = vadd.f32 0.0, %v3035
      %3037 = vmatmul.f32.gmra.mxu0 %v2721
      %v3038 = vpop.f32.mrf.mxu0
      %v3039 = vadd.f32 0.0, %v3038
      %3040 = vmatmul.f32.gmra.mxu0 %v2724
      %v3041 = vpop.f32.mrf.mxu0
      %v3042 = vadd.f32 0.0, %v3041
      %3043 = vmatmul.f32.gmra.mxu0 %v2727
      %v3044 = vpop.f32.mrf.mxu0
      %v3045 = vadd.f32 0.0, %v3044
      %3046 = vmatmul.f32.gmra.mxu0 %v2730
      %v3047 = vpop.f32.mrf.mxu0
      %v3048 = vadd.f32 0.0, %v3047
      %3049 = vmatmul.f32.gmra.mxu0 %v2733
      %v3050 = vpop.f32.mrf.mxu0
      %v3051 = vadd.f32 0.0, %v3050
      %3052 = vmatmul.f32.gmra.mxu0 %v2736
      %v3053 = vpop.f32.mrf.mxu0
      %v3054 = vadd.f32 0.0, %v3053
      %3055 = vmatmul.f32.gmra.mxu0 %v2739
      %v3056 = vpop.f32.mrf.mxu0
      %v3057 = vadd.f32 0.0, %v3056
      %3058 = vmatmul.f32.gmra.mxu0 %v2619
      %v3059 = vpop.f32.mrf.mxu0
      %v3060 = vadd.f32 0.0, %v3059
      %3061 = vmatmul.f32.gmra.mxu0 %v2622
      %v3062 = vpop.f32.mrf.mxu0
      %v3063 = vadd.f32 0.0, %v3062
      %3064 = vdwg.mxu0
      %v3065 = vadd.f32 %v2881, %v2943
      %v3066 = vadd.f32 %v2882, %v2946
      %v3067 = vadd.f32 %v2883, %v2949
      %v3068 = vadd.f32 %v2884, %v2952
      %v3069 = vadd.f32 %v2885, %v2955
      %v3070 = vadd.f32 %v2886, %v2958
      %v3071 = vadd.f32 %v2887, %v2961
      %v3072 = vadd.f32 %v2888, %v2964
      %v3073 = vadd.f32 %v2889, %v2967
      %v3074 = vadd.f32 %v2890, %v2970
      %v3075 = vadd.f32 %v2891, %v2973
      %v3076 = vadd.f32 %v2892, %v2976
      %v3077 = vadd.f32 %v2893, %v2979
      %v3078 = vadd.f32 %v2894, %v2982
      %v3079 = vadd.f32 %v2895, %v2985
      %v3080 = vadd.f32 %v2896, %v2988
      %v3081 = vadd.f32 %v2897, %v2991
      %v3082 = vadd.f32 %v2898, %v2994
      %v3083 = vadd.f32 %v2899, %v2997
      %v3084 = vadd.f32 %v2900, %v3000
      %v3085 = vadd.f32 %v2901, %v3003
      %v3086 = vadd.f32 %v2902, %v3006
      %v3087 = vadd.f32 %v2903, %v3009
      %v3088 = vadd.f32 %v2904, %v3012
      %v3089 = vadd.f32 %v2905, %v3015
      %v3090 = vadd.f32 %v2906, %v3018
      %v3091 = vadd.f32 %v2907, %v3021
      %v3092 = vadd.f32 %v2908, %v3024
      %v3093 = vadd.f32 %v2909, %v3027
      %v3094 = vadd.f32 %v2910, %v3030
      %v3095 = vadd.f32 %v2911, %v3033
      %v3096 = vadd.f32 %v2912, %v3036
      %v3097 = vadd.f32 %v2913, %v3039
      %v3098 = vadd.f32 %v2914, %v3042
      %v3099 = vadd.f32 %v2915, %v3045
      %v3100 = vadd.f32 %v2916, %v3048
      %v3101 = vadd.f32 %v2917, %v3051
      %v3102 = vadd.f32 %v2918, %v3054
      %v3103 = vadd.f32 %v2919, %v3057
      %v3104 = vadd.f32 %v2920, %v3060
      %v3105 = vadd.f32 %v2921, %v3063
      %v3106 = vrot.slane %v910, 2
      %v3107 = vrot.slane %v911, 2
      %v3108 = vrot.slane %v912, 2
      %v3109 = vrot.slane %v913, 2
      %v3110 = vrot.slane %v914, 2
      %v3111 = vrot.slane %v915, 2
      %v3112 = vrot.slane %v916, 2
      %v3113 = vrot.slane %v917, 2
      %v3114 = vrot.slane %v918, 2
      %v3115 = vrot.slane %v919, 2
      %v3116 = vrot.slane %v920, 2
      %v3117 = vrot.slane %v921, 2
      %v3118 = vrot.slane %v922, 2
      %v3119 = vrot.slane %v923, 2
      %v3120 = vrot.slane %v924, 2
      %v3121 = vrot.slane %v925, 2
      %v3122 = vrot.slane %v926, 2
      %v3123 = vrot.slane %v927, 2
      %v3124 = vrot.slane %v928, 2
      %v3125 = vrot.slane %v929, 2
      %v3126 = vrot.slane %v930, 2
      %v3127 = vrot.slane %v931, 2
      %v3128 = vrot.slane %v932, 2
      %v3129 = vrot.slane %v933, 2
      %v3130 = vrot.slane %v934, 2
      %v3131 = vrot.slane %v935, 2
      %v3132 = vrot.slane %v936, 2
      %v3133 = vrot.slane %v937, 2
      %v3134 = vrot.slane %v938, 2
      %v3135 = vrot.slane %v939, 2
      %v3136 = vrot.slane %v940, 2
      %v3137 = vrot.slane %v941, 2
      %v3138 = vrot.slane %v942, 2
      %v3139 = vrot.slane %v943, 2
      %v3140 = vrot.slane %v944, 2
      %v3141 = vrot.slane %v945, 2
      %v3142 = vrot.slane %v946, 2
      %v3143 = vrot.slane %v947, 2
      %v3144 = vrot.slane %v948, 2
      %v3145 = vrot.slane %v949, 2
      %v3146 = vrot.slane %v950, 2
      %vm3147 = vcmp.lt.s32.totalorder %v993, 6
      %v3148 = vsel %vm3147, %v3145, %v3146
      %v3149 = vsel %vm3147, %v3144, %v3145
      %v3150 = vsel %vm3147, %v3143, %v3144
      %v3151 = vsel %vm3147, %v3142, %v3143
      %v3152 = vsel %vm3147, %v3141, %v3142
      %v3153 = vsel %vm3147, %v3140, %v3141
      %v3154 = vsel %vm3147, %v3139, %v3140
      %v3155 = vsel %vm3147, %v3138, %v3139
      %v3156 = vsel %vm3147, %v3137, %v3138
      %v3157 = vsel %vm3147, %v3136, %v3137
      %v3158 = vsel %vm3147, %v3135, %v3136
      %v3159 = vsel %vm3147, %v3134, %v3135
      %v3160 = vsel %vm3147, %v3133, %v3134
      %v3161 = vsel %vm3147, %v3132, %v3133
      %v3162 = vsel %vm3147, %v3131, %v3132
      %v3163 = vsel %vm3147, %v3130, %v3131
      %v3164 = vsel %vm3147, %v3129, %v3130
      %v3165 = vsel %vm3147, %v3128, %v3129
      %v3166 = vsel %vm3147, %v3127, %v3128
      %v3167 = vsel %vm3147, %v3126, %v3127
      %v3168 = vsel %vm3147, %v3125, %v3126
      %v3169 = vsel %vm3147, %v3124, %v3125
      %v3170 = vsel %vm3147, %v3123, %v3124
      %v3171 = vsel %vm3147, %v3122, %v3123
      %v3172 = vsel %vm3147, %v3121, %v3122
      %v3173 = vsel %vm3147, %v3120, %v3121
      %v3174 = vsel %vm3147, %v3119, %v3120
      %v3175 = vsel %vm3147, %v3118, %v3119
      %v3176 = vsel %vm3147, %v3117, %v3118
      %v3177 = vsel %vm3147, %v3116, %v3117
      %v3178 = vsel %vm3147, %v3115, %v3116
      %v3179 = vsel %vm3147, %v3114, %v3115
      %v3180 = vsel %vm3147, %v3113, %v3114
      %v3181 = vsel %vm3147, %v3112, %v3113
      %v3182 = vsel %vm3147, %v3111, %v3112
      %v3183 = vsel %vm3147, %v3110, %v3111
      %v3184 = vsel %vm3147, %v3109, %v3110
      %v3185 = vsel %vm3147, %v3108, %v3109
      %v3186 = vsel %vm3147, %v3107, %v3108
      %v3187 = vsel %vm3147, %v3106, %v3107
      %v3188 = vsel %vm3147, %v3146, %v3106
      %s3189 = scalar_lea.vmem %s4, 112
      %v3190 = vld [vmem:[%s3189] sm:$0xff]
      %v3191 = vld [vmem:[%s3189 + $0x8] sm:$0xff]
      %v3193 = vsel %vm1124, %v3185, 0
      %v3196 = vsel %vm1124, %v3184, 0
      %v3199 = vsel %vm1124, %v3183, 0
      %v3202 = vsel %vm1124, %v3182, 0
      %v3205 = vsel %vm1124, %v3181, 0
      %v3208 = vsel %vm1124, %v3180, 0
      %v3211 = vsel %vm1124, %v3179, 0
      %v3214 = vsel %vm1124, %v3178, 0
      %v3217 = vsel %vm1124, %v3177, 0
      %v3220 = vsel %vm1124, %v3176, 0
      %v3223 = vsel %vm1124, %v3175, 0
      %v3226 = vsel %vm1124, %v3174, 0
      %v3229 = vsel %vm1124, %v3173, 0
      %v3232 = vsel %vm1124, %v3172, 0
      %v3235 = vsel %vm1124, %v3171, 0
      %v3238 = vsel %vm1124, %v3170, 0
      %v3241 = vsel %vm1124, %v3169, 0
      %v3244 = vsel %vm1124, %v3168, 0
      %v3247 = vsel %vm1124, %v3167, 0
      %v3250 = vsel %vm1124, %v3166, 0
      %v3253 = vsel %vm1124, %v3165, 0
      %v3256 = vsel %vm1124, %v3164, 0
      %v3259 = vsel %vm1124, %v3163, 0
      %v3262 = vsel %vm1124, %v3162, 0
      %v3265 = vsel %vm1124, %v3161, 0
      %v3268 = vsel %vm1124, %v3160, 0
      %v3271 = vsel %vm1124, %v3159, 0
      %v3274 = vsel %vm1124, %v3158, 0
      %v3277 = vsel %vm1124, %v3157, 0
      %v3280 = vsel %vm1124, %v3156, 0
      %v3283 = vsel %vm1124, %v3155, 0
      %v3286 = vsel %vm1124, %v3154, 0
      %v3289 = vsel %vm1124, %v3153, 0
      %v3292 = vsel %vm1124, %v3152, 0
      %v3295 = vsel %vm1124, %v3151, 0
      %v3298 = vsel %vm1124, %v3150, 0
      %v3301 = vsel %vm1124, %v3149, 0
      %v3304 = vsel %vm1124, %v3148, 0
      %v3307 = vsel %vm1124, %v3188, 0
      %v3310 = vsel %vm1124, %v3187, 0
      %v3313 = vsel %vm1124, %v3186, 0
      %3315 = vmatpush.msra.mxu0 0.0
      %3316 = vmatpush.msra.mxu0 0.0
      %3317 = vmatpush.msra.mxu0 0.0
      %3318 = vmatpush.msra.mxu0 0.0
      %3319 = vmatpush.msra.mxu0 0.0
      %3320 = vmatpush.msra.mxu0 0.0
      %3321 = vmatpush.msra.mxu0 0.0
      %3322 = vmatpush.msra.mxu0 0.0
      %3323 = vmatpush.msra.mxu0 0.0
      %3324 = vmatpush.msra.mxu0 0.0
      %3325 = vmatpush.msra.mxu0 0.0
      %3326 = vmatpush.msra.mxu0 0.0
      %3327 = vmatpush.msra.mxu0 0.0
      %3328 = vmatpush.msra.mxu0 0.0
      %3329 = vmatpush.msra.mxu0 %v3191
      %3330 = vmatpush.msra.mxu0 %v3190
      %3331 = vmatmul.f32.gmra.mxu0 %v3193
      %v3332 = vpop.f32.mrf.mxu0
      %v3333 = vadd.f32 0.0, %v3332
      %3334 = vmatmul.f32.gmra.mxu0 %v3196
      %v3335 = vpop.f32.mrf.mxu0
      %v3336 = vadd.f32 0.0, %v3335
      %3337 = vmatmul.f32.gmra.mxu0 %v3199
      %v3338 = vpop.f32.mrf.mxu0
      %v3339 = vadd.f32 0.0, %v3338
      %3340 = vmatmul.f32.gmra.mxu0 %v3202
      %v3341 = vpop.f32.mrf.mxu0
      %v3342 = vadd.f32 0.0, %v3341
      %3343 = vmatmul.f32.gmra.mxu0 %v3205
      %v3344 = vpop.f32.mrf.mxu0
      %v3345 = vadd.f32 0.0, %v3344
      %3346 = vmatmul.f32.gmra.mxu0 %v3208
      %v3347 = vpop.f32.mrf.mxu0
      %v3348 = vadd.f32 0.0, %v3347
      %3349 = vmatmul.f32.gmra.mxu0 %v3211
      %v3350 = vpop.f32.mrf.mxu0
      %v3351 = vadd.f32 0.0, %v3350
      %3352 = vmatmul.f32.gmra.mxu0 %v3214
      %v3353 = vpop.f32.mrf.mxu0
      %v3354 = vadd.f32 0.0, %v3353
      %3355 = vmatmul.f32.gmra.mxu0 %v3217
      %v3356 = vpop.f32.mrf.mxu0
      %v3357 = vadd.f32 0.0, %v3356
      %3358 = vmatmul.f32.gmra.mxu0 %v3220
      %v3359 = vpop.f32.mrf.mxu0
      %v3360 = vadd.f32 0.0, %v3359
      %3361 = vmatmul.f32.gmra.mxu0 %v3223
      %v3362 = vpop.f32.mrf.mxu0
      %v3363 = vadd.f32 0.0, %v3362
      %3364 = vmatmul.f32.gmra.mxu0 %v3226
      %v3365 = vpop.f32.mrf.mxu0
      %v3366 = vadd.f32 0.0, %v3365
      %3367 = vmatmul.f32.gmra.mxu0 %v3229
      %v3368 = vpop.f32.mrf.mxu0
      %v3369 = vadd.f32 0.0, %v3368
      %3370 = vmatmul.f32.gmra.mxu0 %v3232
      %v3371 = vpop.f32.mrf.mxu0
      %v3372 = vadd.f32 0.0, %v3371
      %3373 = vmatmul.f32.gmra.mxu0 %v3235
      %v3374 = vpop.f32.mrf.mxu0
      %v3375 = vadd.f32 0.0, %v3374
      %3376 = vmatmul.f32.gmra.mxu0 %v3238
      %v3377 = vpop.f32.mrf.mxu0
      %v3378 = vadd.f32 0.0, %v3377
      %3379 = vmatmul.f32.gmra.mxu0 %v3241
      %v3380 = vpop.f32.mrf.mxu0
      %v3381 = vadd.f32 0.0, %v3380
      %3382 = vmatmul.f32.gmra.mxu0 %v3244
      %v3383 = vpop.f32.mrf.mxu0
      %v3384 = vadd.f32 0.0, %v3383
      %3385 = vmatmul.f32.gmra.mxu0 %v3247
      %v3386 = vpop.f32.mrf.mxu0
      %v3387 = vadd.f32 0.0, %v3386
      %3388 = vmatmul.f32.gmra.mxu0 %v3250
      %v3389 = vpop.f32.mrf.mxu0
      %v3390 = vadd.f32 0.0, %v3389
      %3391 = vmatmul.f32.gmra.mxu0 %v3253
      %v3392 = vpop.f32.mrf.mxu0
      %v3393 = vadd.f32 0.0, %v3392
      %3394 = vmatmul.f32.gmra.mxu0 %v3256
      %v3395 = vpop.f32.mrf.mxu0
      %v3396 = vadd.f32 0.0, %v3395
      %3397 = vmatmul.f32.gmra.mxu0 %v3259
      %v3398 = vpop.f32.mrf.mxu0
      %v3399 = vadd.f32 0.0, %v3398
      %3400 = vmatmul.f32.gmra.mxu0 %v3262
      %v3401 = vpop.f32.mrf.mxu0
      %v3402 = vadd.f32 0.0, %v3401
      %3403 = vmatmul.f32.gmra.mxu0 %v3265
      %v3404 = vpop.f32.mrf.mxu0
      %v3405 = vadd.f32 0.0, %v3404
      %3406 = vmatmul.f32.gmra.mxu0 %v3268
      %v3407 = vpop.f32.mrf.mxu0
      %v3408 = vadd.f32 0.0, %v3407
      %3409 = vmatmul.f32.gmra.mxu0 %v3271
      %v3410 = vpop.f32.mrf.mxu0
      %v3411 = vadd.f32 0.0, %v3410
      %3412 = vmatmul.f32.gmra.mxu0 %v3274
      %v3413 = vpop.f32.mrf.mxu0
      %v3414 = vadd.f32 0.0, %v3413
      %3415 = vmatmul.f32.gmra.mxu0 %v3277
      %v3416 = vpop.f32.mrf.mxu0
      %v3417 = vadd.f32 0.0, %v3416
      %3418 = vmatmul.f32.gmra.mxu0 %v3280
      %v3419 = vpop.f32.mrf.mxu0
      %v3420 = vadd.f32 0.0, %v3419
      %3421 = vmatmul.f32.gmra.mxu0 %v3283
      %v3422 = vpop.f32.mrf.mxu0
      %v3423 = vadd.f32 0.0, %v3422
      %3424 = vmatmul.f32.gmra.mxu0 %v3286
      %v3425 = vpop.f32.mrf.mxu0
      %v3426 = vadd.f32 0.0, %v3425
      %3427 = vmatmul.f32.gmra.mxu0 %v3289
      %v3428 = vpop.f32.mrf.mxu0
      %v3429 = vadd.f32 0.0, %v3428
      %3430 = vmatmul.f32.gmra.mxu0 %v3292
      %v3431 = vpop.f32.mrf.mxu0
      %v3432 = vadd.f32 0.0, %v3431
      %3433 = vmatmul.f32.gmra.mxu0 %v3295
      %v3434 = vpop.f32.mrf.mxu0
      %v3435 = vadd.f32 0.0, %v3434
      %3436 = vmatmul.f32.gmra.mxu0 %v3298
      %v3437 = vpop.f32.mrf.mxu0
      %v3438 = vadd.f32 0.0, %v3437
      %3439 = vmatmul.f32.gmra.mxu0 %v3301
      %v3440 = vpop.f32.mrf.mxu0
      %v3441 = vadd.f32 0.0, %v3440
      %3442 = vmatmul.f32.gmra.mxu0 %v3304
      %v3443 = vpop.f32.mrf.mxu0
      %v3444 = vadd.f32 0.0, %v3443
      %3445 = vmatmul.f32.gmra.mxu0 %v3307
      %v3446 = vpop.f32.mrf.mxu0
      %v3447 = vadd.f32 0.0, %v3446
      %3448 = vmatmul.f32.gmra.mxu0 %v3310
      %v3449 = vpop.f32.mrf.mxu0
      %v3450 = vadd.f32 0.0, %v3449
      %3451 = vmatmul.f32.gmra.mxu0 %v3313
      %v3452 = vpop.f32.mrf.mxu0
      %v3453 = vadd.f32 0.0, %v3452
      %3454 = vdwg.mxu0
      %v3455 = vadd.f32 %v3065, %v3333
      %v3456 = vadd.f32 %v3066, %v3336
      %v3457 = vadd.f32 %v3067, %v3339
      %v3458 = vadd.f32 %v3068, %v3342
      %v3459 = vadd.f32 %v3069, %v3345
      %v3460 = vadd.f32 %v3070, %v3348
      %v3461 = vadd.f32 %v3071, %v3351
      %v3462 = vadd.f32 %v3072, %v3354
      %v3463 = vadd.f32 %v3073, %v3357
      %v3464 = vadd.f32 %v3074, %v3360
      %v3465 = vadd.f32 %v3075, %v3363
      %v3466 = vadd.f32 %v3076, %v3366
      %v3467 = vadd.f32 %v3077, %v3369
      %v3468 = vadd.f32 %v3078, %v3372
      %v3469 = vadd.f32 %v3079, %v3375
      %v3470 = vadd.f32 %v3080, %v3378
      %v3471 = vadd.f32 %v3081, %v3381
      %v3472 = vadd.f32 %v3082, %v3384
      %v3473 = vadd.f32 %v3083, %v3387
      %v3474 = vadd.f32 %v3084, %v3390
      %v3475 = vadd.f32 %v3085, %v3393
      %v3476 = vadd.f32 %v3086, %v3396
      %v3477 = vadd.f32 %v3087, %v3399
      %v3478 = vadd.f32 %v3088, %v3402
      %v3479 = vadd.f32 %v3089, %v3405
      %v3480 = vadd.f32 %v3090, %v3408
      %v3481 = vadd.f32 %v3091, %v3411
      %v3482 = vadd.f32 %v3092, %v3414
      %v3483 = vadd.f32 %v3093, %v3417
      %v3484 = vadd.f32 %v3094, %v3420
      %v3485 = vadd.f32 %v3095, %v3423
      %v3486 = vadd.f32 %v3096, %v3426
      %v3487 = vadd.f32 %v3097, %v3429
      %v3488 = vadd.f32 %v3098, %v3432
      %v3489 = vadd.f32 %v3099, %v3435
      %v3490 = vadd.f32 %v3100, %v3438
      %v3491 = vadd.f32 %v3101, %v3441
      %v3492 = vadd.f32 %v3102, %v3444
      %v3493 = vadd.f32 %v3103, %v3447
      %v3494 = vadd.f32 %v3104, %v3450
      %v3495 = vadd.f32 %v3105, %v3453
      %v3496 = vrot.slane %v910, 3
      %v3497 = vrot.slane %v911, 3
      %v3498 = vrot.slane %v912, 3
      %v3499 = vrot.slane %v913, 3
      %v3500 = vrot.slane %v914, 3
      %v3501 = vrot.slane %v915, 3
      %v3502 = vrot.slane %v916, 3
      %v3503 = vrot.slane %v917, 3
      %v3504 = vrot.slane %v918, 3
      %v3505 = vrot.slane %v919, 3
      %v3506 = vrot.slane %v920, 3
      %v3507 = vrot.slane %v921, 3
      %v3508 = vrot.slane %v922, 3
      %v3509 = vrot.slane %v923, 3
      %v3510 = vrot.slane %v924, 3
      %v3511 = vrot.slane %v925, 3
      %v3512 = vrot.slane %v926, 3
      %v3513 = vrot.slane %v927, 3
      %v3514 = vrot.slane %v928, 3
      %v3515 = vrot.slane %v929, 3
      %v3516 = vrot.slane %v930, 3
      %v3517 = vrot.slane %v931, 3
      %v3518 = vrot.slane %v932, 3
      %v3519 = vrot.slane %v933, 3
      %v3520 = vrot.slane %v934, 3
      %v3521 = vrot.slane %v935, 3
      %v3522 = vrot.slane %v936, 3
      %v3523 = vrot.slane %v937, 3
      %v3524 = vrot.slane %v938, 3
      %v3525 = vrot.slane %v939, 3
      %v3526 = vrot.slane %v940, 3
      %v3527 = vrot.slane %v941, 3
      %v3528 = vrot.slane %v942, 3
      %v3529 = vrot.slane %v943, 3
      %v3530 = vrot.slane %v944, 3
      %v3531 = vrot.slane %v945, 3
      %v3532 = vrot.slane %v946, 3
      %v3533 = vrot.slane %v947, 3
      %v3534 = vrot.slane %v948, 3
      %v3535 = vrot.slane %v949, 3
      %v3536 = vrot.slane %v950, 3
      %vm3537 = vcmp.lt.s32.totalorder %v993, 5
      %v3538 = vsel %vm3537, %v3535, %v3536
      %v3539 = vsel %vm3537, %v3534, %v3535
      %v3540 = vsel %vm3537, %v3533, %v3534
      %v3541 = vsel %vm3537, %v3532, %v3533
      %v3542 = vsel %vm3537, %v3531, %v3532
      %v3543 = vsel %vm3537, %v3530, %v3531
      %v3544 = vsel %vm3537, %v3529, %v3530
      %v3545 = vsel %vm3537, %v3528, %v3529
      %v3546 = vsel %vm3537, %v3527, %v3528
      %v3547 = vsel %vm3537, %v3526, %v3527
      %v3548 = vsel %vm3537, %v3525, %v3526
      %v3549 = vsel %vm3537, %v3524, %v3525
      %v3550 = vsel %vm3537, %v3523, %v3524
      %v3551 = vsel %vm3537, %v3522, %v3523
      %v3552 = vsel %vm3537, %v3521, %v3522
      %v3553 = vsel %vm3537, %v3520, %v3521
      %v3554 = vsel %vm3537, %v3519, %v3520
      %v3555 = vsel %vm3537, %v3518, %v3519
      %v3556 = vsel %vm3537, %v3517, %v3518
      %v3557 = vsel %vm3537, %v3516, %v3517
      %v3558 = vsel %vm3537, %v3515, %v3516
      %v3559 = vsel %vm3537, %v3514, %v3515
      %v3560 = vsel %vm3537, %v3513, %v3514
      %v3561 = vsel %vm3537, %v3512, %v3513
      %v3562 = vsel %vm3537, %v3511, %v3512
      %v3563 = vsel %vm3537, %v3510, %v3511
      %v3564 = vsel %vm3537, %v3509, %v3510
      %v3565 = vsel %vm3537, %v3508, %v3509
      %v3566 = vsel %vm3537, %v3507, %v3508
      %v3567 = vsel %vm3537, %v3506, %v3507
      %v3568 = vsel %vm3537, %v3505, %v3506
      %v3569 = vsel %vm3537, %v3504, %v3505
      %v3570 = vsel %vm3537, %v3503, %v3504
      %v3571 = vsel %vm3537, %v3502, %v3503
      %v3572 = vsel %vm3537, %v3501, %v3502
      %v3573 = vsel %vm3537, %v3500, %v3501
      %v3574 = vsel %vm3537, %v3499, %v3500
      %v3575 = vsel %vm3537, %v3498, %v3499
      %v3576 = vsel %vm3537, %v3497, %v3498
      %v3577 = vsel %vm3537, %v3496, %v3497
      %v3578 = vsel %vm3537, %v3536, %v3496
      %s3579 = scalar_lea.vmem %s4, 128
      %v3580 = vld [vmem:[%s3579] sm:$0xff]
      %v3581 = vld [vmem:[%s3579 + $0x8] sm:$0xff]
      %v3583 = vsel %vm1124, %v3575, 0
      %v3586 = vsel %vm1124, %v3574, 0
      %v3589 = vsel %vm1124, %v3573, 0
      %v3592 = vsel %vm1124, %v3572, 0
      %v3595 = vsel %vm1124, %v3571, 0
      %v3598 = vsel %vm1124, %v3570, 0
      %v3601 = vsel %vm1124, %v3569, 0
      %v3604 = vsel %vm1124, %v3568, 0
      %v3607 = vsel %vm1124, %v3567, 0
      %v3610 = vsel %vm1124, %v3566, 0
      %v3613 = vsel %vm1124, %v3565, 0
      %v3616 = vsel %vm1124, %v3564, 0
      %v3619 = vsel %vm1124, %v3563, 0
      %v3622 = vsel %vm1124, %v3562, 0
      %v3625 = vsel %vm1124, %v3561, 0
      %v3628 = vsel %vm1124, %v3560, 0
      %v3631 = vsel %vm1124, %v3559, 0
      %v3634 = vsel %vm1124, %v3558, 0
      %v3637 = vsel %vm1124, %v3557, 0
      %v3640 = vsel %vm1124, %v3556, 0
      %v3643 = vsel %vm1124, %v3555, 0
      %v3646 = vsel %vm1124, %v3554, 0
      %v3649 = vsel %vm1124, %v3553, 0
      %v3652 = vsel %vm1124, %v3552, 0
      %v3655 = vsel %vm1124, %v3551, 0
      %v3658 = vsel %vm1124, %v3550, 0
      %v3661 = vsel %vm1124, %v3549, 0
      %v3664 = vsel %vm1124, %v3548, 0
      %v3667 = vsel %vm1124, %v3547, 0
      %v3670 = vsel %vm1124, %v3546, 0
      %v3673 = vsel %vm1124, %v3545, 0
      %v3676 = vsel %vm1124, %v3544, 0
      %v3679 = vsel %vm1124, %v3543, 0
      %v3682 = vsel %vm1124, %v3542, 0
      %v3685 = vsel %vm1124, %v3541, 0
      %v3688 = vsel %vm1124, %v3540, 0
      %v3691 = vsel %vm1124, %v3539, 0
      %v3694 = vsel %vm1124, %v3538, 0
      %v3697 = vsel %vm1124, %v3578, 0
      %v3700 = vsel %vm1124, %v3577, 0
      %v3703 = vsel %vm1124, %v3576, 0
      %3705 = vmatpush.msra.mxu0 0.0
      %3706 = vmatpush.msra.mxu0 0.0
      %3707 = vmatpush.msra.mxu0 0.0
      %3708 = vmatpush.msra.mxu0 0.0
      %3709 = vmatpush.msra.mxu0 0.0
      %3710 = vmatpush.msra.mxu0 0.0
      %3711 = vmatpush.msra.mxu0 0.0
      %3712 = vmatpush.msra.mxu0 0.0
      %3713 = vmatpush.msra.mxu0 0.0
      %3714 = vmatpush.msra.mxu0 0.0
      %3715 = vmatpush.msra.mxu0 0.0
      %3716 = vmatpush.msra.mxu0 0.0
      %3717 = vmatpush.msra.mxu0 0.0
      %3718 = vmatpush.msra.mxu0 0.0
      %3719 = vmatpush.msra.mxu0 %v3581
      %3720 = vmatpush.msra.mxu0 %v3580
      %3721 = vmatmul.f32.gmra.mxu0 %v3583
      %v3722 = vpop.f32.mrf.mxu0
      %v3723 = vadd.f32 0.0, %v3722
      %3724 = vmatmul.f32.gmra.mxu0 %v3586
      %v3725 = vpop.f32.mrf.mxu0
      %v3726 = vadd.f32 0.0, %v3725
      %3727 = vmatmul.f32.gmra.mxu0 %v3589
      %v3728 = vpop.f32.mrf.mxu0
      %v3729 = vadd.f32 0.0, %v3728
      %3730 = vmatmul.f32.gmra.mxu0 %v3592
      %v3731 = vpop.f32.mrf.mxu0
      %v3732 = vadd.f32 0.0, %v3731
      %3733 = vmatmul.f32.gmra.mxu0 %v3595
      %v3734 = vpop.f32.mrf.mxu0
      %v3735 = vadd.f32 0.0, %v3734
      %3736 = vmatmul.f32.gmra.mxu0 %v3598
      %v3737 = vpop.f32.mrf.mxu0
      %v3738 = vadd.f32 0.0, %v3737
      %3739 = vmatmul.f32.gmra.mxu0 %v3601
      %v3740 = vpop.f32.mrf.mxu0
      %v3741 = vadd.f32 0.0, %v3740
      %3742 = vmatmul.f32.gmra.mxu0 %v3604
      %v3743 = vpop.f32.mrf.mxu0
      %v3744 = vadd.f32 0.0, %v3743
      %3745 = vmatmul.f32.gmra.mxu0 %v3607
      %v3746 = vpop.f32.mrf.mxu0
      %v3747 = vadd.f32 0.0, %v3746
      %3748 = vmatmul.f32.gmra.mxu0 %v3610
      %v3749 = vpop.f32.mrf.mxu0
      %v3750 = vadd.f32 0.0, %v3749
      %3751 = vmatmul.f32.gmra.mxu0 %v3613
      %v3752 = vpop.f32.mrf.mxu0
      %v3753 = vadd.f32 0.0, %v3752
      %3754 = vmatmul.f32.gmra.mxu0 %v3616
      %v3755 = vpop.f32.mrf.mxu0
      %v3756 = vadd.f32 0.0, %v3755
      %3757 = vmatmul.f32.gmra.mxu0 %v3619
      %v3758 = vpop.f32.mrf.mxu0
      %v3759 = vadd.f32 0.0, %v3758
      %3760 = vmatmul.f32.gmra.mxu0 %v3622
      %v3761 = vpop.f32.mrf.mxu0
      %v3762 = vadd.f32 0.0, %v3761
      %3763 = vmatmul.f32.gmra.mxu0 %v3625
      %v3764 = vpop.f32.mrf.mxu0
      %v3765 = vadd.f32 0.0, %v3764
      %3766 = vmatmul.f32.gmra.mxu0 %v3628
      %v3767 = vpop.f32.mrf.mxu0
      %v3768 = vadd.f32 0.0, %v3767
      %3769 = vmatmul.f32.gmra.mxu0 %v3631
      %v3770 = vpop.f32.mrf.mxu0
      %v3771 = vadd.f32 0.0, %v3770
      %3772 = vmatmul.f32.gmra.mxu0 %v3634
      %v3773 = vpop.f32.mrf.mxu0
      %v3774 = vadd.f32 0.0, %v3773
      %3775 = vmatmul.f32.gmra.mxu0 %v3637
      %v3776 = vpop.f32.mrf.mxu0
      %v3777 = vadd.f32 0.0, %v3776
      %3778 = vmatmul.f32.gmra.mxu0 %v3640
      %v3779 = vpop.f32.mrf.mxu0
      %v3780 = vadd.f32 0.0, %v3779
      %3781 = vmatmul.f32.gmra.mxu0 %v3643
      %v3782 = vpop.f32.mrf.mxu0
      %v3783 = vadd.f32 0.0, %v3782
      %3784 = vmatmul.f32.gmra.mxu0 %v3646
      %v3785 = vpop.f32.mrf.mxu0
      %v3786 = vadd.f32 0.0, %v3785
      %3787 = vmatmul.f32.gmra.mxu0 %v3649
      %v3788 = vpop.f32.mrf.mxu0
      %v3789 = vadd.f32 0.0, %v3788
      %3790 = vmatmul.f32.gmra.mxu0 %v3652
      %v3791 = vpop.f32.mrf.mxu0
      %v3792 = vadd.f32 0.0, %v3791
      %3793 = vmatmul.f32.gmra.mxu0 %v3655
      %v3794 = vpop.f32.mrf.mxu0
      %v3795 = vadd.f32 0.0, %v3794
      %3796 = vmatmul.f32.gmra.mxu0 %v3658
      %v3797 = vpop.f32.mrf.mxu0
      %v3798 = vadd.f32 0.0, %v3797
      %3799 = vmatmul.f32.gmra.mxu0 %v3661
      %v3800 = vpop.f32.mrf.mxu0
      %v3801 = vadd.f32 0.0, %v3800
      %3802 = vmatmul.f32.gmra.mxu0 %v3664
      %v3803 = vpop.f32.mrf.mxu0
      %v3804 = vadd.f32 0.0, %v3803
      %3805 = vmatmul.f32.gmra.mxu0 %v3667
      %v3806 = vpop.f32.mrf.mxu0
      %v3807 = vadd.f32 0.0, %v3806
      %3808 = vmatmul.f32.gmra.mxu0 %v3670
      %v3809 = vpop.f32.mrf.mxu0
      %v3810 = vadd.f32 0.0, %v3809
      %3811 = vmatmul.f32.gmra.mxu0 %v3673
      %v3812 = vpop.f32.mrf.mxu0
      %v3813 = vadd.f32 0.0, %v3812
      %3814 = vmatmul.f32.gmra.mxu0 %v3676
      %v3815 = vpop.f32.mrf.mxu0
      %v3816 = vadd.f32 0.0, %v3815
      %3817 = vmatmul.f32.gmra.mxu0 %v3679
      %v3818 = vpop.f32.mrf.mxu0
      %v3819 = vadd.f32 0.0, %v3818
      %3820 = vmatmul.f32.gmra.mxu0 %v3682
      %v3821 = vpop.f32.mrf.mxu0
      %v3822 = vadd.f32 0.0, %v3821
      %3823 = vmatmul.f32.gmra.mxu0 %v3685
      %v3824 = vpop.f32.mrf.mxu0
      %v3825 = vadd.f32 0.0, %v3824
      %3826 = vmatmul.f32.gmra.mxu0 %v3688
      %v3827 = vpop.f32.mrf.mxu0
      %v3828 = vadd.f32 0.0, %v3827
      %3829 = vmatmul.f32.gmra.mxu0 %v3691
      %v3830 = vpop.f32.mrf.mxu0
      %v3831 = vadd.f32 0.0, %v3830
      %3832 = vmatmul.f32.gmra.mxu0 %v3694
      %v3833 = vpop.f32.mrf.mxu0
      %v3834 = vadd.f32 0.0, %v3833
      %3835 = vmatmul.f32.gmra.mxu0 %v3697
      %v3836 = vpop.f32.mrf.mxu0
      %v3837 = vadd.f32 0.0, %v3836
      %3838 = vmatmul.f32.gmra.mxu0 %v3700
      %v3839 = vpop.f32.mrf.mxu0
      %v3840 = vadd.f32 0.0, %v3839
      %3841 = vmatmul.f32.gmra.mxu0 %v3703
      %v3842 = vpop.f32.mrf.mxu0
      %v3843 = vadd.f32 0.0, %v3842
      %3844 = vdwg.mxu0
      %v3845 = vadd.f32 %v3455, %v3723
      %v3846 = vadd.f32 %v3456, %v3726
      %v3847 = vadd.f32 %v3457, %v3729
      %v3848 = vadd.f32 %v3458, %v3732
      %v3849 = vadd.f32 %v3459, %v3735
      %v3850 = vadd.f32 %v3460, %v3738
      %v3851 = vadd.f32 %v3461, %v3741
      %v3852 = vadd.f32 %v3462, %v3744
      %v3853 = vadd.f32 %v3463, %v3747
      %v3854 = vadd.f32 %v3464, %v3750
      %v3855 = vadd.f32 %v3465, %v3753
      %v3856 = vadd.f32 %v3466, %v3756
      %v3857 = vadd.f32 %v3467, %v3759
      %v3858 = vadd.f32 %v3468, %v3762
      %v3859 = vadd.f32 %v3469, %v3765
      %v3860 = vadd.f32 %v3470, %v3768
      %v3861 = vadd.f32 %v3471, %v3771
      %v3862 = vadd.f32 %v3472, %v3774
      %v3863 = vadd.f32 %v3473, %v3777
      %v3864 = vadd.f32 %v3474, %v3780
      %v3865 = vadd.f32 %v3475, %v3783
      %v3866 = vadd.f32 %v3476, %v3786
      %v3867 = vadd.f32 %v3477, %v3789
      %v3868 = vadd.f32 %v3478, %v3792
      %v3869 = vadd.f32 %v3479, %v3795
      %v3870 = vadd.f32 %v3480, %v3798
      %v3871 = vadd.f32 %v3481, %v3801
      %v3872 = vadd.f32 %v3482, %v3804
      %v3873 = vadd.f32 %v3483, %v3807
      %v3874 = vadd.f32 %v3484, %v3810
      %v3875 = vadd.f32 %v3485, %v3813
      %v3876 = vadd.f32 %v3486, %v3816
      %v3877 = vadd.f32 %v3487, %v3819
      %v3878 = vadd.f32 %v3488, %v3822
      %v3879 = vadd.f32 %v3489, %v3825
      %v3880 = vadd.f32 %v3490, %v3828
      %v3881 = vadd.f32 %v3491, %v3831
      %v3882 = vadd.f32 %v3492, %v3834
      %v3883 = vadd.f32 %v3493, %v3837
      %v3884 = vadd.f32 %v3494, %v3840
      %v3885 = vadd.f32 %v3495, %v3843
      %v3886 = vld [vmem:[%s5] sm:$0x1]
      %v3888 = vperm.slane %v3886, 0
      %v3890 = vadd.f32 %v3845, %v3888
      %v3891 = vadd.f32 %v3846, %v3888
      %v3892 = vadd.f32 %v3847, %v3888
      %v3893 = vadd.f32 %v3848, %v3888
      %v3894 = vadd.f32 %v3849, %v3888
      %v3895 = vadd.f32 %v3850, %v3888
      %v3896 = vadd.f32 %v3851, %v3888
      %v3897 = vadd.f32 %v3852, %v3888
      %v3898 = vadd.f32 %v3853, %v3888
      %v3899 = vadd.f32 %v3854, %v3888
      %v3900 = vadd.f32 %v3855, %v3888
      %v3901 = vadd.f32 %v3856, %v3888
      %v3902 = vadd.f32 %v3857, %v3888
      %v3903 = vadd.f32 %v3858, %v3888
      %v3904 = vadd.f32 %v3859, %v3888
      %v3905 = vadd.f32 %v3860, %v3888
      %v3906 = vadd.f32 %v3861, %v3888
      %v3907 = vadd.f32 %v3862, %v3888
      %v3908 = vadd.f32 %v3863, %v3888
      %v3909 = vadd.f32 %v3864, %v3888
      %v3910 = vadd.f32 %v3865, %v3888
      %v3911 = vadd.f32 %v3866, %v3888
      %v3912 = vadd.f32 %v3867, %v3888
      %v3913 = vadd.f32 %v3868, %v3888
      %v3914 = vadd.f32 %v3869, %v3888
      %v3915 = vadd.f32 %v3870, %v3888
      %v3916 = vadd.f32 %v3871, %v3888
      %v3917 = vadd.f32 %v3872, %v3888
      %v3918 = vadd.f32 %v3873, %v3888
      %v3919 = vadd.f32 %v3874, %v3888
      %v3920 = vadd.f32 %v3875, %v3888
      %v3921 = vadd.f32 %v3876, %v3888
      %v3922 = vadd.f32 %v3877, %v3888
      %v3923 = vadd.f32 %v3878, %v3888
      %v3924 = vadd.f32 %v3879, %v3888
      %v3925 = vadd.f32 %v3880, %v3888
      %v3926 = vadd.f32 %v3881, %v3888
      %v3927 = vadd.f32 %v3882, %v3888
      %v3928 = vadd.f32 %v3883, %v3888
      %v3929 = vadd.f32 %v3884, %v3888
      %v3930 = vadd.f32 %v3885, %v3888
      %v3931 = vmax.f32 %v3890, 0.0
      %v3932 = vmax.f32 %v3891, 0.0
      %v3933 = vmax.f32 %v3892, 0.0
      %v3934 = vmax.f32 %v3893, 0.0
      %v3935 = vmax.f32 %v3894, 0.0
      %v3936 = vmax.f32 %v3895, 0.0
      %v3937 = vmax.f32 %v3896, 0.0
      %v3938 = vmax.f32 %v3897, 0.0
      %v3939 = vmax.f32 %v3898, 0.0
      %v3940 = vmax.f32 %v3899, 0.0
      %v3941 = vmax.f32 %v3900, 0.0
      %v3942 = vmax.f32 %v3901, 0.0
      %v3943 = vmax.f32 %v3902, 0.0
      %v3944 = vmax.f32 %v3903, 0.0
      %v3945 = vmax.f32 %v3904, 0.0
      %v3946 = vmax.f32 %v3905, 0.0
      %v3947 = vmax.f32 %v3906, 0.0
      %v3948 = vmax.f32 %v3907, 0.0
      %v3949 = vmax.f32 %v3908, 0.0
      %v3950 = vmax.f32 %v3909, 0.0
      %v3951 = vmax.f32 %v3910, 0.0
      %v3952 = vmax.f32 %v3911, 0.0
      %v3953 = vmax.f32 %v3912, 0.0
      %v3954 = vmax.f32 %v3913, 0.0
      %v3955 = vmax.f32 %v3914, 0.0
      %v3956 = vmax.f32 %v3915, 0.0
      %v3957 = vmax.f32 %v3916, 0.0
      %v3958 = vmax.f32 %v3917, 0.0
      %v3959 = vmax.f32 %v3918, 0.0
      %v3960 = vmax.f32 %v3919, 0.0
      %v3961 = vmax.f32 %v3920, 0.0
      %v3962 = vmax.f32 %v3921, 0.0
      %v3963 = vmax.f32 %v3922, 0.0
      %v3964 = vmax.f32 %v3923, 0.0
      %v3965 = vmax.f32 %v3924, 0.0
      %v3966 = vmax.f32 %v3925, 0.0
      %v3967 = vmax.f32 %v3926, 0.0
      %v3968 = vmax.f32 %v3927, 0.0
      %v3969 = vmax.f32 %v3928, 0.0
      %v3970 = vmax.f32 %v3929, 0.0
      %v3971 = vmax.f32 %v3930, 0.0
      %v3972 = vld [vmem:[%s6] sm:$0xff]
      %v3973 = vld [vmem:[%s6 + $0x8] sm:$0xff]
      %v3974 = vld [vmem:[%s7] sm:$0x1]
      %v3976 = vperm.slane %v3974, 0
      %v3979 = vsel %vm1124, %v3931, 0
      %v3982 = vsel %vm1124, %v3932, 0
      %v3985 = vsel %vm1124, %v3933, 0
      %v3988 = vsel %vm1124, %v3934, 0
      %v3991 = vsel %vm1124, %v3935, 0
      %v3994 = vsel %vm1124, %v3936, 0
      %v3997 = vsel %vm1124, %v3937, 0
      %v4000 = vsel %vm1124, %v3938, 0
      %v4003 = vsel %vm1124, %v3939, 0
      %v4006 = vsel %vm1124, %v3940, 0
      %v4009 = vsel %vm1124, %v3941, 0
      %v4012 = vsel %vm1124, %v3942, 0
      %v4015 = vsel %vm1124, %v3943, 0
      %v4018 = vsel %vm1124, %v3944, 0
      %v4021 = vsel %vm1124, %v3945, 0
      %v4024 = vsel %vm1124, %v3946, 0
      %v4027 = vsel %vm1124, %v3947, 0
      %v4030 = vsel %vm1124, %v3948, 0
      %v4033 = vsel %vm1124, %v3949, 0
      %v4036 = vsel %vm1124, %v3950, 0
      %v4039 = vsel %vm1124, %v3951, 0
      %v4042 = vsel %vm1124, %v3952, 0
      %v4045 = vsel %vm1124, %v3953, 0
      %v4048 = vsel %vm1124, %v3954, 0
      %v4051 = vsel %vm1124, %v3955, 0
      %v4054 = vsel %vm1124, %v3956, 0
      %v4057 = vsel %vm1124, %v3957, 0
      %v4060 = vsel %vm1124, %v3958, 0
      %v4063 = vsel %vm1124, %v3959, 0
      %v4066 = vsel %vm1124, %v3960, 0
      %v4069 = vsel %vm1124, %v3961, 0
      %v4072 = vsel %vm1124, %v3962, 0
      %v4075 = vsel %vm1124, %v3963, 0
      %v4078 = vsel %vm1124, %v3964, 0
      %v4081 = vsel %vm1124, %v3965, 0
      %v4084 = vsel %vm1124, %v3966, 0
      %v4087 = vsel %vm1124, %v3967, 0
      %v4090 = vsel %vm1124, %v3968, 0
      %v4093 = vsel %vm1124, %v3969, 0
      %v4096 = vsel %vm1124, %v3970, 0
      %v4099 = vsel %vm1124, %v3971, 0
      %4101 = vmatpush.msra.mxu0 0.0
      %4102 = vmatpush.msra.mxu0 0.0
      %4103 = vmatpush.msra.mxu0 0.0
      %4104 = vmatpush.msra.mxu0 0.0
      %4105 = vmatpush.msra.mxu0 0.0
      %4106 = vmatpush.msra.mxu0 0.0
      %4107 = vmatpush.msra.mxu0 0.0
      %4108 = vmatpush.msra.mxu0 0.0
      %4109 = vmatpush.msra.mxu0 0.0
      %4110 = vmatpush.msra.mxu0 0.0
      %4111 = vmatpush.msra.mxu0 0.0
      %4112 = vmatpush.msra.mxu0 0.0
      %4113 = vmatpush.msra.mxu0 0.0
      %4114 = vmatpush.msra.mxu0 0.0
      %4115 = vmatpush.msra.mxu0 %v3973
      %4116 = vmatpush.msra.mxu0 %v3972
      %4117 = vmatmul.f32.gmra.mxu0 %v3979
      %v4118 = vpop.f32.mrf.mxu0
      %v4119 = vadd.f32 %v3976, %v4118
      %4120 = vmatmul.f32.gmra.mxu0 %v3982
      %v4121 = vpop.f32.mrf.mxu0
      %v4122 = vadd.f32 %v3976, %v4121
      %4123 = vmatmul.f32.gmra.mxu0 %v3985
      %v4124 = vpop.f32.mrf.mxu0
      %v4125 = vadd.f32 %v3976, %v4124
      %4126 = vmatmul.f32.gmra.mxu0 %v3988
      %v4127 = vpop.f32.mrf.mxu0
      %v4128 = vadd.f32 %v3976, %v4127
      %4129 = vmatmul.f32.gmra.mxu0 %v3991
      %v4130 = vpop.f32.mrf.mxu0
      %v4131 = vadd.f32 %v3976, %v4130
      %4132 = vmatmul.f32.gmra.mxu0 %v3994
      %v4133 = vpop.f32.mrf.mxu0
      %v4134 = vadd.f32 %v3976, %v4133
      %4135 = vmatmul.f32.gmra.mxu0 %v3997
      %v4136 = vpop.f32.mrf.mxu0
      %v4137 = vadd.f32 %v3976, %v4136
      %4138 = vmatmul.f32.gmra.mxu0 %v4000
      %v4139 = vpop.f32.mrf.mxu0
      %v4140 = vadd.f32 %v3976, %v4139
      %4141 = vmatmul.f32.gmra.mxu0 %v4003
      %v4142 = vpop.f32.mrf.mxu0
      %v4143 = vadd.f32 %v3976, %v4142
      %4144 = vmatmul.f32.gmra.mxu0 %v4006
      %v4145 = vpop.f32.mrf.mxu0
      %v4146 = vadd.f32 %v3976, %v4145
      %4147 = vmatmul.f32.gmra.mxu0 %v4009
      %v4148 = vpop.f32.mrf.mxu0
      %v4149 = vadd.f32 %v3976, %v4148
      %4150 = vmatmul.f32.gmra.mxu0 %v4012
      %v4151 = vpop.f32.mrf.mxu0
      %v4152 = vadd.f32 %v3976, %v4151
      %4153 = vmatmul.f32.gmra.mxu0 %v4015
      %v4154 = vpop.f32.mrf.mxu0
      %v4155 = vadd.f32 %v3976, %v4154
      %4156 = vmatmul.f32.gmra.mxu0 %v4018
      %v4157 = vpop.f32.mrf.mxu0
      %v4158 = vadd.f32 %v3976, %v4157
      %4159 = vmatmul.f32.gmra.mxu0 %v4021
      %v4160 = vpop.f32.mrf.mxu0
      %v4161 = vadd.f32 %v3976, %v4160
      %4162 = vmatmul.f32.gmra.mxu0 %v4024
      %v4163 = vpop.f32.mrf.mxu0
      %v4164 = vadd.f32 %v3976, %v4163
      %4165 = vmatmul.f32.gmra.mxu0 %v4027
      %v4166 = vpop.f32.mrf.mxu0
      %v4167 = vadd.f32 %v3976, %v4166
      %4168 = vmatmul.f32.gmra.mxu0 %v4030
      %v4169 = vpop.f32.mrf.mxu0
      %v4170 = vadd.f32 %v3976, %v4169
      %4171 = vmatmul.f32.gmra.mxu0 %v4033
      %v4172 = vpop.f32.mrf.mxu0
      %v4173 = vadd.f32 %v3976, %v4172
      %4174 = vmatmul.f32.gmra.mxu0 %v4036
      %v4175 = vpop.f32.mrf.mxu0
      %v4176 = vadd.f32 %v3976, %v4175
      %4177 = vmatmul.f32.gmra.mxu0 %v4039
      %v4178 = vpop.f32.mrf.mxu0
      %v4179 = vadd.f32 %v3976, %v4178
      %4180 = vmatmul.f32.gmra.mxu0 %v4042
      %v4181 = vpop.f32.mrf.mxu0
      %v4182 = vadd.f32 %v3976, %v4181
      %4183 = vmatmul.f32.gmra.mxu0 %v4045
      %v4184 = vpop.f32.mrf.mxu0
      %v4185 = vadd.f32 %v3976, %v4184
      %4186 = vmatmul.f32.gmra.mxu0 %v4048
      %v4187 = vpop.f32.mrf.mxu0
      %v4188 = vadd.f32 %v3976, %v4187
      %4189 = vmatmul.f32.gmra.mxu0 %v4051
      %v4190 = vpop.f32.mrf.mxu0
      %v4191 = vadd.f32 %v3976, %v4190
      %4192 = vmatmul.f32.gmra.mxu0 %v4054
      %v4193 = vpop.f32.mrf.mxu0
      %v4194 = vadd.f32 %v3976, %v4193
      %4195 = vmatmul.f32.gmra.mxu0 %v4057
      %v4196 = vpop.f32.mrf.mxu0
      %v4197 = vadd.f32 %v3976, %v4196
      %4198 = vmatmul.f32.gmra.mxu0 %v4060
      %v4199 = vpop.f32.mrf.mxu0
      %v4200 = vadd.f32 %v3976, %v4199
      %4201 = vmatmul.f32.gmra.mxu0 %v4063
      %v4202 = vpop.f32.mrf.mxu0
      %v4203 = vadd.f32 %v3976, %v4202
      %4204 = vmatmul.f32.gmra.mxu0 %v4066
      %v4205 = vpop.f32.mrf.mxu0
      %v4206 = vadd.f32 %v3976, %v4205
      %4207 = vmatmul.f32.gmra.mxu0 %v4069
      %v4208 = vpop.f32.mrf.mxu0
      %v4209 = vadd.f32 %v3976, %v4208
      %4210 = vmatmul.f32.gmra.mxu0 %v4072
      %v4211 = vpop.f32.mrf.mxu0
      %v4212 = vadd.f32 %v3976, %v4211
      %4213 = vmatmul.f32.gmra.mxu0 %v4075
      %v4214 = vpop.f32.mrf.mxu0
      %v4215 = vadd.f32 %v3976, %v4214
      %4216 = vmatmul.f32.gmra.mxu0 %v4078
      %v4217 = vpop.f32.mrf.mxu0
      %v4218 = vadd.f32 %v3976, %v4217
      %4219 = vmatmul.f32.gmra.mxu0 %v4081
      %v4220 = vpop.f32.mrf.mxu0
      %v4221 = vadd.f32 %v3976, %v4220
      %4222 = vmatmul.f32.gmra.mxu0 %v4084
      %v4223 = vpop.f32.mrf.mxu0
      %v4224 = vadd.f32 %v3976, %v4223
      %4225 = vmatmul.f32.gmra.mxu0 %v4087
      %v4226 = vpop.f32.mrf.mxu0
      %v4227 = vadd.f32 %v3976, %v4226
      %4228 = vmatmul.f32.gmra.mxu0 %v4090
      %v4229 = vpop.f32.mrf.mxu0
      %v4230 = vadd.f32 %v3976, %v4229
      %4231 = vmatmul.f32.gmra.mxu0 %v4093
      %v4232 = vpop.f32.mrf.mxu0
      %v4233 = vadd.f32 %v3976, %v4232
      %4234 = vmatmul.f32.gmra.mxu0 %v4096
      %v4235 = vpop.f32.mrf.mxu0
      %v4236 = vadd.f32 %v3976, %v4235
      %4237 = vmatmul.f32.gmra.mxu0 %v4099
      %v4238 = vpop.f32.mrf.mxu0
      %v4239 = vadd.f32 %v3976, %v4238
      %4240 = vdwg.mxu0
      %v4241 = vadd.f32 %v4119, %v306
      %v4242 = vadd.f32 %v4122, %v307
      %v4243 = vadd.f32 %v4125, %v308
      %v4244 = vadd.f32 %v4128, %v309
      %v4245 = vadd.f32 %v4131, %v310
      %v4246 = vadd.f32 %v4134, %v311
      %v4247 = vadd.f32 %v4137, %v312
      %v4248 = vadd.f32 %v4140, %v313
      %v4249 = vadd.f32 %v4143, %v314
      %v4250 = vadd.f32 %v4146, %v315
      %v4251 = vadd.f32 %v4149, %v316
      %v4252 = vadd.f32 %v4152, %v317
      %v4253 = vadd.f32 %v4155, %v318
      %v4254 = vadd.f32 %v4158, %v319
      %v4255 = vadd.f32 %v4161, %v320
      %v4256 = vadd.f32 %v4164, %v321
      %v4257 = vadd.f32 %v4167, %v322
      %v4258 = vadd.f32 %v4170, %v323
      %v4259 = vadd.f32 %v4173, %v324
      %v4260 = vadd.f32 %v4176, %v325
      %v4261 = vadd.f32 %v4179, %v326
      %v4262 = vadd.f32 %v4182, %v327
      %v4263 = vadd.f32 %v4185, %v328
      %v4264 = vadd.f32 %v4188, %v329
      %v4265 = vadd.f32 %v4191, %v330
      %v4266 = vadd.f32 %v4194, %v331
      %v4267 = vadd.f32 %v4197, %v332
      %v4268 = vadd.f32 %v4200, %v333
      %v4269 = vadd.f32 %v4203, %v334
      %v4270 = vadd.f32 %v4206, %v335
      %v4271 = vadd.f32 %v4209, %v336
      %v4272 = vadd.f32 %v4212, %v337
      %v4273 = vadd.f32 %v4215, %v338
      %v4274 = vadd.f32 %v4218, %v339
      %v4275 = vadd.f32 %v4221, %v340
      %v4276 = vadd.f32 %v4224, %v341
      %v4277 = vadd.f32 %v4227, %v342
      %v4278 = vadd.f32 %v4230, %v343
      %v4279 = vadd.f32 %v4233, %v344
      %v4280 = vadd.f32 %v4236, %v345
      %v4281 = vadd.f32 %v4239, %v346
      %v4282 = vmax.f32 %v4241, 0.0
      %v4283 = vmax.f32 %v4242, 0.0
      %v4284 = vmax.f32 %v4243, 0.0
      %v4285 = vmax.f32 %v4244, 0.0
      %v4286 = vmax.f32 %v4245, 0.0
      %v4287 = vmax.f32 %v4246, 0.0
      %v4288 = vmax.f32 %v4247, 0.0
      %v4289 = vmax.f32 %v4248, 0.0
      %v4290 = vmax.f32 %v4249, 0.0
      %v4291 = vmax.f32 %v4250, 0.0
      %v4292 = vmax.f32 %v4251, 0.0
      %v4293 = vmax.f32 %v4252, 0.0
      %v4294 = vmax.f32 %v4253, 0.0
      %v4295 = vmax.f32 %v4254, 0.0
      %v4296 = vmax.f32 %v4255, 0.0
      %v4297 = vmax.f32 %v4256, 0.0
      %v4298 = vmax.f32 %v4257, 0.0
      %v4299 = vmax.f32 %v4258, 0.0
      %v4300 = vmax.f32 %v4259, 0.0
      %v4301 = vmax.f32 %v4260, 0.0
      %v4302 = vmax.f32 %v4261, 0.0
      %v4303 = vmax.f32 %v4262, 0.0
      %v4304 = vmax.f32 %v4263, 0.0
      %v4305 = vmax.f32 %v4264, 0.0
      %v4306 = vmax.f32 %v4265, 0.0
      %v4307 = vmax.f32 %v4266, 0.0
      %v4308 = vmax.f32 %v4267, 0.0
      %v4309 = vmax.f32 %v4268, 0.0
      %v4310 = vmax.f32 %v4269, 0.0
      %v4311 = vmax.f32 %v4270, 0.0
      %v4312 = vmax.f32 %v4271, 0.0
      %v4313 = vmax.f32 %v4272, 0.0
      %v4314 = vmax.f32 %v4273, 0.0
      %v4315 = vmax.f32 %v4274, 0.0
      %v4316 = vmax.f32 %v4275, 0.0
      %v4317 = vmax.f32 %v4276, 0.0
      %v4318 = vmax.f32 %v4277, 0.0
      %v4319 = vmax.f32 %v4278, 0.0
      %v4320 = vmax.f32 %v4279, 0.0
      %v4321 = vmax.f32 %v4280, 0.0
      %v4322 = vmax.f32 %v4281, 0.0
      %4323 = vst.msk [vmem:[%s305] sm:$0xff] %vm359, %v4282
      %4324 = vst.msk [vmem:[%s305 + $0x8] sm:$0xff] %vm359, %v4283
      %4325 = vst.msk [vmem:[%s305 + $0x10] sm:$0xff] %vm359, %v4284
      %4326 = vst.msk [vmem:[%s305 + $0x18] sm:$0xff] %vm359, %v4285
      %4327 = vst.msk [vmem:[%s305 + $0x20] sm:$0xff] %vm359, %v4286
      %4328 = vst.msk [vmem:[%s305 + $0x28] sm:$0xff] %vm359, %v4287
      %4329 = vst.msk [vmem:[%s305 + $0x30] sm:$0xff] %vm359, %v4288
      %4330 = vst.msk [vmem:[%s305 + $0x38] sm:$0xff] %vm359, %v4289
      %4331 = vst.msk [vmem:[%s305 + $0x40] sm:$0xff] %vm359, %v4290
      %4332 = vst.msk [vmem:[%s305 + $0x48] sm:$0xff] %vm359, %v4291
      %4333 = vst.msk [vmem:[%s305 + $0x50] sm:$0xff] %vm359, %v4292
      %4334 = vst.msk [vmem:[%s305 + $0x58] sm:$0xff] %vm359, %v4293
      %4335 = vst.msk [vmem:[%s305 + $0x60] sm:$0xff] %vm359, %v4294
      %4336 = vst.msk [vmem:[%s305 + $0x68] sm:$0xff] %vm359, %v4295
      %4337 = vst.msk [vmem:[%s305 + $0x70] sm:$0xff] %vm359, %v4296
      %4338 = vst.msk [vmem:[%s305 + $0x78] sm:$0xff] %vm359, %v4297
      %4339 = vst.msk [vmem:[%s305 + $0x80] sm:$0xff] %vm359, %v4298
      %4340 = vst.msk [vmem:[%s305 + $0x88] sm:$0xff] %vm359, %v4299
      %4341 = vst.msk [vmem:[%s305 + $0x90] sm:$0xff] %vm359, %v4300
      %4342 = vst.msk [vmem:[%s305 + $0x98] sm:$0xff] %vm359, %v4301
      %4343 = vst.msk [vmem:[%s305 + $0xa0] sm:$0xff] %vm359, %v4302
      %4344 = vst.msk [vmem:[%s305 + $0xa8] sm:$0xff] %vm359, %v4303
      %4345 = vst.msk [vmem:[%s305 + $0xb0] sm:$0xff] %vm359, %v4304
      %4346 = vst.msk [vmem:[%s305 + $0xb8] sm:$0xff] %vm359, %v4305
      %4347 = vst.msk [vmem:[%s305 + $0xc0] sm:$0xff] %vm359, %v4306
      %4348 = vst.msk [vmem:[%s305 + $0xc8] sm:$0xff] %vm359, %v4307
      %4349 = vst.msk [vmem:[%s305 + $0xd0] sm:$0xff] %vm359, %v4308
      %4350 = vst.msk [vmem:[%s305 + $0xd8] sm:$0xff] %vm359, %v4309
      %4351 = vst.msk [vmem:[%s305 + $0xe0] sm:$0xff] %vm359, %v4310
      %4352 = vst.msk [vmem:[%s305 + $0xe8] sm:$0xff] %vm359, %v4311
      %4353 = vst.msk [vmem:[%s305 + $0xf0] sm:$0xff] %vm359, %v4312
      %4354 = vst.msk [vmem:[%s305 + $0xf8] sm:$0xff] %vm359, %v4313
      %4355 = vst.msk [vmem:[%s305 + $0x100] sm:$0xff] %vm359, %v4314
      %4356 = vst.msk [vmem:[%s305 + $0x108] sm:$0xff] %vm359, %v4315
      %4357 = vst.msk [vmem:[%s305 + $0x110] sm:$0xff] %vm359, %v4316
      %4358 = vst.msk [vmem:[%s305 + $0x118] sm:$0xff] %vm359, %v4317
      %4359 = vst.msk [vmem:[%s305 + $0x120] sm:$0xff] %vm359, %v4318
      %4360 = vst.msk [vmem:[%s305 + $0x128] sm:$0xff] %vm359, %v4319
      %4361 = vst.msk [vmem:[%s305 + $0x130] sm:$0xff] %vm359, %v4320
      %4362 = vst.msk [vmem:[%s305 + $0x138] sm:$0xff] %vm359, %v4321
      %4363 = vst.msk [vmem:[%s305 + $0x140] sm:$0xff] %vm359, %v4322
      %p4364 = scmp.lt.s32.totalorder %s19, 1
      %s4365 = scalar_select %p4364, %s19, 1
      %s4366 = smul.addr %s4365, 41
      %s4367 = smul.addr %s4366, 8
      %s4368 = scalar_lea.vmem %s8, %s4367
      // Predicated region
      $region53: #{bottleneck_forward.1} parent=51 // pred_check
        %p4369 = pneg %p210
      $region54: #{bottleneck_forward.1} parent=51 // pred_check_branch
        %4371 = sbr.rel (%p4369) target = $region56
      $region55: #{bottleneck_forward.1} parent=51 // pred_region
        _
      $region56: #{bottleneck_forward.1} parent=51 // pred_fallthru
        _
    $region52: #{bottleneck_forward.1} parent=5 // pred_fallthru
      _
    %p4372 = scmp.le.s32.totalorder 2, %s14
    // Predicated region
    $region57: #{bottleneck_forward.1} parent=5 // pred_check
      %p4373 = pneg %p4372
    $region58: #{bottleneck_forward.1} parent=5 // pred_check_branch
      %4375 = sbr.rel (%p4373) target = $region60
    $region59: #{bottleneck_forward.1} parent=5 // pred_region
      %s4376 = ssub.s32 %s14, 2
      // Predicated region
      $region61: #{bottleneck_forward.1} parent=59 // pred_check
        %p4377 = pneg %p216
      $region62: #{bottleneck_forward.1} parent=59 // pred_check_branch
        %4379 = sbr.rel (%p4377) target = $region64
      $region63: #{bottleneck_forward.1} parent=59 // pred_region
        %p4380 = scmp.lt.s32.totalorder %s20, 1
        %s4381 = scalar_select %p4380, %s20, 1
        %s4382 = smul.addr %s4381, 41
        %s4383 = smul.addr %s4382, 8
        %s4384 = scalar_lea.vmem %s8, %s4383
      $region64: #{bottleneck_forward.1} parent=59 // pred_fallthru
        _
    $region60: #{bottleneck_forward.1} parent=5 // pred_fallthru
      _
  $region6: #{bottleneck_forward.1} parent=0 // loop_footer
    %s18 = sadd.s32 1, %s14
  $region7: #{bottleneck_forward.1} parent=0 // loop_footer_branch
    %13 = sbr.rel target = $region3
  $region8: #{bottleneck_forward.1} parent=0 // loop_exit
    _

</llo_original>
